<compile_context>
chip_gen: v7x
topology: tpu7x:2x2x1
jax: 0.10.0
libtpu: 0.0.40
codegen_flags: <defaults>
</compile_context>

<pallas_src>
import functools
import math

import jax
import jax.numpy as jnp
from jax.experimental import pallas as pl
from jax.experimental.pallas import tpu as pltpu


# ---------------------------------------------------------------------------
# Kernels
# ---------------------------------------------------------------------------

def _ln_gemm_kernel(x_ref, g_ref, bln_ref, w_ref, b_ref, o_ref, *, eps, gelu):
    """Fused LayerNorm(row) + GEMM + bias (+ tanh-GELU) on one (TM, K) tile.

    w_ref is kept in torch layout (Nout, K); contraction is K-vs-K, which
    lowers to the same MXU op without a wrapper-side transpose.
    """
    x = x_ref[...].astype(jnp.float32)                      # (TM, K)
    mean = jnp.mean(x, axis=-1, keepdims=True)
    xc = x - mean
    var = jnp.mean(xc * xc, axis=-1, keepdims=True)
    xn = xc * jax.lax.rsqrt(var + eps)
    xn = xn * g_ref[...] + bln_ref[...]                     # (TM, K)

    acc = jax.lax.dot_general(
        xn, w_ref[...],
        dimension_numbers=(((1,), (1,)), ((), ())),
        preferred_element_type=jnp.float32)                 # (TM, Nout)
    acc = acc + b_ref[...]                                  # bias broadcast once/tile

    if gelu:
        # tanh-approximation GELU (exact-erf GELU differs by < ~1e-3).
        c = 0.7978845608028654  # sqrt(2/pi)
        acc = 0.5 * acc * (1.0 + jnp.tanh(c * (acc + 0.044715 * acc * acc * acc)))

    o_ref[...] = acc.astype(o_ref.dtype)


def _gemm_bias_res_kernel(x_ref, w_ref, b_ref, r_ref, o_ref):
    """o = residual + x @ w^T + b on one (TM, K) tile."""
    acc = jax.lax.dot_general(
        x_ref[...].astype(jnp.float32), w_ref[...],
        dimension_numbers=(((1,), (1,)), ((), ())),
        preferred_element_type=jnp.float32)                 # (TM, Nout)
    o_ref[...] = (r_ref[...].astype(jnp.float32) + acc + b_ref[...]).astype(o_ref.dtype)


def _mha_kernel(q_ref, k_ref, v_ref, o_ref, *, scale):
    """Softmax attention for one (batch*head) slice: blocks are (1, S, Dh)."""
    q = q_ref[...].astype(jnp.float32)
    k = k_ref[...].astype(jnp.float32)
    v = v_ref[...].astype(jnp.float32)
    s = jnp.einsum('bqd,bkd->bqk', q, k,
                   preferred_element_type=jnp.float32) * scale     # (1, S, S)
    m = jnp.max(s, axis=-1, keepdims=True)
    p = jnp.exp(s - m)
    p = p / jnp.sum(p, axis=-1, keepdims=True)
    o = jnp.einsum('bqk,bkd->bqd', p, v,
                   preferred_element_type=jnp.float32)              # (1, S, Dh)
    o_ref[...] = o.astype(o_ref.dtype)


# ---------------------------------------------------------------------------
# pallas_call wrappers
# ---------------------------------------------------------------------------

_VMEM_LIMIT = 32 * 1024 * 1024  # explicit; safe on v5e/v6e/v7x scoped VMEM


def _pick_tile(m: int) -> int:
    """Largest lane-friendly M-tile that still gives >= 2 grid steps."""
    for c in (512, 256, 128, 64, 32, 16, 8):
        if m % c == 0 and m // c >= 2:
            return c
    return m


def _ln_gemm(x, gamma, beta, w, b, *, gelu, eps=1e-5):
    M, K = x.shape
    nout = w.shape[0]
    tm = _pick_tile(M)
    kernel = functools.partial(_ln_gemm_kernel, eps=eps, gelu=gelu)
    return pl.pallas_call(
        kernel,
        out_shape=jax.ShapeDtypeStruct((M, nout), x.dtype),
        grid_spec=pltpu.PrefetchScalarGridSpec(
            num_scalar_prefetch=0,
            grid=(M // tm,),
            in_specs=[
                pl.BlockSpec((tm, K), lambda i: (i, 0)),        # token tile (streamed)
                pl.BlockSpec((1, K), lambda i: (0, 0)),         # LN gamma  (resident)
                pl.BlockSpec((1, K), lambda i: (0, 0)),         # LN beta   (resident)
                pl.BlockSpec((nout, K), lambda i: (0, 0)),      # weight    (resident)
                pl.BlockSpec((1, nout), lambda i: (0, 0)),      # bias      (resident)
            ],
            out_specs=pl.BlockSpec((tm, nout), lambda i: (i, 0)),
        ),
        compiler_params=pltpu.CompilerParams(
            dimension_semantics=("parallel",),
            vmem_limit_bytes=_VMEM_LIMIT,
        ),
    )(x, gamma.reshape(1, K), beta.reshape(1, K), w, b.reshape(1, nout))


def _gemm_bias_res(x, w, b, residual):
    M, K = x.shape
    nout = w.shape[0]
    tm = _pick_tile(M)
    return pl.pallas_call(
        _gemm_bias_res_kernel,
        out_shape=jax.ShapeDtypeStruct((M, nout), x.dtype),
        grid_spec=pltpu.PrefetchScalarGridSpec(
            num_scalar_prefetch=0,
            grid=(M // tm,),
            in_specs=[
                pl.BlockSpec((tm, K), lambda i: (i, 0)),        # activations (streamed)
                pl.BlockSpec((nout, K), lambda i: (0, 0)),      # weight      (resident)
                pl.BlockSpec((1, nout), lambda i: (0, 0)),      # bias        (resident)
                pl.BlockSpec((tm, nout), lambda i: (i, 0)),     # residual    (streamed)
            ],
            out_specs=pl.BlockSpec((tm, nout), lambda i: (i, 0)),
        ),
        compiler_params=pltpu.CompilerParams(
            dimension_semantics=("parallel",),
            vmem_limit_bytes=_VMEM_LIMIT,
        ),
    )(x, w, b.reshape(1, nout), residual)


def _mha(q, k, v, *, scale):
    BH, S, Dh = q.shape
    kernel = functools.partial(_mha_kernel, scale=scale)
    spec = pl.BlockSpec((1, S, Dh), lambda i: (i, 0, 0))
    return pl.pallas_call(
        kernel,
        out_shape=jax.ShapeDtypeStruct((BH, S, Dh), q.dtype),
        grid_spec=pltpu.PrefetchScalarGridSpec(
            num_scalar_prefetch=0,
            grid=(BH,),
            in_specs=[spec, spec, spec],
            out_specs=spec,
        ),
        compiler_params=pltpu.CompilerParams(
            dimension_semantics=("parallel",),
            vmem_limit_bytes=_VMEM_LIMIT,
        ),
    )(q, k, v)


# ---------------------------------------------------------------------------
# Full TransformerEncoderBlock forward
# ---------------------------------------------------------------------------

def transformer_encoder_block(x, params, num_heads):
    """x: (S, B, E) float32.  Returns (S, B, E), matching PyTorch eval() fwd."""
    S, B, E = x.shape
    H = num_heads
    Dh = E // H
    M = S * B
    x_flat = x.reshape(M, E)

    # --- MSA block: LayerNorm fused into the QKV projection ---
    qkv = _ln_gemm(x_flat, params['ln1_g'], params['ln1_b'],
                   params['w_qkv'], params['b_qkv'], gelu=False)     # (M, 3E)
    qkv = qkv.reshape(S, B, 3, H, Dh)
    qkv = jnp.transpose(qkv, (2, 1, 3, 0, 4)).reshape(3, B * H, S, Dh)
    q, k, v = qkv[0], qkv[1], qkv[2]

    attn = _mha(q, k, v, scale=1.0 / math.sqrt(Dh))                  # (B*H, S, Dh)
    attn = jnp.transpose(attn.reshape(B, H, S, Dh), (2, 0, 1, 3)).reshape(M, E)

    # out-projection + first residual
    x1 = _gemm_bias_res(attn, params['w_o'], params['b_o'], x_flat)  # (M, E)

    # --- MLP block: LayerNorm fused into fc1, GELU fused, fc2 + residual ---
    # (Dropout layers are identity at inference.)
    h = _ln_gemm(x1, params['ln2_g'], params['ln2_b'],
                 params['w_1'], params['b_1'], gelu=True)            # (M, mlp)
    x2 = _gemm_bias_res(h, params['w_2'], params['b_2'], x1)         # (M, E)

    return x2.reshape(S, B, E)


# ---------------------------------------------------------------------------
# Demo + reference check
# ---------------------------------------------------------------------------

def _reference(x, p, num_heads):
    """Pure-JAX reference mirroring PyTorch (exact-erf GELU, eval-mode dropout)."""
    HI = jax.lax.Precision.HIGHEST
    S, B, E = x.shape
    H = num_heads
    Dh = E // H

    def ln(v, g, b, eps=1e-5):
        mu = v.mean(-1, keepdims=True)
        var = ((v - mu) ** 2).mean(-1, keepdims=True)
        return (v - mu) / jnp.sqrt(var + eps) * g + b

    xn = ln(x, p['ln1_g'], p['ln1_b'])
    qkv = jnp.einsum('sbe,fe->sbf', xn, p['w_qkv'], precision=HI) + p['b_qkv']
    q, k, v = jnp.split(qkv, 3, axis=-1)

    def heads(t):  # (S,B,E) -> (B,H,S,Dh)
        return jnp.transpose(t.reshape(S, B, H, Dh), (1, 2, 0, 3))

    qh, kh, vh = heads(q), heads(k), heads(v)
    s = jnp.einsum('bhqd,bhkd->bhqk', qh, kh, precision=HI) / math.sqrt(Dh)
    a = jax.nn.softmax(s, axis=-1)
    oh = jnp.einsum('bhqk,bhkd->bhqd', a, vh, precision=HI)
    o = jnp.transpose(oh, (2, 0, 1, 3)).reshape(S, B, E)
    attn = jnp.einsum('sbe,fe->sbf', o, p['w_o'], precision=HI) + p['b_o']
    x1 = x + attn

    x1n = ln(x1, p['ln2_g'], p['ln2_b'])
    h = jnp.einsum('sbe,fe->sbf', x1n, p['w_1'], precision=HI) + p['b_1']
    h = 0.5 * h * (1.0 + jax.lax.erf(h / math.sqrt(2.0)))            # exact GELU
    mlp = jnp.einsum('sbf,ef->sbe', h, p['w_2'], precision=HI) + p['b_2']
    return x1 + mlp


if __name__ == "__main__":
    # Module defaults: embedding_dim=256, num_heads=4, mlp_size=512.
    # Small token count: seq=8, batch=2  ->  M = 16 tokens (grid of 2 tiles).
    S, B = 8, 2
    E, H, MLP = 256, 4, 512

    key = jax.random.PRNGKey(0)
    ks = jax.random.split(key, 13)
    x = jax.random.normal(ks[0], (S, B, E), dtype=jnp.float32)
    params = dict(
        ln1_g=1.0 + 0.1 * jax.random.normal(ks[1], (E,), jnp.float32),
        ln1_b=0.1 * jax.random.normal(ks[2], (E,), jnp.float32),
        w_qkv=0.05 * jax.random.normal(ks[3], (3 * E, E), jnp.float32),
        b_qkv=0.05 * jax.random.normal(ks[4], (3 * E,), jnp.float32),
        w_o=0.05 * jax.random.normal(ks[5], (E, E), jnp.float32),
        b_o=0.05 * jax.random.normal(ks[6], (E,), jnp.float32),
        ln2_g=1.0 + 0.1 * jax.random.normal(ks[7], (E,), jnp.float32),
        ln2_b=0.1 * jax.random.normal(ks[8], (E,), jnp.float32),
        w_1=0.05 * jax.random.normal(ks[9], (MLP, E), jnp.float32),
        b_1=0.05 * jax.random.normal(ks[10], (MLP,), jnp.float32),
        w_2=0.05 * jax.random.normal(ks[11], (E, MLP), jnp.float32),
        b_2=0.05 * jax.random.normal(ks[12], (E,), jnp.float32),
    )

    fwd = jax.jit(transformer_encoder_block, static_argnums=(2,))
    out = jax.block_until_ready(fwd(x, params, H))
    assert out.shape == (S, B, E)

    ref = _reference(x, params, H)
    max_diff = float(jnp.max(jnp.abs(out - ref)))
    assert jnp.allclose(out, ref, atol=2e-2, rtol=2e-2), f"max diff {max_diff}"

    print("KERNEL_OK")
</pallas_src>

<mosaic_0001>
module attributes {stable_mosaic.version = 11 : i64} {
  func.func @_ln_gemm_kernel(%arg0: i32, %arg1: memref<8x256xf32, #tpu.memory_space<vmem>>, %arg2: memref<1x256xf32, #tpu.memory_space<vmem>>, %arg3: memref<1x256xf32, #tpu.memory_space<vmem>>, %arg4: memref<768x256xf32, #tpu.memory_space<vmem>>, %arg5: memref<1x768xf32, #tpu.memory_space<vmem>>, %arg6: memref<8x768xf32, #tpu.memory_space<vmem>>) attributes {dimension_semantics = [#tpu.dimension_semantics<parallel>], iteration_bounds = array<i64: 2>, scalar_prefetch = 0 : i64, scratch_operands = 0 : i64, tpu.core_type = #tpu.core_type<tc>, window_params = [{transform_indices = @transform_0, window_bounds = array<i64: 8, 256>}, {pipeline_mode = #tpu.pipeline_mode<synchronous>, transform_indices = @transform_1, window_bounds = array<i64: 1, 256>}, {pipeline_mode = #tpu.pipeline_mode<synchronous>, transform_indices = @transform_2, window_bounds = array<i64: 1, 256>}, {pipeline_mode = #tpu.pipeline_mode<synchronous>, transform_indices = @transform_3, window_bounds = array<i64: 768, 256>}, {pipeline_mode = #tpu.pipeline_mode<synchronous>, transform_indices = @transform_4, window_bounds = array<i64: 1, 768>}, {transform_indices = @transform_5, window_bounds = array<i64: 8, 768>}]} {
    %c0 = arith.constant 0 : index
    %c0_0 = arith.constant 0 : index
    %0 = vector.load %arg1[%c0, %c0_0] : memref<8x256xf32, #tpu.memory_space<vmem>>, vector<8x256xf32>
    %cst = arith.constant dense<0.000000e+00> : vector<8xf32>
    %1 = vector.multi_reduction <add>, %0, %cst [1] : vector<8x256xf32> to vector<8xf32>
    %2 = vector.shape_cast %1 : vector<8xf32> to vector<8x1xf32>
    %cst_1 = arith.constant 2.560000e+02 : f32
    %3 = vector.broadcast %cst_1 : f32 to vector<8x1xf32>
    %4 = arith.divf %2, %3 : vector<8x1xf32>
    %5 = vector.broadcast %4 : vector<8x1xf32> to vector<8x256xf32>
    %6 = arith.subf %0, %5 : vector<8x256xf32>
    %7 = arith.mulf %6, %6 : vector<8x256xf32>
    %cst_2 = arith.constant dense<0.000000e+00> : vector<8xf32>
    %8 = vector.multi_reduction <add>, %7, %cst_2 [1] : vector<8x256xf32> to vector<8xf32>
    %9 = vector.shape_cast %8 : vector<8xf32> to vector<8x1xf32>
    %cst_3 = arith.constant 2.560000e+02 : f32
    %10 = vector.broadcast %cst_3 : f32 to vector<8x1xf32>
    %11 = arith.divf %9, %10 : vector<8x1xf32>
    %cst_4 = arith.constant 9.99999974E-6 : f32
    %12 = vector.broadcast %cst_4 : f32 to vector<8x1xf32>
    %13 = arith.addf %11, %12 : vector<8x1xf32>
    %14 = math.rsqrt %13 : vector<8x1xf32>
    %15 = vector.broadcast %14 : vector<8x1xf32> to vector<8x256xf32>
    %16 = arith.mulf %6, %15 : vector<8x256xf32>
    %c0_5 = arith.constant 0 : index
    %c0_6 = arith.constant 0 : index
    %17 = vector.load %arg2[%c0_5, %c0_6] : memref<1x256xf32, #tpu.memory_space<vmem>>, vector<1x256xf32>
    %18 = vector.broadcast %17 : vector<1x256xf32> to vector<8x256xf32>
    %19 = arith.mulf %16, %18 : vector<8x256xf32>
    %c0_7 = arith.constant 0 : index
    %c0_8 = arith.constant 0 : index
    %20 = vector.load %arg3[%c0_7, %c0_8] : memref<1x256xf32, #tpu.memory_space<vmem>>, vector<1x256xf32>
    %21 = vector.broadcast %20 : vector<1x256xf32> to vector<8x256xf32>
    %22 = arith.addf %19, %21 : vector<8x256xf32>
    %c0_9 = arith.constant 0 : index
    %c0_10 = arith.constant 0 : index
    %23 = vector.load %arg4[%c0_9, %c0_10] : memref<768x256xf32, #tpu.memory_space<vmem>>, vector<768x256xf32>
    %cst_11 = arith.constant dense<0.000000e+00> : vector<8x768xf32>
    %24 = tpu.matmul %22, %23, %cst_11 {dimension_numbers = #tpu.dot_dimension_numbers<[1], [1], [0], [0], [0, 0, 1, 0], [], []>} : vector<8x256xf32>, vector<768x256xf32>, vector<8x768xf32> -> vector<8x768xf32>
    %c0_12 = arith.constant 0 : index
    %c0_13 = arith.constant 0 : index
    %25 = vector.load %arg5[%c0_12, %c0_13] : memref<1x768xf32, #tpu.memory_space<vmem>>, vector<1x768xf32>
    %26 = vector.broadcast %25 : vector<1x768xf32> to vector<8x768xf32>
    %27 = arith.addf %24, %26 : vector<8x768xf32>
    %c0_14 = arith.constant 0 : index
    %c0_15 = arith.constant 0 : index
    %28 = vector.load %arg6[%c0_14, %c0_15] : memref<8x768xf32, #tpu.memory_space<vmem>>, vector<8x768xf32>
    tpu.vector_store %arg6[%c0_14, %c0_15], %27 {strides = array<i32>} : memref<8x768xf32, #tpu.memory_space<vmem>>, vector<8x768xf32>,
    return
  }
  func.func @transform_0(%arg0: i32) -> (i32, i32) {
    %c0_i32 = arith.constant 0 : i32
    %c0_i32_0 = arith.constant 0 : i32
    return %arg0, %c0_i32 : i32, i32
  }
  func.func @transform_1(%arg0: i32) -> (i32, i32) {
    %c0_i32 = arith.constant 0 : i32
    %c0_i32_0 = arith.constant 0 : i32
    %c0_i32_1 = arith.constant 0 : i32
    return %c0_i32, %c0_i32_0 : i32, i32
  }
  func.func @transform_2(%arg0: i32) -> (i32, i32) {
    %c0_i32 = arith.constant 0 : i32
    %c0_i32_0 = arith.constant 0 : i32
    %c0_i32_1 = arith.constant 0 : i32
    return %c0_i32, %c0_i32_0 : i32, i32
  }
  func.func @transform_3(%arg0: i32) -> (i32, i32) {
    %c0_i32 = arith.constant 0 : i32
    %c0_i32_0 = arith.constant 0 : i32
    %c0_i32_1 = arith.constant 0 : i32
    return %c0_i32, %c0_i32_0 : i32, i32
  }
  func.func @transform_4(%arg0: i32) -> (i32, i32) {
    %c0_i32 = arith.constant 0 : i32
    %c0_i32_0 = arith.constant 0 : i32
    %c0_i32_1 = arith.constant 0 : i32
    return %c0_i32, %c0_i32_0 : i32, i32
  }
  func.func @transform_5(%arg0: i32) -> (i32, i32) {
    %c0_i32 = arith.constant 0 : i32
    %c0_i32_0 = arith.constant 0 : i32
    return %arg0, %c0_i32 : i32, i32
  }
}

module attributes {stable_mosaic.version = 11 : i64} {
  func.func @_mha_kernel(%arg0: i32, %arg1: memref<1x8x64xf32, #tpu.memory_space<vmem>>, %arg2: memref<1x8x64xf32, #tpu.memory_space<vmem>>, %arg3: memref<1x8x64xf32, #tpu.memory_space<vmem>>, %arg4: memref<1x8x64xf32, #tpu.memory_space<vmem>>) attributes {dimension_semantics = [#tpu.dimension_semantics<parallel>], iteration_bounds = array<i64: 8>, scalar_prefetch = 0 : i64, scratch_operands = 0 : i64, tpu.core_type = #tpu.core_type<tc>, window_params = [{transform_indices = @transform_0, window_bounds = array<i64: 1, 8, 64>}, {transform_indices = @transform_1, window_bounds = array<i64: 1, 8, 64>}, {transform_indices = @transform_2, window_bounds = array<i64: 1, 8, 64>}, {transform_indices = @transform_3, window_bounds = array<i64: 1, 8, 64>}]} {
    %c0 = arith.constant 0 : index
    %c0_0 = arith.constant 0 : index
    %c0_1 = arith.constant 0 : index
    %0 = vector.load %arg1[%c0, %c0_0, %c0_1] : memref<1x8x64xf32, #tpu.memory_space<vmem>>, vector<1x8x64xf32>
    %c0_2 = arith.constant 0 : index
    %c0_3 = arith.constant 0 : index
    %c0_4 = arith.constant 0 : index
    %1 = vector.load %arg2[%c0_2, %c0_3, %c0_4] : memref<1x8x64xf32, #tpu.memory_space<vmem>>, vector<1x8x64xf32>
    %c0_5 = arith.constant 0 : index
    %c0_6 = arith.constant 0 : index
    %c0_7 = arith.constant 0 : index
    %2 = vector.load %arg3[%c0_5, %c0_6, %c0_7] : memref<1x8x64xf32, #tpu.memory_space<vmem>>, vector<1x8x64xf32>
    "tpu.trace_start"() <{level = 10 : i32, message = "bqd,bkd->bqk"}> : () -> ()
    %cst = arith.constant dense<0.000000e+00> : vector<1x8x8xf32>
    %3 = tpu.matmul %0, %1, %cst {dimension_numbers = #tpu.dot_dimension_numbers<[2], [2], [1], [1], [0, 0, 0, 1, 1, 1], [0], [0]>} : vector<1x8x64xf32>, vector<1x8x64xf32>, vector<1x8x8xf32> -> vector<1x8x8xf32>
    "tpu.trace_stop"() : () -> ()
    %cst_8 = arith.constant 1.250000e-01 : f32
    %4 = vector.broadcast %cst_8 : f32 to vector<1x8x8xf32>
    %5 = arith.mulf %3, %4 : vector<1x8x8xf32>
    %cst_9 = arith.constant dense<0xFF800000> : vector<1x8xf32>
    %6 = vector.multi_reduction <maximumf>, %5, %cst_9 [2] : vector<1x8x8xf32> to vector<1x8xf32>
    %7 = vector.shape_cast %6 : vector<1x8xf32> to vector<1x8x1xf32>
    %8 = vector.broadcast %7 : vector<1x8x1xf32> to vector<1x8x8xf32>
    %9 = arith.subf %5, %8 : vector<1x8x8xf32>
    %10 = math.exp %9 : vector<1x8x8xf32>
    %cst_10 = arith.constant dense<0.000000e+00> : vector<1x8xf32>
    %11 = vector.multi_reduction <add>, %10, %cst_10 [2] : vector<1x8x8xf32> to vector<1x8xf32>
    %12 = vector.shape_cast %11 : vector<1x8xf32> to vector<1x8x1xf32>
    %13 = vector.broadcast %12 : vector<1x8x1xf32> to vector<1x8x8xf32>
    %14 = arith.divf %10, %13 : vector<1x8x8xf32>
    "tpu.trace_start"() <{level = 10 : i32, message = "bqk,bkd->bqd"}> : () -> ()
    %cst_11 = arith.constant dense<0.000000e+00> : vector<1x8x64xf32>
    %15 = tpu.matmul %14, %2, %cst_11 {dimension_numbers = #tpu.dot_dimension_numbers<[2], [1], [1], [2], [0, 0, 0, 1, 1, 2], [0], [0]>} : vector<1x8x8xf32>, vector<1x8x64xf32>, vector<1x8x64xf32> -> vector<1x8x64xf32>
    "tpu.trace_stop"() : () -> ()
    %c0_12 = arith.constant 0 : index
    %c0_13 = arith.constant 0 : index
    %c0_14 = arith.constant 0 : index
    %16 = vector.load %arg4[%c0_12, %c0_13, %c0_14] : memref<1x8x64xf32, #tpu.memory_space<vmem>>, vector<1x8x64xf32>
    tpu.vector_store %arg4[%c0_12, %c0_13, %c0_14], %15 {strides = array<i32>} : memref<1x8x64xf32, #tpu.memory_space<vmem>>, vector<1x8x64xf32>,
    return
  }
  func.func @transform_0(%arg0: i32) -> (i32, i32, i32) {
    %c0_i32 = arith.constant 0 : i32
    %c0_i32_0 = arith.constant 0 : i32
    %c0_i32_1 = arith.constant 0 : i32
    return %arg0, %c0_i32, %c0_i32_0 : i32, i32, i32
  }
  func.func @transform_1(%arg0: i32) -> (i32, i32, i32) {
    %c0_i32 = arith.constant 0 : i32
    %c0_i32_0 = arith.constant 0 : i32
    %c0_i32_1 = arith.constant 0 : i32
    return %arg0, %c0_i32, %c0_i32_0 : i32, i32, i32
  }
  func.func @transform_2(%arg0: i32) -> (i32, i32, i32) {
    %c0_i32 = arith.constant 0 : i32
    %c0_i32_0 = arith.constant 0 : i32
    %c0_i32_1 = arith.constant 0 : i32
    return %arg0, %c0_i32, %c0_i32_0 : i32, i32, i32
  }
  func.func @transform_3(%arg0: i32) -> (i32, i32, i32) {
    %c0_i32 = arith.constant 0 : i32
    %c0_i32_0 = arith.constant 0 : i32
    %c0_i32_1 = arith.constant 0 : i32
    return %arg0, %c0_i32, %c0_i32_0 : i32, i32, i32
  }
}

module attributes {stable_mosaic.version = 11 : i64} {
  func.func @_gemm_bias_res_kernel(%arg0: i32, %arg1: memref<8x256xf32, #tpu.memory_space<vmem>>, %arg2: memref<256x256xf32, #tpu.memory_space<vmem>>, %arg3: memref<1x256xf32, #tpu.memory_space<vmem>>, %arg4: memref<8x256xf32, #tpu.memory_space<vmem>>, %arg5: memref<8x256xf32, #tpu.memory_space<vmem>>) attributes {dimension_semantics = [#tpu.dimension_semantics<parallel>], iteration_bounds = array<i64: 2>, scalar_prefetch = 0 : i64, scratch_operands = 0 : i64, tpu.core_type = #tpu.core_type<tc>, window_params = [{transform_indices = @transform_0, window_bounds = array<i64: 8, 256>}, {pipeline_mode = #tpu.pipeline_mode<synchronous>, transform_indices = @transform_1, window_bounds = array<i64: 256, 256>}, {pipeline_mode = #tpu.pipeline_mode<synchronous>, transform_indices = @transform_2, window_bounds = array<i64: 1, 256>}, {transform_indices = @transform_3, window_bounds = array<i64: 8, 256>}, {transform_indices = @transform_4, window_bounds = array<i64: 8, 256>}]} {
    %c0 = arith.constant 0 : index
    %c0_0 = arith.constant 0 : index
    %0 = vector.load %arg1[%c0, %c0_0] : memref<8x256xf32, #tpu.memory_space<vmem>>, vector<8x256xf32>
    %c0_1 = arith.constant 0 : index
    %c0_2 = arith.constant 0 : index
    %1 = vector.load %arg2[%c0_1, %c0_2] : memref<256x256xf32, #tpu.memory_space<vmem>>, vector<256x256xf32>
    %cst = arith.constant dense<0.000000e+00> : vector<8x256xf32>
    %2 = tpu.matmul %0, %1, %cst {dimension_numbers = #tpu.dot_dimension_numbers<[1], [1], [0], [0], [0, 0, 1, 0], [], []>} : vector<8x256xf32>, vector<256x256xf32>, vector<8x256xf32> -> vector<8x256xf32>
    %c0_3 = arith.constant 0 : index
    %c0_4 = arith.constant 0 : index
    %3 = vector.load %arg4[%c0_3, %c0_4] : memref<8x256xf32, #tpu.memory_space<vmem>>, vector<8x256xf32>
    %4 = arith.addf %3, %2 : vector<8x256xf32>
    %c0_5 = arith.constant 0 : index
    %c0_6 = arith.constant 0 : index
    %5 = vector.load %arg3[%c0_5, %c0_6] : memref<1x256xf32, #tpu.memory_space<vmem>>, vector<1x256xf32>
    %6 = vector.broadcast %5 : vector<1x256xf32> to vector<8x256xf32>
    %7 = arith.addf %4, %6 : vector<8x256xf32>
    %c0_7 = arith.constant 0 : index
    %c0_8 = arith.constant 0 : index
    %8 = vector.load %arg5[%c0_7, %c0_8] : memref<8x256xf32, #tpu.memory_space<vmem>>, vector<8x256xf32>
    tpu.vector_store %arg5[%c0_7, %c0_8], %7 {strides = array<i32>} : memref<8x256xf32, #tpu.memory_space<vmem>>, vector<8x256xf32>,
    return
  }
  func.func @transform_0(%arg0: i32) -> (i32, i32) {
    %c0_i32 = arith.constant 0 : i32
    %c0_i32_0 = arith.constant 0 : i32
    return %arg0, %c0_i32 : i32, i32
  }
  func.func @transform_1(%arg0: i32) -> (i32, i32) {
    %c0_i32 = arith.constant 0 : i32
    %c0_i32_0 = arith.constant 0 : i32
    %c0_i32_1 = arith.constant 0 : i32
    return %c0_i32, %c0_i32_0 : i32, i32
  }
  func.func @transform_2(%arg0: i32) -> (i32, i32) {
    %c0_i32 = arith.constant 0 : i32
    %c0_i32_0 = arith.constant 0 : i32
    %c0_i32_1 = arith.constant 0 : i32
    return %c0_i32, %c0_i32_0 : i32, i32
  }
  func.func @transform_3(%arg0: i32) -> (i32, i32) {
    %c0_i32 = arith.constant 0 : i32
    %c0_i32_0 = arith.constant 0 : i32
    return %arg0, %c0_i32 : i32, i32
  }
  func.func @transform_4(%arg0: i32) -> (i32, i32) {
    %c0_i32 = arith.constant 0 : i32
    %c0_i32_0 = arith.constant 0 : i32
    return %arg0, %c0_i32 : i32, i32
  }
}

module attributes {stable_mosaic.version = 11 : i64} {
  func.func @_ln_gemm_kernel(%arg0: i32, %arg1: memref<8x256xf32, #tpu.memory_space<vmem>>, %arg2: memref<1x256xf32, #tpu.memory_space<vmem>>, %arg3: memref<1x256xf32, #tpu.memory_space<vmem>>, %arg4: memref<512x256xf32, #tpu.memory_space<vmem>>, %arg5: memref<1x512xf32, #tpu.memory_space<vmem>>, %arg6: memref<8x512xf32, #tpu.memory_space<vmem>>) attributes {dimension_semantics = [#tpu.dimension_semantics<parallel>], iteration_bounds = array<i64: 2>, scalar_prefetch = 0 : i64, scratch_operands = 0 : i64, tpu.core_type = #tpu.core_type<tc>, window_params = [{transform_indices = @transform_0, window_bounds = array<i64: 8, 256>}, {pipeline_mode = #tpu.pipeline_mode<synchronous>, transform_indices = @transform_1, window_bounds = array<i64: 1, 256>}, {pipeline_mode = #tpu.pipeline_mode<synchronous>, transform_indices = @transform_2, window_bounds = array<i64: 1, 256>}, {pipeline_mode = #tpu.pipeline_mode<synchronous>, transform_indices = @transform_3, window_bounds = array<i64: 512, 256>}, {pipeline_mode = #tpu.pipeline_mode<synchronous>, transform_indices = @transform_4, window_bounds = array<i64: 1, 512>}, {transform_indices = @transform_5, window_bounds = array<i64: 8, 512>}]} {
    %c0 = arith.constant 0 : index
    %c0_0 = arith.constant 0 : index
    %0 = vector.load %arg1[%c0, %c0_0] : memref<8x256xf32, #tpu.memory_space<vmem>>, vector<8x256xf32>
    %cst = arith.constant dense<0.000000e+00> : vector<8xf32>
    %1 = vector.multi_reduction <add>, %0, %cst [1] : vector<8x256xf32> to vector<8xf32>
    %2 = vector.shape_cast %1 : vector<8xf32> to vector<8x1xf32>
    %cst_1 = arith.constant 2.560000e+02 : f32
    %3 = vector.broadcast %cst_1 : f32 to vector<8x1xf32>
    %4 = arith.divf %2, %3 : vector<8x1xf32>
    %5 = vector.broadcast %4 : vector<8x1xf32> to vector<8x256xf32>
    %6 = arith.subf %0, %5 : vector<8x256xf32>
    %7 = arith.mulf %6, %6 : vector<8x256xf32>
    %cst_2 = arith.constant dense<0.000000e+00> : vector<8xf32>
    %8 = vector.multi_reduction <add>, %7, %cst_2 [1] : vector<8x256xf32> to vector<8xf32>
    %9 = vector.shape_cast %8 : vector<8xf32> to vector<8x1xf32>
    %cst_3 = arith.constant 2.560000e+02 : f32
    %10 = vector.broadcast %cst_3 : f32 to vector<8x1xf32>
    %11 = arith.divf %9, %10 : vector<8x1xf32>
    %cst_4 = arith.constant 9.99999974E-6 : f32
    %12 = vector.broadcast %cst_4 : f32 to vector<8x1xf32>
    %13 = arith.addf %11, %12 : vector<8x1xf32>
    %14 = math.rsqrt %13 : vector<8x1xf32>
    %15 = vector.broadcast %14 : vector<8x1xf32> to vector<8x256xf32>
    %16 = arith.mulf %6, %15 : vector<8x256xf32>
    %c0_5 = arith.constant 0 : index
    %c0_6 = arith.constant 0 : index
    %17 = vector.load %arg2[%c0_5, %c0_6] : memref<1x256xf32, #tpu.memory_space<vmem>>, vector<1x256xf32>
    %18 = vector.broadcast %17 : vector<1x256xf32> to vector<8x256xf32>
    %19 = arith.mulf %16, %18 : vector<8x256xf32>
    %c0_7 = arith.constant 0 : index
    %c0_8 = arith.constant 0 : index
    %20 = vector.load %arg3[%c0_7, %c0_8] : memref<1x256xf32, #tpu.memory_space<vmem>>, vector<1x256xf32>
    %21 = vector.broadcast %20 : vector<1x256xf32> to vector<8x256xf32>
    %22 = arith.addf %19, %21 : vector<8x256xf32>
    %c0_9 = arith.constant 0 : index
    %c0_10 = arith.constant 0 : index
    %23 = vector.load %arg4[%c0_9, %c0_10] : memref<512x256xf32, #tpu.memory_space<vmem>>, vector<512x256xf32>
    %cst_11 = arith.constant dense<0.000000e+00> : vector<8x512xf32>
    %24 = tpu.matmul %22, %23, %cst_11 {dimension_numbers = #tpu.dot_dimension_numbers<[1], [1], [0], [0], [0, 0, 1, 0], [], []>} : vector<8x256xf32>, vector<512x256xf32>, vector<8x512xf32> -> vector<8x512xf32>
    %c0_12 = arith.constant 0 : index
    %c0_13 = arith.constant 0 : index
    %25 = vector.load %arg5[%c0_12, %c0_13] : memref<1x512xf32, #tpu.memory_space<vmem>>, vector<1x512xf32>
    %26 = vector.broadcast %25 : vector<1x512xf32> to vector<8x512xf32>
    %27 = arith.addf %24, %26 : vector<8x512xf32>
    %cst_14 = arith.constant 5.000000e-01 : f32
    %28 = vector.broadcast %cst_14 : f32 to vector<8x512xf32>
    %29 = arith.mulf %28, %27 : vector<8x512xf32>
    %cst_15 = arith.constant 4.471500e-02 : f32
    %30 = vector.broadcast %cst_15 : f32 to vector<8x512xf32>
    %31 = arith.mulf %30, %27 : vector<8x512xf32>
    %32 = arith.mulf %31, %27 : vector<8x512xf32>
    %33 = arith.mulf %32, %27 : vector<8x512xf32>
    %34 = arith.addf %27, %33 : vector<8x512xf32>
    %cst_16 = arith.constant 0.797884583 : f32
    %35 = vector.broadcast %cst_16 : f32 to vector<8x512xf32>
    %36 = arith.mulf %35, %34 : vector<8x512xf32>
    %37 = math.tanh %36 : vector<8x512xf32>
    %cst_17 = arith.constant 1.000000e+00 : f32
    %38 = vector.broadcast %cst_17 : f32 to vector<8x512xf32>
    %39 = arith.addf %38, %37 : vector<8x512xf32>
    %40 = arith.mulf %29, %39 : vector<8x512xf32>
    %c0_18 = arith.constant 0 : index
    %c0_19 = arith.constant 0 : index
    %41 = vector.load %arg6[%c0_18, %c0_19] : memref<8x512xf32, #tpu.memory_space<vmem>>, vector<8x512xf32>
    tpu.vector_store %arg6[%c0_18, %c0_19], %40 {strides = array<i32>} : memref<8x512xf32, #tpu.memory_space<vmem>>, vector<8x512xf32>,
    return
  }
  func.func @transform_0(%arg0: i32) -> (i32, i32) {
    %c0_i32 = arith.constant 0 : i32
    %c0_i32_0 = arith.constant 0 : i32
    return %arg0, %c0_i32 : i32, i32
  }
  func.func @transform_1(%arg0: i32) -> (i32, i32) {
    %c0_i32 = arith.constant 0 : i32
    %c0_i32_0 = arith.constant 0 : i32
    %c0_i32_1 = arith.constant 0 : i32
    return %c0_i32, %c0_i32_0 : i32, i32
  }
  func.func @transform_2(%arg0: i32) -> (i32, i32) {
    %c0_i32 = arith.constant 0 : i32
    %c0_i32_0 = arith.constant 0 : i32
    %c0_i32_1 = arith.constant 0 : i32
    return %c0_i32, %c0_i32_0 : i32, i32
  }
  func.func @transform_3(%arg0: i32) -> (i32, i32) {
    %c0_i32 = arith.constant 0 : i32
    %c0_i32_0 = arith.constant 0 : i32
    %c0_i32_1 = arith.constant 0 : i32
    return %c0_i32, %c0_i32_0 : i32, i32
  }
  func.func @transform_4(%arg0: i32) -> (i32, i32) {
    %c0_i32 = arith.constant 0 : i32
    %c0_i32_0 = arith.constant 0 : i32
    %c0_i32_1 = arith.constant 0 : i32
    return %c0_i32, %c0_i32_0 : i32, i32
  }
  func.func @transform_5(%arg0: i32) -> (i32, i32) {
    %c0_i32 = arith.constant 0 : i32
    %c0_i32_0 = arith.constant 0 : i32
    return %arg0, %c0_i32 : i32, i32
  }
}

module attributes {stable_mosaic.version = 11 : i64} {
  func.func @_gemm_bias_res_kernel(%arg0: i32, %arg1: memref<8x512xf32, #tpu.memory_space<vmem>>, %arg2: memref<256x512xf32, #tpu.memory_space<vmem>>, %arg3: memref<1x256xf32, #tpu.memory_space<vmem>>, %arg4: memref<8x256xf32, #tpu.memory_space<vmem>>, %arg5: memref<8x256xf32, #tpu.memory_space<vmem>>) attributes {dimension_semantics = [#tpu.dimension_semantics<parallel>], iteration_bounds = array<i64: 2>, scalar_prefetch = 0 : i64, scratch_operands = 0 : i64, tpu.core_type = #tpu.core_type<tc>, window_params = [{transform_indices = @transform_0, window_bounds = array<i64: 8, 512>}, {pipeline_mode = #tpu.pipeline_mode<synchronous>, transform_indices = @transform_1, window_bounds = array<i64: 256, 512>}, {pipeline_mode = #tpu.pipeline_mode<synchronous>, transform_indices = @transform_2, window_bounds = array<i64: 1, 256>}, {transform_indices = @transform_3, window_bounds = array<i64: 8, 256>}, {transform_indices = @transform_4, window_bounds = array<i64: 8, 256>}]} {
    %c0 = arith.constant 0 : index
    %c0_0 = arith.constant 0 : index
    %0 = vector.load %arg1[%c0, %c0_0] : memref<8x512xf32, #tpu.memory_space<vmem>>, vector<8x512xf32>
    %c0_1 = arith.constant 0 : index
    %c0_2 = arith.constant 0 : index
    %1 = vector.load %arg2[%c0_1, %c0_2] : memref<256x512xf32, #tpu.memory_space<vmem>>, vector<256x512xf32>
    %cst = arith.constant dense<0.000000e+00> : vector<8x256xf32>
    %2 = tpu.matmul %0, %1, %cst {dimension_numbers = #tpu.dot_dimension_numbers<[1], [1], [0], [0], [0, 0, 1, 0], [], []>} : vector<8x512xf32>, vector<256x512xf32>, vector<8x256xf32> -> vector<8x256xf32>
    %c0_3 = arith.constant 0 : index
    %c0_4 = arith.constant 0 : index
    %3 = vector.load %arg4[%c0_3, %c0_4] : memref<8x256xf32, #tpu.memory_space<vmem>>, vector<8x256xf32>
    %4 = arith.addf %3, %2 : vector<8x256xf32>
    %c0_5 = arith.constant 0 : index
    %c0_6 = arith.constant 0 : index
    %5 = vector.load %arg3[%c0_5, %c0_6] : memref<1x256xf32, #tpu.memory_space<vmem>>, vector<1x256xf32>
    %6 = vector.broadcast %5 : vector<1x256xf32> to vector<8x256xf32>
    %7 = arith.addf %4, %6 : vector<8x256xf32>
    %c0_7 = arith.constant 0 : index
    %c0_8 = arith.constant 0 : index
    %8 = vector.load %arg5[%c0_7, %c0_8] : memref<8x256xf32, #tpu.memory_space<vmem>>, vector<8x256xf32>
    tpu.vector_store %arg5[%c0_7, %c0_8], %7 {strides = array<i32>} : memref<8x256xf32, #tpu.memory_space<vmem>>, vector<8x256xf32>,
    return
  }
  func.func @transform_0(%arg0: i32) -> (i32, i32) {
    %c0_i32 = arith.constant 0 : i32
    %c0_i32_0 = arith.constant 0 : i32
    return %arg0, %c0_i32 : i32, i32
  }
  func.func @transform_1(%arg0: i32) -> (i32, i32) {
    %c0_i32 = arith.constant 0 : i32
    %c0_i32_0 = arith.constant 0 : i32
    %c0_i32_1 = arith.constant 0 : i32
    return %c0_i32, %c0_i32_0 : i32, i32
  }
  func.func @transform_2(%arg0: i32) -> (i32, i32) {
    %c0_i32 = arith.constant 0 : i32
    %c0_i32_0 = arith.constant 0 : i32
    %c0_i32_1 = arith.constant 0 : i32
    return %c0_i32, %c0_i32_0 : i32, i32
  }
  func.func @transform_3(%arg0: i32) -> (i32, i32) {
    %c0_i32 = arith.constant 0 : i32
    %c0_i32_0 = arith.constant 0 : i32
    return %arg0, %c0_i32 : i32, i32
  }
  func.func @transform_4(%arg0: i32) -> (i32, i32) {
    %c0_i32 = arith.constant 0 : i32
    %c0_i32_0 = arith.constant 0 : i32
    return %arg0, %c0_i32 : i32, i32
  }
}

</mosaic_0001>

<llo_original>
// kernel: transformer_encoder_block.6
$region0: #{transformer_encoder_block.6}
  #allocation0 [shape = 'u32[]', space=smem, size = 0x4, offset = 0x4, fixed_abs, tag = 'smem constant byte address 0x4 - core index']
  #allocation1 [shape = 'u32[144,128]{1,0:T(1,128)}', space=vmem, size = 0x12000, scoped, tag = 'internal scratch']
  %s0 = inlined_call_operand.vmem [shape: f32[8,8,64], index: 0, kind: input, shape index: {}]
  %s1 = inlined_call_operand.vmem [shape: f32[8,8,64], index: 1, kind: input, shape index: {}]
  %s2 = inlined_call_operand.vmem [shape: f32[8,8,64], index: 2, kind: input, shape index: {}]
  %s3 = inlined_call_operand.vmem [shape: f32[8,8,64], index: 3, kind: output, shape index: {}]
  %s4 = sld [smem:[#allocation0]]
  $region45: #{transformer_encoder_block.6} parent=0
    _
  %s6 = ssub.s32 1, %s4
  %s7 = scalar_select 0, %s6, %s4
  loop: start=0, step=1, limit=10
  $region2: #{transformer_encoder_block.6} parent=0 // loop_pre_header
    _
  $region3: #{transformer_encoder_block.6} parent=0 // loop_header
    %s9 = sphi 0, %s13
    %p10 = scmp.ge.s32.totalorder %s9, 10
    %s19 = sphi 0, %s21
    %s22 = sphi 0, %s19
    %s23 = sphi 0, %s22
    %s39 = sphi 0, %s23
    %s45 = sphi 0, %s47
    %s48 = sphi 0, %s45
    %s49 = sphi 0, %s48
    %s65 = sphi 0, %s49
    %s71 = sphi 0, %s73
    %s74 = sphi 0, %s71
    %s75 = sphi 0, %s74
    %s91 = sphi 0, %s75
    %s97 = sphi 0, %s99
    %s100 = sphi 0, %s97
    %s101 = sphi 0, %s100
    %s117 = sphi 0, %s101
  $region4: #{transformer_encoder_block.6} parent=0 // loop_header_branch
    %12 = sbr.rel (%p10) target = $region8
  $region5: #{transformer_encoder_block.6} parent=0 // loop_body
    %s14 = ssub.s32 %s9, 1
    %s15 = ssub.s32 %s9, 2
    %s16 = sadd.s32 %s9, 1
    %s17 = ssub.s32 %s9, %s16
    %p18 = scmp.eq.s32.totalorder %s17, 0
    %s20 = sadd.s32 %s19, 1
    %s21 = scalar_select %p18, %s19, %s20
    %p24 = pneg %p18
    %p25 = scmp.eq.s32.totalorder %s9, 7
    %p26 = por %p24, %p25
    %p27 = scmp.ne.s32.totalorder %s19, %s22
    %p28 = scmp.eq.s32.totalorder %s9, 0
    %p29 = por %p27, %p28
    %p30 = scmp.ne.s32.totalorder %s19, %s22
    %p31 = scmp.eq.s32.totalorder %s14, 7
    %p32 = por %p30, %p31
    %p33 = scmp.ne.s32.totalorder %s22, %s23
    %p34 = scmp.eq.s32.totalorder %s14, 0
    %p35 = por %p33, %p34
    %p36 = scmp.ne.s32.totalorder %s22, %s23
    %p37 = scmp.eq.s32.totalorder %s15, 7
    %p38 = por %p36, %p37
    %p40 = scmp.ne.s32.totalorder %s23, %s39
    %p41 = scmp.eq.s32.totalorder %s15, 0
    %p42 = por %p40, %p41
    %s43 = ssub.s32 %s9, %s16
    %p44 = scmp.eq.s32.totalorder %s43, 0
    %s46 = sadd.s32 %s45, 1
    %s47 = scalar_select %p44, %s45, %s46
    %p50 = pneg %p44
    %p51 = scmp.eq.s32.totalorder %s9, 7
    %p52 = por %p50, %p51
    %p53 = scmp.ne.s32.totalorder %s45, %s48
    %p54 = scmp.eq.s32.totalorder %s9, 0
    %p55 = por %p53, %p54
    %p56 = scmp.ne.s32.totalorder %s45, %s48
    %p57 = scmp.eq.s32.totalorder %s14, 7
    %p58 = por %p56, %p57
    %p59 = scmp.ne.s32.totalorder %s48, %s49
    %p60 = scmp.eq.s32.totalorder %s14, 0
    %p61 = por %p59, %p60
    %p62 = scmp.ne.s32.totalorder %s48, %s49
    %p63 = scmp.eq.s32.totalorder %s15, 7
    %p64 = por %p62, %p63
    %p66 = scmp.ne.s32.totalorder %s49, %s65
    %p67 = scmp.eq.s32.totalorder %s15, 0
    %p68 = por %p66, %p67
    %s69 = ssub.s32 %s9, %s16
    %p70 = scmp.eq.s32.totalorder %s69, 0
    %s72 = sadd.s32 %s71, 1
    %s73 = scalar_select %p70, %s71, %s72
    %p76 = pneg %p70
    %p77 = scmp.eq.s32.totalorder %s9, 7
    %p78 = por %p76, %p77
    %p79 = scmp.ne.s32.totalorder %s71, %s74
    %p80 = scmp.eq.s32.totalorder %s9, 0
    %p81 = por %p79, %p80
    %p82 = scmp.ne.s32.totalorder %s71, %s74
    %p83 = scmp.eq.s32.totalorder %s14, 7
    %p84 = por %p82, %p83
    %p85 = scmp.ne.s32.totalorder %s74, %s75
    %p86 = scmp.eq.s32.totalorder %s14, 0
    %p87 = por %p85, %p86
    %p88 = scmp.ne.s32.totalorder %s74, %s75
    %p89 = scmp.eq.s32.totalorder %s15, 7
    %p90 = por %p88, %p89
    %p92 = scmp.ne.s32.totalorder %s75, %s91
    %p93 = scmp.eq.s32.totalorder %s15, 0
    %p94 = por %p92, %p93
    %s95 = ssub.s32 %s9, %s16
    %p96 = scmp.eq.s32.totalorder %s95, 0
    %s98 = sadd.s32 %s97, 1
    %s99 = scalar_select %p96, %s97, %s98
    %p102 = pneg %p96
    %p103 = scmp.eq.s32.totalorder %s9, 7
    %p104 = por %p102, %p103
    %p105 = scmp.ne.s32.totalorder %s97, %s100
    %p106 = scmp.eq.s32.totalorder %s9, 0
    %p107 = por %p105, %p106
    %p108 = scmp.ne.s32.totalorder %s97, %s100
    %p109 = scmp.eq.s32.totalorder %s14, 7
    %p110 = por %p108, %p109
    %p111 = scmp.ne.s32.totalorder %s100, %s101
    %p112 = scmp.eq.s32.totalorder %s14, 0
    %p113 = por %p111, %p112
    %p114 = scmp.ne.s32.totalorder %s100, %s101
    %p115 = scmp.eq.s32.totalorder %s15, 7
    %p116 = por %p114, %p115
    %p118 = scmp.ne.s32.totalorder %s101, %s117
    %p119 = scmp.eq.s32.totalorder %s15, 0
    %p120 = por %p118, %p119
    %p121 = scmp.le.s32.totalorder 1, %s9
    %p122 = scmp.lt.s32.totalorder %s9, 9
    %p123 = pnand %p121, %p122
    %p124 = pneg %p123
    // Predicated region
    $region9: #{transformer_encoder_block.6} parent=5 // pred_check
      _
    $region10: #{transformer_encoder_block.6} parent=5 // pred_check_branch
      %126 = sbr.rel (%p123) target = $region12
    $region11: #{transformer_encoder_block.6} parent=5 // pred_region
      %s127 = ssub.s32 %s9, 1
    $region12: #{transformer_encoder_block.6} parent=5 // pred_fallthru
      _
    %p128 = scmp.lt.s32.totalorder %s9, 8
    // Predicated region
    $region13: #{transformer_encoder_block.6} parent=5 // pred_check
      %p129 = pneg %p128
    $region14: #{transformer_encoder_block.6} parent=5 // pred_check_branch
      %131 = sbr.rel (%p129) target = $region16
    $region15: #{transformer_encoder_block.6} parent=5 // pred_region
      // Predicated region
      $region17: #{transformer_encoder_block.6} parent=15 // pred_check
        %p132 = pneg %p29
      $region18: #{transformer_encoder_block.6} parent=15 // pred_check_branch
        %134 = sbr.rel (%p132) target = $region20
      $region19: #{transformer_encoder_block.6} parent=15 // pred_region
        %p135 = scmp.lt.s32.totalorder %s9, 7
        %s136 = scalar_select %p135, %s9, 7
        %s137 = smul.addr %s136, 8
        %s138 = scalar_lea.vmem %s0, %s137
      $region20: #{transformer_encoder_block.6} parent=15 // pred_fallthru
        _
      // Predicated region
      $region21: #{transformer_encoder_block.6} parent=15 // pred_check
        %p139 = pneg %p55
      $region22: #{transformer_encoder_block.6} parent=15 // pred_check_branch
        %141 = sbr.rel (%p139) target = $region24
      $region23: #{transformer_encoder_block.6} parent=15 // pred_region
        %p142 = scmp.lt.s32.totalorder %s9, 7
        %s143 = scalar_select %p142, %s9, 7
        %s144 = smul.addr %s143, 8
        %s145 = scalar_lea.vmem %s1, %s144
      $region24: #{transformer_encoder_block.6} parent=15 // pred_fallthru
        _
      // Predicated region
      $region25: #{transformer_encoder_block.6} parent=15 // pred_check
        %p146 = pneg %p81
      $region26: #{transformer_encoder_block.6} parent=15 // pred_check_branch
        %148 = sbr.rel (%p146) target = $region28
      $region27: #{transformer_encoder_block.6} parent=15 // pred_region
        %p149 = scmp.lt.s32.totalorder %s9, 7
        %s150 = scalar_select %p149, %s9, 7
        %s151 = smul.addr %s150, 8
        %s152 = scalar_lea.vmem %s2, %s151
      $region28: #{transformer_encoder_block.6} parent=15 // pred_fallthru
        _
    $region16: #{transformer_encoder_block.6} parent=5 // pred_fallthru
      _
    %p153 = scmp.le.s32.totalorder 1, %s9
    %p154 = scmp.lt.s32.totalorder %s9, 9
    %p155 = pnand %p153, %p154
    %p156 = pneg %p155
    // Predicated region
    $region29: #{transformer_encoder_block.6} parent=5 // pred_check
      _
    $region30: #{transformer_encoder_block.6} parent=5 // pred_check_branch
      %158 = sbr.rel (%p155) target = $region32
    $region31: #{transformer_encoder_block.6} parent=5 // pred_region
      %s159 = ssub.s32 %s9, 1
      %p160 = scmp.lt.s32.totalorder %s14, 7
      %s161 = scalar_select %p160, %s14, 7
      %s162 = smul.addr %s161, 8
      %s163 = scalar_lea.vmem %s0, %s162
      %p164 = pneg %p35
      %p165 = pneg %p32
      %p166 = scmp.lt.s32.totalorder %s14, 7
      %s167 = scalar_select %p166, %s14, 7
      %s168 = smul.addr %s167, 8
      %s169 = scalar_lea.vmem %s1, %s168
      %p170 = pneg %p61
      %p171 = pneg %p58
      %p172 = scmp.lt.s32.totalorder %s14, 7
      %s173 = scalar_select %p172, %s14, 7
      %s174 = smul.addr %s173, 8
      %s175 = scalar_lea.vmem %s2, %s174
      %p176 = pneg %p87
      %p177 = pneg %p84
      %p178 = pneg %p113
      %p179 = pneg %p110
      %p180 = scmp.lt.s32.totalorder %s14, 7
      %s181 = scalar_select %p180, %s14, 7
      %s182 = smul.addr %s181, 8
      %s183 = scalar_lea.vmem %s3, %s182
      %p184 = scmp.lt.s32.totalorder %s14, 7
      %s185 = scalar_select %p184, %s14, 7
      %s186 = smul.addr %s185, 8
      %s187 = scalar_lea.vmem %s0, %s186
      %p188 = scmp.lt.s32.totalorder %s14, 7
      %s189 = scalar_select %p188, %s14, 7
      %s190 = smul.addr %s189, 8
      %s191 = scalar_lea.vmem %s1, %s190
      %p192 = scmp.lt.s32.totalorder %s14, 7
      %s193 = scalar_select %p192, %s14, 7
      %s194 = smul.addr %s193, 8
      %s195 = scalar_lea.vmem %s2, %s194
      %p196 = scmp.lt.s32.totalorder %s14, 7
      %s197 = scalar_select %p196, %s14, 7
      %s198 = smul.addr %s197, 8
      %s199 = scalar_lea.vmem %s3, %s198
      %v200 = vld [vmem:[%s187] sm:$0xff]
      %v201 = vld [vmem:[%s191] sm:$0xff]
      %v202 = vld [vmem:[%s195] sm:$0xff]
      %vm203 = vcmask 523264
      %v205 = vsel %vm203, %v200, 0
      %v208 = vsel %vm203, %v201, 0
      %210 = vmatprep.subr.mxu0 0.0
      %211 = vmatpush1.xpose.msra.mxu0 %v208
      %212 = vmatprep.subr.mxu0 0.0
      %213 = vmatpush1.xpose.msra.mxu0 0.0
      %214 = vmatprep.subr.mxu0 0.0
      %215 = vmatpush1.xpose.msra.mxu0 0.0
      %216 = vmatprep.subr.mxu0 0.0
      %217 = vmatpush1.xpose.msra.mxu0 0.0
      %218 = vmatprep.subr.mxu0 0.0
      %219 = vmatpush1.xpose.msra.mxu0 0.0
      %220 = vmatprep.subr.mxu0 0.0
      %221 = vmatpush1.xpose.msra.mxu0 0.0
      %222 = vmatprep.subr.mxu0 0.0
      %223 = vmatpush1.xpose.msra.mxu0 0.0
      %224 = vmatprep.subr.mxu0 0.0
      %225 = vmatpush1.xpose.msra.mxu0 0.0
      %226 = vmatprep.subr.mxu0 0.0
      %227 = vmatpush1.xpose.msra.mxu0 0.0
      %228 = vmatprep.subr.mxu0 0.0
      %229 = vmatpush1.xpose.msra.mxu0 0.0
      %230 = vmatprep.subr.mxu0 0.0
      %231 = vmatpush1.xpose.msra.mxu0 0.0
      %232 = vmatprep.subr.mxu0 0.0
      %233 = vmatpush1.xpose.msra.mxu0 0.0
      %234 = vmatprep.subr.mxu0 0.0
      %235 = vmatpush1.xpose.msra.mxu0 0.0
      %236 = vmatprep.subr.mxu0 0.0
      %237 = vmatpush1.xpose.msra.mxu0 0.0
      %238 = vmatprep.subr.mxu0 0.0
      %239 = vmatpush1.xpose.msra.mxu0 0.0
      %240 = vmatprep.subr.mxu0 0.0
      %241 = vmatpush1.xpose.msra.mxu0 0.0
      %242 = vmatprep.subr.mxu0 0.0
      %243 = vmatpush1.xpose.msra.mxu0 0.0
      %244 = vmatprep.subr.mxu0 0.0
      %245 = vmatpush1.xpose.msra.mxu0 0.0
      %246 = vmatprep.subr.mxu0 0.0
      %247 = vmatpush1.xpose.msra.mxu0 0.0
      %248 = vmatprep.subr.mxu0 0.0
      %249 = vmatpush1.xpose.msra.mxu0 0.0
      %250 = vmatprep.subr.mxu0 0.0
      %251 = vmatpush1.xpose.msra.mxu0 0.0
      %252 = vmatprep.subr.mxu0 0.0
      %253 = vmatpush1.xpose.msra.mxu0 0.0
      %254 = vmatprep.subr.mxu0 0.0
      %255 = vmatpush1.xpose.msra.mxu0 0.0
      %256 = vmatprep.subr.mxu0 0.0
      %257 = vmatpush1.xpose.msra.mxu0 0.0
      %258 = vmatprep.subr.mxu0 0.0
      %259 = vmatpush1.xpose.msra.mxu0 0.0
      %260 = vmatprep.subr.mxu0 0.0
      %261 = vmatpush1.xpose.msra.mxu0 0.0
      %262 = vmatprep.subr.mxu0 0.0
      %263 = vmatpush1.xpose.msra.mxu0 0.0
      %264 = vmatprep.subr.mxu0 0.0
      %265 = vmatpush1.xpose.msra.mxu0 0.0
      %266 = vmatprep.subr.mxu0 0.0
      %267 = vmatpush1.xpose.msra.mxu0 0.0
      %268 = vmatprep.subr.mxu0 0.0
      %269 = vmatpush1.xpose.msra.mxu0 0.0
      %270 = vmatprep.subr.mxu0 0.0
      %271 = vmatpush1.xpose.msra.mxu0 0.0
      %272 = vmatprep.subr.mxu0 0.0
      %273 = vmatpush1.xpose.msra.mxu0 0.0
      %274 = vmatprep.mubr.f32.mxu0 0.0
      %275 = vmatmul.mubr.f32.gmra.mrb[0].mxu0 %v205
      %v276 = vpop.f32.mrb[0].mxu0
      %v277 = vadd.f32 0.0, %v276
      %v278 = vpop.f32.mrb[0].mxu0
      %279 = vdwg.mxu0
      %v280 = vmul.f32 %v277, 0.125
      %vm281 = vcmask 64512
      %v282 = vsel %vm281, %v280, -inf
      %283 = vmax.xlane.f32.xlu0 %v282
      %v284 = vpop.xlane.xlu0 %283
      %v285 = vsub.f32 %v280, %v284
      %v286 = vmul.f32 %v285, 1.442695
      %v287 = vpow.pop %v286
      %v288 = vsel %vm281, %v287, 0.0
      %289 = vadd.xlane.f32.xlu0 %v288
      %v290 = vpop.xlane.xlu0 %289
      %v291 = vrcp.pop %v290
      %v292 = vmul.f32 %v287, %v291
      %v294 = vsel %vm281, %v292, 0
      %296 = vmatprep.subr.mxu0 0.0
      %297 = vmatpush1.msra.mxu0 %v202
      %298 = vmatprep.subr.mxu0 0.0
      %299 = vmatpush1.msra.mxu0 0.0
      %300 = vmatprep.subr.mxu0 0.0
      %301 = vmatpush1.msra.mxu0 0.0
      %302 = vmatprep.subr.mxu0 0.0
      %303 = vmatpush1.msra.mxu0 0.0
      %304 = vmatprep.subr.mxu0 0.0
      %305 = vmatpush1.msra.mxu0 0.0
      %306 = vmatprep.subr.mxu0 0.0
      %307 = vmatpush1.msra.mxu0 0.0
      %308 = vmatprep.subr.mxu0 0.0
      %309 = vmatpush1.msra.mxu0 0.0
      %310 = vmatprep.subr.mxu0 0.0
      %311 = vmatpush1.msra.mxu0 0.0
      %312 = vmatprep.subr.mxu0 0.0
      %313 = vmatpush1.msra.mxu0 0.0
      %314 = vmatprep.subr.mxu0 0.0
      %315 = vmatpush1.msra.mxu0 0.0
      %316 = vmatprep.subr.mxu0 0.0
      %317 = vmatpush1.msra.mxu0 0.0
      %318 = vmatprep.subr.mxu0 0.0
      %319 = vmatpush1.msra.mxu0 0.0
      %320 = vmatprep.subr.mxu0 0.0
      %321 = vmatpush1.msra.mxu0 0.0
      %322 = vmatprep.subr.mxu0 0.0
      %323 = vmatpush1.msra.mxu0 0.0
      %324 = vmatprep.subr.mxu0 0.0
      %325 = vmatpush1.msra.mxu0 0.0
      %326 = vmatprep.subr.mxu0 0.0
      %327 = vmatpush1.msra.mxu0 0.0
      %328 = vmatprep.subr.mxu0 0.0
      %329 = vmatpush1.msra.mxu0 0.0
      %330 = vmatprep.subr.mxu0 0.0
      %331 = vmatpush1.msra.mxu0 0.0
      %332 = vmatprep.subr.mxu0 0.0
      %333 = vmatpush1.msra.mxu0 0.0
      %334 = vmatprep.subr.mxu0 0.0
      %335 = vmatpush1.msra.mxu0 0.0
      %336 = vmatprep.subr.mxu0 0.0
      %337 = vmatpush1.msra.mxu0 0.0
      %338 = vmatprep.subr.mxu0 0.0
      %339 = vmatpush1.msra.mxu0 0.0
      %340 = vmatprep.subr.mxu0 0.0
      %341 = vmatpush1.msra.mxu0 0.0
      %342 = vmatprep.subr.mxu0 0.0
      %343 = vmatpush1.msra.mxu0 0.0
      %344 = vmatprep.subr.mxu0 0.0
      %345 = vmatpush1.msra.mxu0 0.0
      %346 = vmatprep.subr.mxu0 0.0
      %347 = vmatpush1.msra.mxu0 0.0
      %348 = vmatprep.subr.mxu0 0.0
      %349 = vmatpush1.msra.mxu0 0.0
      %350 = vmatprep.subr.mxu0 0.0
      %351 = vmatpush1.msra.mxu0 0.0
      %352 = vmatprep.subr.mxu0 0.0
      %353 = vmatpush1.msra.mxu0 0.0
      %354 = vmatprep.subr.mxu0 0.0
      %355 = vmatpush1.msra.mxu0 0.0
      %356 = vmatprep.subr.mxu0 0.0
      %357 = vmatpush1.msra.mxu0 0.0
      %358 = vmatprep.subr.mxu0 0.0
      %359 = vmatpush1.msra.mxu0 0.0
      %360 = vmatprep.mubr.f32.mxu0 0.0
      %361 = vmatmul.mubr.f32.gmra.mrb[0].mxu0 %v294
      %v362 = vpop.f32.mrb[0].mxu0
      %v363 = vadd.f32 0.0, %v362
      %v364 = vpop.f32.mrb[0].mxu0
      %365 = vdwg.mxu0
      %366 = vst.msk [vmem:[%s199] sm:$0xff] %vm203, %v363
      %p367 = scmp.lt.s32.totalorder %s14, 7
      %s368 = scalar_select %p367, %s14, 7
      %s369 = smul.addr %s368, 8
      %s370 = scalar_lea.vmem %s3, %s369
      // Predicated region
      $region33: #{transformer_encoder_block.6} parent=31 // pred_check
        %p371 = pneg %p110
      $region34: #{transformer_encoder_block.6} parent=31 // pred_check_branch
        %373 = sbr.rel (%p371) target = $region36
      $region35: #{transformer_encoder_block.6} parent=31 // pred_region
        _
      $region36: #{transformer_encoder_block.6} parent=31 // pred_fallthru
        _
    $region32: #{transformer_encoder_block.6} parent=5 // pred_fallthru
      _
    %p374 = scmp.le.s32.totalorder 2, %s9
    // Predicated region
    $region37: #{transformer_encoder_block.6} parent=5 // pred_check
      %p375 = pneg %p374
    $region38: #{transformer_encoder_block.6} parent=5 // pred_check_branch
      %377 = sbr.rel (%p375) target = $region40
    $region39: #{transformer_encoder_block.6} parent=5 // pred_region
      %s378 = ssub.s32 %s9, 2
      // Predicated region
      $region41: #{transformer_encoder_block.6} parent=39 // pred_check
        %p379 = pneg %p116
      $region42: #{transformer_encoder_block.6} parent=39 // pred_check_branch
        %381 = sbr.rel (%p379) target = $region44
      $region43: #{transformer_encoder_block.6} parent=39 // pred_region
        %p382 = scmp.lt.s32.totalorder %s15, 7
        %s383 = scalar_select %p382, %s15, 7
        %s384 = smul.addr %s383, 8
        %s385 = scalar_lea.vmem %s3, %s384
      $region44: #{transformer_encoder_block.6} parent=39 // pred_fallthru
        _
    $region40: #{transformer_encoder_block.6} parent=5 // pred_fallthru
      _
  $region6: #{transformer_encoder_block.6} parent=0 // loop_footer
    %s13 = sadd.s32 1, %s9
  $region7: #{transformer_encoder_block.6} parent=0 // loop_footer_branch
    %8 = sbr.rel target = $region3
  $region8: #{transformer_encoder_block.6} parent=0 // loop_exit
    _

// kernel: transformer_encoder_block.7
$region0: #{transformer_encoder_block.7}
  #allocation0 [shape = 'u32[]', space=smem, size = 0x4, offset = 0x4, fixed_abs, tag = 'smem constant byte address 0x4 - core index']
  #allocation1 [shape = 'u32[144,128]{1,0:T(1,128)}', space=vmem, size = 0x12000, scoped, tag = 'internal scratch']
  %s0 = inlined_call_operand.vmem [shape: f32[16,256], index: 0, kind: input, shape index: {}]
  %s1 = inlined_call_operand.vmem [shape: f32[256,256], index: 1, kind: input, shape index: {}]
  %s2 = inlined_call_operand.vmem [shape: f32[1,256], index: 2, kind: input, shape index: {}]
  %s3 = inlined_call_operand.vmem [shape: f32[16,256], index: 3, kind: input, shape index: {}]
  %s4 = inlined_call_operand.vmem [shape: f32[16,256], index: 4, kind: output, shape index: {}]
  %s5 = sld [smem:[#allocation0]]
  $region49: #{transformer_encoder_block.7} parent=0
    _
  %s7 = ssub.s32 1, %s5
  %s8 = scalar_select 0, %s7, %s5
  loop: start=0, step=1, limit=4
  $region2: #{transformer_encoder_block.7} parent=0 // loop_pre_header
    _
  $region3: #{transformer_encoder_block.7} parent=0 // loop_header
    %s10 = sphi 0, %s14
    %p11 = scmp.ge.s32.totalorder %s10, 4
    %s20 = sphi 0, %s22
    %s23 = sphi 0, %s20
    %s24 = sphi 0, %s23
    %s40 = sphi 0, %s24
    %s44 = sphi 0, %s44
    %s46 = sphi 0, %s44
    %s47 = sphi 0, %s46
    %s61 = sphi 0, %s47
    %s65 = sphi 0, %s65
    %s67 = sphi 0, %s65
    %s68 = sphi 0, %s67
    %s82 = sphi 0, %s68
    %s88 = sphi 0, %s90
    %s91 = sphi 0, %s88
    %s92 = sphi 0, %s91
    %s108 = sphi 0, %s92
    %s114 = sphi 0, %s116
    %s117 = sphi 0, %s114
    %s118 = sphi 0, %s117
    %s134 = sphi 0, %s118
  $region4: #{transformer_encoder_block.7} parent=0 // loop_header_branch
    %13 = sbr.rel (%p11) target = $region8
  $region5: #{transformer_encoder_block.7} parent=0 // loop_body
    %s15 = ssub.s32 %s10, 1
    %s16 = ssub.s32 %s10, 2
    %s17 = sadd.s32 %s10, 1
    %s18 = ssub.s32 %s10, %s17
    %p19 = scmp.eq.s32.totalorder %s18, 0
    %s21 = sadd.s32 %s20, 1
    %s22 = scalar_select %p19, %s20, %s21
    %p25 = pneg %p19
    %p26 = scmp.eq.s32.totalorder %s10, 1
    %p27 = por %p25, %p26
    %p28 = scmp.ne.s32.totalorder %s20, %s23
    %p29 = scmp.eq.s32.totalorder %s10, 0
    %p30 = por %p28, %p29
    %p31 = scmp.ne.s32.totalorder %s20, %s23
    %p32 = scmp.eq.s32.totalorder %s15, 1
    %p33 = por %p31, %p32
    %p34 = scmp.ne.s32.totalorder %s23, %s24
    %p35 = scmp.eq.s32.totalorder %s15, 0
    %p36 = por %p34, %p35
    %p37 = scmp.ne.s32.totalorder %s23, %s24
    %p38 = scmp.eq.s32.totalorder %s16, 1
    %p39 = por %p37, %p38
    %p41 = scmp.ne.s32.totalorder %s24, %s40
    %p42 = scmp.eq.s32.totalorder %s16, 0
    %p43 = por %p41, %p42
    %s45 = sadd.s32 %s44, 1
    %p48 = scmp.eq.s32.totalorder %s10, 1
    %p49 = scmp.ne.s32.totalorder %s44, %s46
    %p50 = scmp.eq.s32.totalorder %s10, 0
    %p51 = por %p49, %p50
    %p52 = scmp.ne.s32.totalorder %s44, %s46
    %p53 = scmp.eq.s32.totalorder %s15, 1
    %p54 = por %p52, %p53
    %p55 = scmp.ne.s32.totalorder %s46, %s47
    %p56 = scmp.eq.s32.totalorder %s15, 0
    %p57 = por %p55, %p56
    %p58 = scmp.ne.s32.totalorder %s46, %s47
    %p59 = scmp.eq.s32.totalorder %s16, 1
    %p60 = por %p58, %p59
    %p62 = scmp.ne.s32.totalorder %s47, %s61
    %p63 = scmp.eq.s32.totalorder %s16, 0
    %p64 = por %p62, %p63
    %s66 = sadd.s32 %s65, 1
    %p69 = scmp.eq.s32.totalorder %s10, 1
    %p70 = scmp.ne.s32.totalorder %s65, %s67
    %p71 = scmp.eq.s32.totalorder %s10, 0
    %p72 = por %p70, %p71
    %p73 = scmp.ne.s32.totalorder %s65, %s67
    %p74 = scmp.eq.s32.totalorder %s15, 1
    %p75 = por %p73, %p74
    %p76 = scmp.ne.s32.totalorder %s67, %s68
    %p77 = scmp.eq.s32.totalorder %s15, 0
    %p78 = por %p76, %p77
    %p79 = scmp.ne.s32.totalorder %s67, %s68
    %p80 = scmp.eq.s32.totalorder %s16, 1
    %p81 = por %p79, %p80
    %p83 = scmp.ne.s32.totalorder %s68, %s82
    %p84 = scmp.eq.s32.totalorder %s16, 0
    %p85 = por %p83, %p84
    %s86 = ssub.s32 %s10, %s17
    %p87 = scmp.eq.s32.totalorder %s86, 0
    %s89 = sadd.s32 %s88, 1
    %s90 = scalar_select %p87, %s88, %s89
    %p93 = pneg %p87
    %p94 = scmp.eq.s32.totalorder %s10, 1
    %p95 = por %p93, %p94
    %p96 = scmp.ne.s32.totalorder %s88, %s91
    %p97 = scmp.eq.s32.totalorder %s10, 0
    %p98 = por %p96, %p97
    %p99 = scmp.ne.s32.totalorder %s88, %s91
    %p100 = scmp.eq.s32.totalorder %s15, 1
    %p101 = por %p99, %p100
    %p102 = scmp.ne.s32.totalorder %s91, %s92
    %p103 = scmp.eq.s32.totalorder %s15, 0
    %p104 = por %p102, %p103
    %p105 = scmp.ne.s32.totalorder %s91, %s92
    %p106 = scmp.eq.s32.totalorder %s16, 1
    %p107 = por %p105, %p106
    %p109 = scmp.ne.s32.totalorder %s92, %s108
    %p110 = scmp.eq.s32.totalorder %s16, 0
    %p111 = por %p109, %p110
    %s112 = ssub.s32 %s10, %s17
    %p113 = scmp.eq.s32.totalorder %s112, 0
    %s115 = sadd.s32 %s114, 1
    %s116 = scalar_select %p113, %s114, %s115
    %p119 = pneg %p113
    %p120 = scmp.eq.s32.totalorder %s10, 1
    %p121 = por %p119, %p120
    %p122 = scmp.ne.s32.totalorder %s114, %s117
    %p123 = scmp.eq.s32.totalorder %s10, 0
    %p124 = por %p122, %p123
    %p125 = scmp.ne.s32.totalorder %s114, %s117
    %p126 = scmp.eq.s32.totalorder %s15, 1
    %p127 = por %p125, %p126
    %p128 = scmp.ne.s32.totalorder %s117, %s118
    %p129 = scmp.eq.s32.totalorder %s15, 0
    %p130 = por %p128, %p129
    %p131 = scmp.ne.s32.totalorder %s117, %s118
    %p132 = scmp.eq.s32.totalorder %s16, 1
    %p133 = por %p131, %p132
    %p135 = scmp.ne.s32.totalorder %s118, %s134
    %p136 = scmp.eq.s32.totalorder %s16, 0
    %p137 = por %p135, %p136
    %p138 = scmp.le.s32.totalorder 1, %s10
    %p139 = scmp.lt.s32.totalorder %s10, 3
    %p140 = pnand %p138, %p139
    %p141 = pneg %p140
    // Predicated region
    $region9: #{transformer_encoder_block.7} parent=5 // pred_check
      _
    $region10: #{transformer_encoder_block.7} parent=5 // pred_check_branch
      %143 = sbr.rel (%p140) target = $region12
    $region11: #{transformer_encoder_block.7} parent=5 // pred_region
      %s144 = ssub.s32 %s10, 1
      // Predicated region
      $region13: #{transformer_encoder_block.7} parent=11 // pred_check
        %p145 = pneg %p57
      $region14: #{transformer_encoder_block.7} parent=11 // pred_check_branch
        %147 = sbr.rel (%p145) target = $region16
      $region15: #{transformer_encoder_block.7} parent=11 // pred_region
        _
      $region16: #{transformer_encoder_block.7} parent=11 // pred_fallthru
        _
      // Predicated region
      $region17: #{transformer_encoder_block.7} parent=11 // pred_check
        %p148 = pneg %p78
      $region18: #{transformer_encoder_block.7} parent=11 // pred_check_branch
        %150 = sbr.rel (%p148) target = $region20
      $region19: #{transformer_encoder_block.7} parent=11 // pred_region
        _
      $region20: #{transformer_encoder_block.7} parent=11 // pred_fallthru
        _
    $region12: #{transformer_encoder_block.7} parent=5 // pred_fallthru
      _
    %p151 = scmp.lt.s32.totalorder %s10, 2
    // Predicated region
    $region21: #{transformer_encoder_block.7} parent=5 // pred_check
      %p152 = pneg %p151
    $region22: #{transformer_encoder_block.7} parent=5 // pred_check_branch
      %154 = sbr.rel (%p152) target = $region24
    $region23: #{transformer_encoder_block.7} parent=5 // pred_region
      // Predicated region
      $region25: #{transformer_encoder_block.7} parent=23 // pred_check
        %p155 = pneg %p30
      $region26: #{transformer_encoder_block.7} parent=23 // pred_check_branch
        %157 = sbr.rel (%p155) target = $region28
      $region27: #{transformer_encoder_block.7} parent=23 // pred_region
        %p158 = scmp.lt.s32.totalorder %s10, 1
        %s159 = scalar_select %p158, %s10, 1
        %s160 = smul.addr %s159, 2
        %s161 = smul.addr %s160, 8
        %s162 = scalar_lea.vmem %s0, %s161
      $region28: #{transformer_encoder_block.7} parent=23 // pred_fallthru
        _
      // Predicated region
      $region29: #{transformer_encoder_block.7} parent=23 // pred_check
        %p163 = pneg %p98
      $region30: #{transformer_encoder_block.7} parent=23 // pred_check_branch
        %165 = sbr.rel (%p163) target = $region32
      $region31: #{transformer_encoder_block.7} parent=23 // pred_region
        %p166 = scmp.lt.s32.totalorder %s10, 1
        %s167 = scalar_select %p166, %s10, 1
        %s168 = smul.addr %s167, 2
        %s169 = smul.addr %s168, 8
        %s170 = scalar_lea.vmem %s3, %s169
      $region32: #{transformer_encoder_block.7} parent=23 // pred_fallthru
        _
    $region24: #{transformer_encoder_block.7} parent=5 // pred_fallthru
      _
    %p171 = scmp.le.s32.totalorder 1, %s10
    %p172 = scmp.lt.s32.totalorder %s10, 3
    %p173 = pnand %p171, %p172
    %p174 = pneg %p173
    // Predicated region
    $region33: #{transformer_encoder_block.7} parent=5 // pred_check
      _
    $region34: #{transformer_encoder_block.7} parent=5 // pred_check_branch
      %176 = sbr.rel (%p173) target = $region36
    $region35: #{transformer_encoder_block.7} parent=5 // pred_region
      %s177 = ssub.s32 %s10, 1
      %p178 = scmp.lt.s32.totalorder %s15, 1
      %s179 = scalar_select %p178, %s15, 1
      %s180 = smul.addr %s179, 2
      %s181 = smul.addr %s180, 8
      %s182 = scalar_lea.vmem %s0, %s181
      %p183 = pneg %p36
      %p184 = pneg %p33
      %p185 = pneg %p57
      %p186 = pneg %p54
      %p187 = pneg %p78
      %p188 = pneg %p75
      %p189 = scmp.lt.s32.totalorder %s15, 1
      %s190 = scalar_select %p189, %s15, 1
      %s191 = smul.addr %s190, 2
      %s192 = smul.addr %s191, 8
      %s193 = scalar_lea.vmem %s3, %s192
      %p194 = pneg %p104
      %p195 = pneg %p101
      %p196 = pneg %p130
      %p197 = pneg %p127
      %p198 = scmp.lt.s32.totalorder %s15, 1
      %s199 = scalar_select %p198, %s15, 1
      %s200 = smul.addr %s199, 2
      %s201 = smul.addr %s200, 8
      %s202 = scalar_lea.vmem %s4, %s201
      %p203 = scmp.lt.s32.totalorder %s15, 1
      %s204 = scalar_select %p203, %s15, 1
      %s205 = smul.addr %s204, 2
      %s206 = smul.addr %s205, 8
      %s207 = scalar_lea.vmem %s0, %s206
      %p208 = scmp.lt.s32.totalorder %s15, 1
      %s209 = scalar_select %p208, %s15, 1
      %s210 = smul.addr %s209, 2
      %s211 = smul.addr %s210, 8
      %s212 = scalar_lea.vmem %s3, %s211
      %p213 = scmp.lt.s32.totalorder %s15, 1
      %s214 = scalar_select %p213, %s15, 1
      %s215 = smul.addr %s214, 2
      %s216 = smul.addr %s215, 8
      %s217 = scalar_lea.vmem %s4, %s216
      %v218 = vld [vmem:[%s207] sm:$0xff]
      %v219 = vld [vmem:[%s207 + $0x8] sm:$0xff]
      %v220 = vld [vmem:[%s1] sm:$0xff]
      %v221 = vld [vmem:[%s1 + $0x8] sm:$0xff]
      %v222 = vld [vmem:[%s1 + $0x10] sm:$0xff]
      %v223 = vld [vmem:[%s1 + $0x18] sm:$0xff]
      %v224 = vld [vmem:[%s1 + $0x20] sm:$0xff]
      %v225 = vld [vmem:[%s1 + $0x28] sm:$0xff]
      %v226 = vld [vmem:[%s1 + $0x30] sm:$0xff]
      %v227 = vld [vmem:[%s1 + $0x38] sm:$0xff]
      %v228 = vld [vmem:[%s1 + $0x40] sm:$0xff]
      %v229 = vld [vmem:[%s1 + $0x48] sm:$0xff]
      %v230 = vld [vmem:[%s1 + $0x50] sm:$0xff]
      %v231 = vld [vmem:[%s1 + $0x58] sm:$0xff]
      %v232 = vld [vmem:[%s1 + $0x60] sm:$0xff]
      %v233 = vld [vmem:[%s1 + $0x68] sm:$0xff]
      %v234 = vld [vmem:[%s1 + $0x70] sm:$0xff]
      %v235 = vld [vmem:[%s1 + $0x78] sm:$0xff]
      %v236 = vld [vmem:[%s1 + $0x80] sm:$0xff]
      %v237 = vld [vmem:[%s1 + $0x88] sm:$0xff]
      %v238 = vld [vmem:[%s1 + $0x90] sm:$0xff]
      %v239 = vld [vmem:[%s1 + $0x98] sm:$0xff]
      %v240 = vld [vmem:[%s1 + $0xa0] sm:$0xff]
      %v241 = vld [vmem:[%s1 + $0xa8] sm:$0xff]
      %v242 = vld [vmem:[%s1 + $0xb0] sm:$0xff]
      %v243 = vld [vmem:[%s1 + $0xb8] sm:$0xff]
      %v244 = vld [vmem:[%s1 + $0xc0] sm:$0xff]
      %v245 = vld [vmem:[%s1 + $0xc8] sm:$0xff]
      %v246 = vld [vmem:[%s1 + $0xd0] sm:$0xff]
      %v247 = vld [vmem:[%s1 + $0xd8] sm:$0xff]
      %v248 = vld [vmem:[%s1 + $0xe0] sm:$0xff]
      %v249 = vld [vmem:[%s1 + $0xe8] sm:$0xff]
      %v250 = vld [vmem:[%s1 + $0xf0] sm:$0xff]
      %v251 = vld [vmem:[%s1 + $0xf8] sm:$0xff]
      %v252 = vld [vmem:[%s1 + $0x100] sm:$0xff]
      %v253 = vld [vmem:[%s1 + $0x108] sm:$0xff]
      %v254 = vld [vmem:[%s1 + $0x110] sm:$0xff]
      %v255 = vld [vmem:[%s1 + $0x118] sm:$0xff]
      %v256 = vld [vmem:[%s1 + $0x120] sm:$0xff]
      %v257 = vld [vmem:[%s1 + $0x128] sm:$0xff]
      %v258 = vld [vmem:[%s1 + $0x130] sm:$0xff]
      %v259 = vld [vmem:[%s1 + $0x138] sm:$0xff]
      %v260 = vld [vmem:[%s1 + $0x140] sm:$0xff]
      %v261 = vld [vmem:[%s1 + $0x148] sm:$0xff]
      %v262 = vld [vmem:[%s1 + $0x150] sm:$0xff]
      %v263 = vld [vmem:[%s1 + $0x158] sm:$0xff]
      %v264 = vld [vmem:[%s1 + $0x160] sm:$0xff]
      %v265 = vld [vmem:[%s1 + $0x168] sm:$0xff]
      %v266 = vld [vmem:[%s1 + $0x170] sm:$0xff]
      %v267 = vld [vmem:[%s1 + $0x178] sm:$0xff]
      %v268 = vld [vmem:[%s1 + $0x180] sm:$0xff]
      %v269 = vld [vmem:[%s1 + $0x188] sm:$0xff]
      %v270 = vld [vmem:[%s1 + $0x190] sm:$0xff]
      %v271 = vld [vmem:[%s1 + $0x198] sm:$0xff]
      %v272 = vld [vmem:[%s1 + $0x1a0] sm:$0xff]
      %v273 = vld [vmem:[%s1 + $0x1a8] sm:$0xff]
      %v274 = vld [vmem:[%s1 + $0x1b0] sm:$0xff]
      %v275 = vld [vmem:[%s1 + $0x1b8] sm:$0xff]
      %v276 = vld [vmem:[%s1 + $0x1c0] sm:$0xff]
      %v277 = vld [vmem:[%s1 + $0x1c8] sm:$0xff]
      %v278 = vld [vmem:[%s1 + $0x1d0] sm:$0xff]
      %v279 = vld [vmem:[%s1 + $0x1d8] sm:$0xff]
      %v280 = vld [vmem:[%s1 + $0x1e0] sm:$0xff]
      %v281 = vld [vmem:[%s1 + $0x1e8] sm:$0xff]
      %v282 = vld [vmem:[%s1 + $0x1f0] sm:$0xff]
      %v283 = vld [vmem:[%s1 + $0x1f8] sm:$0xff]
      %284 = vmatprep.subr.mxu0 %v221
      %285 = vmatpush1.xpose.msra.mxu0 %v220
      %286 = vmatprep.subr.mxu0 %v223
      %287 = vmatpush1.xpose.msra.mxu0 %v222
      %288 = vmatprep.subr.mxu0 %v225
      %289 = vmatpush1.xpose.msra.mxu0 %v224
      %290 = vmatprep.subr.mxu0 %v227
      %291 = vmatpush1.xpose.msra.mxu0 %v226
      %292 = vmatprep.subr.mxu0 %v229
      %293 = vmatpush1.xpose.msra.mxu0 %v228
      %294 = vmatprep.subr.mxu0 %v231
      %295 = vmatpush1.xpose.msra.mxu0 %v230
      %296 = vmatprep.subr.mxu0 %v233
      %297 = vmatpush1.xpose.msra.mxu0 %v232
      %298 = vmatprep.subr.mxu0 %v235
      %299 = vmatpush1.xpose.msra.mxu0 %v234
      %300 = vmatprep.subr.mxu0 %v237
      %301 = vmatpush1.xpose.msra.mxu0 %v236
      %302 = vmatprep.subr.mxu0 %v239
      %303 = vmatpush1.xpose.msra.mxu0 %v238
      %304 = vmatprep.subr.mxu0 %v241
      %305 = vmatpush1.xpose.msra.mxu0 %v240
      %306 = vmatprep.subr.mxu0 %v243
      %307 = vmatpush1.xpose.msra.mxu0 %v242
      %308 = vmatprep.subr.mxu0 %v245
      %309 = vmatpush1.xpose.msra.mxu0 %v244
      %310 = vmatprep.subr.mxu0 %v247
      %311 = vmatpush1.xpose.msra.mxu0 %v246
      %312 = vmatprep.subr.mxu0 %v249
      %313 = vmatpush1.xpose.msra.mxu0 %v248
      %314 = vmatprep.subr.mxu0 %v251
      %315 = vmatpush1.xpose.msra.mxu0 %v250
      %316 = vmatprep.subr.mxu0 %v253
      %317 = vmatpush1.xpose.msra.mxu0 %v252
      %318 = vmatprep.subr.mxu0 %v255
      %319 = vmatpush1.xpose.msra.mxu0 %v254
      %320 = vmatprep.subr.mxu0 %v257
      %321 = vmatpush1.xpose.msra.mxu0 %v256
      %322 = vmatprep.subr.mxu0 %v259
      %323 = vmatpush1.xpose.msra.mxu0 %v258
      %324 = vmatprep.subr.mxu0 %v261
      %325 = vmatpush1.xpose.msra.mxu0 %v260
      %326 = vmatprep.subr.mxu0 %v263
      %327 = vmatpush1.xpose.msra.mxu0 %v262
      %328 = vmatprep.subr.mxu0 %v265
      %329 = vmatpush1.xpose.msra.mxu0 %v264
      %330 = vmatprep.subr.mxu0 %v267
      %331 = vmatpush1.xpose.msra.mxu0 %v266
      %332 = vmatprep.subr.mxu0 %v269
      %333 = vmatpush1.xpose.msra.mxu0 %v268
      %334 = vmatprep.subr.mxu0 %v271
      %335 = vmatpush1.xpose.msra.mxu0 %v270
      %336 = vmatprep.subr.mxu0 %v273
      %337 = vmatpush1.xpose.msra.mxu0 %v272
      %338 = vmatprep.subr.mxu0 %v275
      %339 = vmatpush1.xpose.msra.mxu0 %v274
      %340 = vmatprep.subr.mxu0 %v277
      %341 = vmatpush1.xpose.msra.mxu0 %v276
      %342 = vmatprep.subr.mxu0 %v279
      %343 = vmatpush1.xpose.msra.mxu0 %v278
      %344 = vmatprep.subr.mxu0 %v281
      %345 = vmatpush1.xpose.msra.mxu0 %v280
      %346 = vmatprep.subr.mxu0 %v283
      %347 = vmatpush1.xpose.msra.mxu0 %v282
      %348 = vmatprep.mubr.f32.mxu0 %v219
      %349 = vmatmul.mubr.f32.gmra.mrb[0].mxu0 %v218
      %v350 = vpop.f32.mrb[0].mxu0
      %v351 = vadd.f32 0.0, %v350
      %v352 = vpop.f32.mrb[0].mxu0
      %v353 = vadd.f32 0.0, %v352
      %354 = vdwg.mxu0
      %v355 = vld [vmem:[%s212] sm:$0xff]
      %v356 = vld [vmem:[%s212 + $0x8] sm:$0xff]
      %v357 = vadd.f32 %v355, %v351
      %v358 = vadd.f32 %v356, %v353
      %v359 = vld [vmem:[%s2] sm:$0x3]
      %v361 = vlaneseq
      %v362 = vshrl.u32 %v361, 7
      %v363 = vsub.s32 0, %v362
      %v364 = vrot.slane %v359, %v363
      %v365 = vlaneseq
      %v366 = vshrl.u32 %v365, 7
      %v367 = vsub.s32 1, %v366
      %v368 = vrot.slane %v359, %v367
      %v371 = vadd.f32 %v357, %v364
      %v372 = vadd.f32 %v358, %v368
      %373 = vst [vmem:[%s217] sm:$0xff] %v371
      %374 = vst [vmem:[%s217 + $0x8] sm:$0xff] %v372
      %p375 = scmp.lt.s32.totalorder %s15, 1
      %s376 = scalar_select %p375, %s15, 1
      %s377 = smul.addr %s376, 2
      %s378 = smul.addr %s377, 8
      %s379 = scalar_lea.vmem %s4, %s378
      // Predicated region
      $region37: #{transformer_encoder_block.7} parent=35 // pred_check
        %p380 = pneg %p127
      $region38: #{transformer_encoder_block.7} parent=35 // pred_check_branch
        %382 = sbr.rel (%p380) target = $region40
      $region39: #{transformer_encoder_block.7} parent=35 // pred_region
        _
      $region40: #{transformer_encoder_block.7} parent=35 // pred_fallthru
        _
    $region36: #{transformer_encoder_block.7} parent=5 // pred_fallthru
      _
    %p383 = scmp.le.s32.totalorder 2, %s10
    // Predicated region
    $region41: #{transformer_encoder_block.7} parent=5 // pred_check
      %p384 = pneg %p383
    $region42: #{transformer_encoder_block.7} parent=5 // pred_check_branch
      %386 = sbr.rel (%p384) target = $region44
    $region43: #{transformer_encoder_block.7} parent=5 // pred_region
      %s387 = ssub.s32 %s10, 2
      // Predicated region
      $region45: #{transformer_encoder_block.7} parent=43 // pred_check
        %p388 = pneg %p133
      $region46: #{transformer_encoder_block.7} parent=43 // pred_check_branch
        %390 = sbr.rel (%p388) target = $region48
      $region47: #{transformer_encoder_block.7} parent=43 // pred_region
        %p391 = scmp.lt.s32.totalorder %s16, 1
        %s392 = scalar_select %p391, %s16, 1
        %s393 = smul.addr %s392, 2
        %s394 = smul.addr %s393, 8
        %s395 = scalar_lea.vmem %s4, %s394
      $region48: #{transformer_encoder_block.7} parent=43 // pred_fallthru
        _
    $region44: #{transformer_encoder_block.7} parent=5 // pred_fallthru
      _
  $region6: #{transformer_encoder_block.7} parent=0 // loop_footer
    %s14 = sadd.s32 1, %s10
  $region7: #{transformer_encoder_block.7} parent=0 // loop_footer_branch
    %9 = sbr.rel target = $region3
  $region8: #{transformer_encoder_block.7} parent=0 // loop_exit
    _

// kernel: transformer_encoder_block.5
$region0: #{transformer_encoder_block.5}
  #allocation0 [shape = 'u32[]', space=smem, size = 0x4, offset = 0x4, fixed_abs, tag = 'smem constant byte address 0x4 - core index']
  #allocation1 [shape = 'u32[144,128]{1,0:T(1,128)}', space=vmem, size = 0x12000, scoped, tag = 'internal scratch']
  %s0 = inlined_call_operand.vmem [shape: f32[16,256], index: 0, kind: input, shape index: {}]
  %s1 = inlined_call_operand.vmem [shape: f32[1,256], index: 1, kind: input, shape index: {}]
  %s2 = inlined_call_operand.vmem [shape: f32[1,256], index: 2, kind: input, shape index: {}]
  %s3 = inlined_call_operand.hbm [shape: f32[768,256], index: 3, kind: input, shape index: {}]
  %s4 = inlined_call_operand.vmem [shape: f32[1,768], index: 4, kind: input, shape index: {}]
  %s5 = inlined_call_operand.vmem [shape: f32[16,768], index: 5, kind: output, shape index: {}]
  %s6 = sld [smem:[#allocation0]]
  $region57: #{transformer_encoder_block.5} parent=0
    _
  %s8 = ssub.s32 1, %s6
  %s9 = scalar_select 0, %s8, %s6
  $region1: #{transformer_encoder_block.5} parent=0
    #allocation2 [shape = 'u8[786432]{0}', space=vmem, size = 0xc0000, scoped, tag = 'input window, operand 3, single buffered']
    #allocation3 [shape = 's32[2]{0}', space=sflag, size = 0x8, scoped, tag = 'scoped memory for transformer_encoder_block.5']
    %10 = vsyncpa [#allocation3], 0
    loop: start=0, step=1, limit=4
    $region2: #{transformer_encoder_block.5} parent=1 // loop_pre_header
      _
    $region3: #{transformer_encoder_block.5} parent=1 // loop_header
      %s12 = sphi 0, %s16
      %p13 = scmp.ge.s32.totalorder %s12, 4
      %s22 = sphi 0, %s24
      %s25 = sphi 0, %s22
      %s26 = sphi 0, %s25
      %s42 = sphi 0, %s26
      %s46 = sphi 0, %s46
      %s48 = sphi 0, %s46
      %s49 = sphi 0, %s48
      %s63 = sphi 0, %s49
      %s67 = sphi 0, %s67
      %s69 = sphi 0, %s67
      %s70 = sphi 0, %s69
      %s84 = sphi 0, %s70
      %s88 = sphi 0, %s88
      %s90 = sphi 0, %s88
      %s91 = sphi 0, %s90
      %s105 = sphi 0, %s91
      %s109 = sphi 0, %s109
      %s111 = sphi 0, %s109
      %s112 = sphi 0, %s111
      %s126 = sphi 0, %s112
      %s132 = sphi 0, %s134
      %s135 = sphi 0, %s132
      %s136 = sphi 0, %s135
      %s152 = sphi 0, %s136
    $region4: #{transformer_encoder_block.5} parent=1 // loop_header_branch
      %15 = sbr.rel (%p13) target = $region8
    $region5: #{transformer_encoder_block.5} parent=1 // loop_body
      %s17 = ssub.s32 %s12, 1
      %s18 = ssub.s32 %s12, 2
      %s19 = sadd.s32 %s12, 1
      %s20 = ssub.s32 %s12, %s19
      %p21 = scmp.eq.s32.totalorder %s20, 0
      %s23 = sadd.s32 %s22, 1
      %s24 = scalar_select %p21, %s22, %s23
      %p27 = pneg %p21
      %p28 = scmp.eq.s32.totalorder %s12, 1
      %p29 = por %p27, %p28
      %p30 = scmp.ne.s32.totalorder %s22, %s25
      %p31 = scmp.eq.s32.totalorder %s12, 0
      %p32 = por %p30, %p31
      %p33 = scmp.ne.s32.totalorder %s22, %s25
      %p34 = scmp.eq.s32.totalorder %s17, 1
      %p35 = por %p33, %p34
      %p36 = scmp.ne.s32.totalorder %s25, %s26
      %p37 = scmp.eq.s32.totalorder %s17, 0
      %p38 = por %p36, %p37
      %p39 = scmp.ne.s32.totalorder %s25, %s26
      %p40 = scmp.eq.s32.totalorder %s18, 1
      %p41 = por %p39, %p40
      %p43 = scmp.ne.s32.totalorder %s26, %s42
      %p44 = scmp.eq.s32.totalorder %s18, 0
      %p45 = por %p43, %p44
      %s47 = sadd.s32 %s46, 1
      %p50 = scmp.eq.s32.totalorder %s12, 1
      %p51 = scmp.ne.s32.totalorder %s46, %s48
      %p52 = scmp.eq.s32.totalorder %s12, 0
      %p53 = por %p51, %p52
      %p54 = scmp.ne.s32.totalorder %s46, %s48
      %p55 = scmp.eq.s32.totalorder %s17, 1
      %p56 = por %p54, %p55
      %p57 = scmp.ne.s32.totalorder %s48, %s49
      %p58 = scmp.eq.s32.totalorder %s17, 0
      %p59 = por %p57, %p58
      %p60 = scmp.ne.s32.totalorder %s48, %s49
      %p61 = scmp.eq.s32.totalorder %s18, 1
      %p62 = por %p60, %p61
      %p64 = scmp.ne.s32.totalorder %s49, %s63
      %p65 = scmp.eq.s32.totalorder %s18, 0
      %p66 = por %p64, %p65
      %s68 = sadd.s32 %s67, 1
      %p71 = scmp.eq.s32.totalorder %s12, 1
      %p72 = scmp.ne.s32.totalorder %s67, %s69
      %p73 = scmp.eq.s32.totalorder %s12, 0
      %p74 = por %p72, %p73
      %p75 = scmp.ne.s32.totalorder %s67, %s69
      %p76 = scmp.eq.s32.totalorder %s17, 1
      %p77 = por %p75, %p76
      %p78 = scmp.ne.s32.totalorder %s69, %s70
      %p79 = scmp.eq.s32.totalorder %s17, 0
      %p80 = por %p78, %p79
      %p81 = scmp.ne.s32.totalorder %s69, %s70
      %p82 = scmp.eq.s32.totalorder %s18, 1
      %p83 = por %p81, %p82
      %p85 = scmp.ne.s32.totalorder %s70, %s84
      %p86 = scmp.eq.s32.totalorder %s18, 0
      %p87 = por %p85, %p86
      %s89 = sadd.s32 %s88, 1
      %p92 = scmp.eq.s32.totalorder %s12, 1
      %p93 = scmp.ne.s32.totalorder %s88, %s90
      %p94 = scmp.eq.s32.totalorder %s12, 0
      %p95 = por %p93, %p94
      %p96 = scmp.ne.s32.totalorder %s88, %s90
      %p97 = scmp.eq.s32.totalorder %s17, 1
      %p98 = por %p96, %p97
      %p99 = scmp.ne.s32.totalorder %s90, %s91
      %p100 = scmp.eq.s32.totalorder %s17, 0
      %p101 = por %p99, %p100
      %p102 = scmp.ne.s32.totalorder %s90, %s91
      %p103 = scmp.eq.s32.totalorder %s18, 1
      %p104 = por %p102, %p103
      %p106 = scmp.ne.s32.totalorder %s91, %s105
      %p107 = scmp.eq.s32.totalorder %s18, 0
      %p108 = por %p106, %p107
      %s110 = sadd.s32 %s109, 1
      %p113 = scmp.eq.s32.totalorder %s12, 1
      %p114 = scmp.ne.s32.totalorder %s109, %s111
      %p115 = scmp.eq.s32.totalorder %s12, 0
      %p116 = por %p114, %p115
      %p117 = scmp.ne.s32.totalorder %s109, %s111
      %p118 = scmp.eq.s32.totalorder %s17, 1
      %p119 = por %p117, %p118
      %p120 = scmp.ne.s32.totalorder %s111, %s112
      %p121 = scmp.eq.s32.totalorder %s17, 0
      %p122 = por %p120, %p121
      %p123 = scmp.ne.s32.totalorder %s111, %s112
      %p124 = scmp.eq.s32.totalorder %s18, 1
      %p125 = por %p123, %p124
      %p127 = scmp.ne.s32.totalorder %s112, %s126
      %p128 = scmp.eq.s32.totalorder %s18, 0
      %p129 = por %p127, %p128
      %s130 = ssub.s32 %s12, %s19
      %p131 = scmp.eq.s32.totalorder %s130, 0
      %s133 = sadd.s32 %s132, 1
      %s134 = scalar_select %p131, %s132, %s133
      %p137 = pneg %p131
      %p138 = scmp.eq.s32.totalorder %s12, 1
      %p139 = por %p137, %p138
      %p140 = scmp.ne.s32.totalorder %s132, %s135
      %p141 = scmp.eq.s32.totalorder %s12, 0
      %p142 = por %p140, %p141
      %p143 = scmp.ne.s32.totalorder %s132, %s135
      %p144 = scmp.eq.s32.totalorder %s17, 1
      %p145 = por %p143, %p144
      %p146 = scmp.ne.s32.totalorder %s135, %s136
      %p147 = scmp.eq.s32.totalorder %s17, 0
      %p148 = por %p146, %p147
      %p149 = scmp.ne.s32.totalorder %s135, %s136
      %p150 = scmp.eq.s32.totalorder %s18, 1
      %p151 = por %p149, %p150
      %p153 = scmp.ne.s32.totalorder %s136, %s152
      %p154 = scmp.eq.s32.totalorder %s18, 0
      %p155 = por %p153, %p154
      %p156 = scmp.le.s32.totalorder 1, %s12
      %p157 = scmp.lt.s32.totalorder %s12, 3
      %p158 = pnand %p156, %p157
      %p159 = pneg %p158
      // Predicated region
      $region9: #{transformer_encoder_block.5} parent=5 // pred_check
        _
      $region10: #{transformer_encoder_block.5} parent=5 // pred_check_branch
        %161 = sbr.rel (%p158) target = $region12
      $region11: #{transformer_encoder_block.5} parent=5 // pred_region
        %s162 = ssub.s32 %s12, 1
        // Predicated region
        $region13: #{transformer_encoder_block.5} parent=11 // pred_check
          %p163 = pneg %p59
        $region14: #{transformer_encoder_block.5} parent=11 // pred_check_branch
          %165 = sbr.rel (%p163) target = $region16
        $region15: #{transformer_encoder_block.5} parent=11 // pred_region
          _
        $region16: #{transformer_encoder_block.5} parent=11 // pred_fallthru
          _
        // Predicated region
        $region17: #{transformer_encoder_block.5} parent=11 // pred_check
          %p166 = pneg %p80
        $region18: #{transformer_encoder_block.5} parent=11 // pred_check_branch
          %168 = sbr.rel (%p166) target = $region20
        $region19: #{transformer_encoder_block.5} parent=11 // pred_region
          _
        $region20: #{transformer_encoder_block.5} parent=11 // pred_fallthru
          _
        // Predicated region
        $region21: #{transformer_encoder_block.5} parent=11 // pred_check
          %p169 = pneg %p101
        $region22: #{transformer_encoder_block.5} parent=11 // pred_check_branch
          %171 = sbr.rel (%p169) target = $region24
        $region23: #{transformer_encoder_block.5} parent=11 // pred_region
          %s173 = ssub.s32 24576, 24576
          %174 = vsyncadd [#allocation3], %s173
          %s175 = sshll.u32 [#allocation2], 4
          %s176 = int_to_ptr.vmem [resolvable:$true] %s175
          %181 = dma.hbm_to_vmem [thread:$0]  %s3, 24576, %s176, [#allocation3], 256, 256, 16
        $region24: #{transformer_encoder_block.5} parent=11 // pred_fallthru
          _
        // Predicated region
        $region25: #{transformer_encoder_block.5} parent=11 // pred_check
          %p182 = pneg %p122
        $region26: #{transformer_encoder_block.5} parent=11 // pred_check_branch
          %184 = sbr.rel (%p182) target = $region28
        $region27: #{transformer_encoder_block.5} parent=11 // pred_region
          _
        $region28: #{transformer_encoder_block.5} parent=11 // pred_fallthru
          _
      $region12: #{transformer_encoder_block.5} parent=5 // pred_fallthru
        _
      %p185 = scmp.lt.s32.totalorder %s12, 2
      // Predicated region
      $region29: #{transformer_encoder_block.5} parent=5 // pred_check
        %p186 = pneg %p185
      $region30: #{transformer_encoder_block.5} parent=5 // pred_check_branch
        %188 = sbr.rel (%p186) target = $region32
      $region31: #{transformer_encoder_block.5} parent=5 // pred_region
        // Predicated region
        $region33: #{transformer_encoder_block.5} parent=31 // pred_check
          %p189 = pneg %p32
        $region34: #{transformer_encoder_block.5} parent=31 // pred_check_branch
          %191 = sbr.rel (%p189) target = $region36
        $region35: #{transformer_encoder_block.5} parent=31 // pred_region
          %p192 = scmp.lt.s32.totalorder %s12, 1
          %s193 = scalar_select %p192, %s12, 1
          %s194 = smul.addr %s193, 2
          %s195 = smul.addr %s194, 8
          %s196 = scalar_lea.vmem %s0, %s195
        $region36: #{transformer_encoder_block.5} parent=31 // pred_fallthru
          _
      $region32: #{transformer_encoder_block.5} parent=5 // pred_fallthru
        _
      %p197 = scmp.le.s32.totalorder 1, %s12
      %p198 = scmp.lt.s32.totalorder %s12, 3
      %p199 = pnand %p197, %p198
      %p200 = pneg %p199
      // Predicated region
      $region37: #{transformer_encoder_block.5} parent=5 // pred_check
        _
      $region38: #{transformer_encoder_block.5} parent=5 // pred_check_branch
        %202 = sbr.rel (%p199) target = $region40
      $region39: #{transformer_encoder_block.5} parent=5 // pred_region
        %s203 = ssub.s32 %s12, 1
        // Predicated region
        $region41: #{transformer_encoder_block.5} parent=39 // pred_check
          %p204 = pneg %p101
        $region42: #{transformer_encoder_block.5} parent=39 // pred_check_branch
          %206 = sbr.rel (%p204) target = $region44
        $region43: #{transformer_encoder_block.5} parent=39 // pred_region
          %207 = dma.done [#allocation3], 24576
        $region44: #{transformer_encoder_block.5} parent=39 // pred_fallthru
          _
        %p208 = scmp.lt.s32.totalorder %s17, 1
        %s209 = scalar_select %p208, %s17, 1
        %s210 = smul.addr %s209, 2
        %s211 = smul.addr %s210, 8
        %s212 = scalar_lea.vmem %s0, %s211
        %p213 = pneg %p38
        %p214 = pneg %p35
        %p215 = pneg %p59
        %p216 = pneg %p56
        %p217 = pneg %p80
        %p218 = pneg %p77
        %p219 = pneg %p101
        %p220 = pneg %p98
        %p221 = pneg %p122
        %p222 = pneg %p119
        %p223 = pneg %p148
        %p224 = pneg %p145
        %p225 = scmp.lt.s32.totalorder %s17, 1
        %s226 = scalar_select %p225, %s17, 1
        %s227 = smul.addr %s226, 6
        %s228 = smul.addr %s227, 8
        %s229 = scalar_lea.vmem %s5, %s228
        %p230 = scmp.lt.s32.totalorder %s17, 1
        %s231 = scalar_select %p230, %s17, 1
        %s232 = smul.addr %s231, 2
        %s233 = smul.addr %s232, 8
        %s234 = scalar_lea.vmem %s0, %s233
        %p235 = scmp.lt.s32.totalorder %s17, 1
        %s236 = scalar_select %p235, %s17, 1
        %s237 = smul.addr %s236, 6
        %s238 = smul.addr %s237, 8
        %s239 = scalar_lea.vmem %s5, %s238
        %v240 = vld [vmem:[%s234] sm:$0xff]
        %v241 = vld [vmem:[%s234 + $0x8] sm:$0xff]
        %v242 = vadd.f32 %v240, %v241
        %243 = vadd.xlane.f32.xlu0 %v242
        %v244 = vpop.xlane.xlu0 %243
        %v245 = vrcp.pop 256.0
        %v246 = vmul.f32 %v244, %v245
        %v247 = vsub.f32 %v240, %v246
        %v248 = vsub.f32 %v241, %v246
        %v249 = vmul.f32 %v247, %v247
        %v250 = vmul.f32 %v248, %v248
        %v251 = vadd.f32 %v249, %v250
        %252 = vadd.xlane.f32.xlu0 %v251
        %v253 = vpop.xlane.xlu0 %252
        %v254 = vmul.f32 %v253, %v245
        %v255 = vadd.f32 %v254, 1e-05
        %v256 = vrsqrt.pop %v255
        %v257 = vmul.f32 %v247, %v256
        %v258 = vmul.f32 %v248, %v256
        %v259 = vld [vmem:[%s1] sm:$0x3]
        %v261 = vlaneseq
        %v262 = vshrl.u32 %v261, 7
        %v263 = vsub.s32 0, %v262
        %v264 = vrot.slane %v259, %v263
        %v265 = vlaneseq
        %v266 = vshrl.u32 %v265, 7
        %v267 = vsub.s32 1, %v266
        %v268 = vrot.slane %v259, %v267
        %v271 = vmul.f32 %v257, %v264
        %v272 = vmul.f32 %v258, %v268
        %v273 = vld [vmem:[%s2] sm:$0x3]
        %v275 = vlaneseq
        %v276 = vshrl.u32 %v275, 7
        %v277 = vsub.s32 0, %v276
        %v278 = vrot.slane %v273, %v277
        %v279 = vlaneseq
        %v280 = vshrl.u32 %v279, 7
        %v281 = vsub.s32 1, %v280
        %v282 = vrot.slane %v273, %v281
        %v285 = vadd.f32 %v271, %v278
        %v286 = vadd.f32 %v272, %v282
        %v287 = vld [vmem:[#allocation2] sm:$0xff]
        %v288 = vld [vmem:[#allocation2 + $0x8] sm:$0xff]
        %v289 = vld [vmem:[#allocation2 + $0x10] sm:$0xff]
        %v290 = vld [vmem:[#allocation2 + $0x18] sm:$0xff]
        %v291 = vld [vmem:[#allocation2 + $0x20] sm:$0xff]
        %v292 = vld [vmem:[#allocation2 + $0x28] sm:$0xff]
        %v293 = vld [vmem:[#allocation2 + $0x30] sm:$0xff]
        %v294 = vld [vmem:[#allocation2 + $0x38] sm:$0xff]
        %v295 = vld [vmem:[#allocation2 + $0x40] sm:$0xff]
        %v296 = vld [vmem:[#allocation2 + $0x48] sm:$0xff]
        %v297 = vld [vmem:[#allocation2 + $0x50] sm:$0xff]
        %v298 = vld [vmem:[#allocation2 + $0x58] sm:$0xff]
        %v299 = vld [vmem:[#allocation2 + $0x60] sm:$0xff]
        %v300 = vld [vmem:[#allocation2 + $0x68] sm:$0xff]
        %v301 = vld [vmem:[#allocation2 + $0x70] sm:$0xff]
        %v302 = vld [vmem:[#allocation2 + $0x78] sm:$0xff]
        %v303 = vld [vmem:[#allocation2 + $0x80] sm:$0xff]
        %v304 = vld [vmem:[#allocation2 + $0x88] sm:$0xff]
        %v305 = vld [vmem:[#allocation2 + $0x90] sm:$0xff]
        %v306 = vld [vmem:[#allocation2 + $0x98] sm:$0xff]
        %v307 = vld [vmem:[#allocation2 + $0xa0] sm:$0xff]
        %v308 = vld [vmem:[#allocation2 + $0xa8] sm:$0xff]
        %v309 = vld [vmem:[#allocation2 + $0xb0] sm:$0xff]
        %v310 = vld [vmem:[#allocation2 + $0xb8] sm:$0xff]
        %v311 = vld [vmem:[#allocation2 + $0xc0] sm:$0xff]
        %v312 = vld [vmem:[#allocation2 + $0xc8] sm:$0xff]
        %v313 = vld [vmem:[#allocation2 + $0xd0] sm:$0xff]
        %v314 = vld [vmem:[#allocation2 + $0xd8] sm:$0xff]
        %v315 = vld [vmem:[#allocation2 + $0xe0] sm:$0xff]
        %v316 = vld [vmem:[#allocation2 + $0xe8] sm:$0xff]
        %v317 = vld [vmem:[#allocation2 + $0xf0] sm:$0xff]
        %v318 = vld [vmem:[#allocation2 + $0xf8] sm:$0xff]
        %v319 = vld [vmem:[#allocation2 + $0x100] sm:$0xff]
        %v320 = vld [vmem:[#allocation2 + $0x108] sm:$0xff]
        %v321 = vld [vmem:[#allocation2 + $0x110] sm:$0xff]
        %v322 = vld [vmem:[#allocation2 + $0x118] sm:$0xff]
        %v323 = vld [vmem:[#allocation2 + $0x120] sm:$0xff]
        %v324 = vld [vmem:[#allocation2 + $0x128] sm:$0xff]
        %v325 = vld [vmem:[#allocation2 + $0x130] sm:$0xff]
        %v326 = vld [vmem:[#allocation2 + $0x138] sm:$0xff]
        %v327 = vld [vmem:[#allocation2 + $0x140] sm:$0xff]
        %v328 = vld [vmem:[#allocation2 + $0x148] sm:$0xff]
        %v329 = vld [vmem:[#allocation2 + $0x150] sm:$0xff]
        %v330 = vld [vmem:[#allocation2 + $0x158] sm:$0xff]
        %v331 = vld [vmem:[#allocation2 + $0x160] sm:$0xff]
        %v332 = vld [vmem:[#allocation2 + $0x168] sm:$0xff]
        %v333 = vld [vmem:[#allocation2 + $0x170] sm:$0xff]
        %v334 = vld [vmem:[#allocation2 + $0x178] sm:$0xff]
        %v335 = vld [vmem:[#allocation2 + $0x180] sm:$0xff]
        %v336 = vld [vmem:[#allocation2 + $0x188] sm:$0xff]
        %v337 = vld [vmem:[#allocation2 + $0x190] sm:$0xff]
        %v338 = vld [vmem:[#allocation2 + $0x198] sm:$0xff]
        %v339 = vld [vmem:[#allocation2 + $0x1a0] sm:$0xff]
        %v340 = vld [vmem:[#allocation2 + $0x1a8] sm:$0xff]
        %v341 = vld [vmem:[#allocation2 + $0x1b0] sm:$0xff]
        %v342 = vld [vmem:[#allocation2 + $0x1b8] sm:$0xff]
        %v343 = vld [vmem:[#allocation2 + $0x1c0] sm:$0xff]
        %v344 = vld [vmem:[#allocation2 + $0x1c8] sm:$0xff]
        %v345 = vld [vmem:[#allocation2 + $0x1d0] sm:$0xff]
        %v346 = vld [vmem:[#allocation2 + $0x1d8] sm:$0xff]
        %v347 = vld [vmem:[#allocation2 + $0x1e0] sm:$0xff]
        %v348 = vld [vmem:[#allocation2 + $0x1e8] sm:$0xff]
        %v349 = vld [vmem:[#allocation2 + $0x1f0] sm:$0xff]
        %v350 = vld [vmem:[#allocation2 + $0x1f8] sm:$0xff]
        %v351 = vld [vmem:[#allocation2 + $0x200] sm:$0xff]
        %v352 = vld [vmem:[#allocation2 + $0x208] sm:$0xff]
        %v353 = vld [vmem:[#allocation2 + $0x210] sm:$0xff]
        %v354 = vld [vmem:[#allocation2 + $0x218] sm:$0xff]
        %v355 = vld [vmem:[#allocation2 + $0x220] sm:$0xff]
        %v356 = vld [vmem:[#allocation2 + $0x228] sm:$0xff]
        %v357 = vld [vmem:[#allocation2 + $0x230] sm:$0xff]
        %v358 = vld [vmem:[#allocation2 + $0x238] sm:$0xff]
        %v359 = vld [vmem:[#allocation2 + $0x240] sm:$0xff]
        %v360 = vld [vmem:[#allocation2 + $0x248] sm:$0xff]
        %v361 = vld [vmem:[#allocation2 + $0x250] sm:$0xff]
        %v362 = vld [vmem:[#allocation2 + $0x258] sm:$0xff]
        %v363 = vld [vmem:[#allocation2 + $0x260] sm:$0xff]
        %v364 = vld [vmem:[#allocation2 + $0x268] sm:$0xff]
        %v365 = vld [vmem:[#allocation2 + $0x270] sm:$0xff]
        %v366 = vld [vmem:[#allocation2 + $0x278] sm:$0xff]
        %v367 = vld [vmem:[#allocation2 + $0x280] sm:$0xff]
        %v368 = vld [vmem:[#allocation2 + $0x288] sm:$0xff]
        %v369 = vld [vmem:[#allocation2 + $0x290] sm:$0xff]
        %v370 = vld [vmem:[#allocation2 + $0x298] sm:$0xff]
        %v371 = vld [vmem:[#allocation2 + $0x2a0] sm:$0xff]
        %v372 = vld [vmem:[#allocation2 + $0x2a8] sm:$0xff]
        %v373 = vld [vmem:[#allocation2 + $0x2b0] sm:$0xff]
        %v374 = vld [vmem:[#allocation2 + $0x2b8] sm:$0xff]
        %v375 = vld [vmem:[#allocation2 + $0x2c0] sm:$0xff]
        %v376 = vld [vmem:[#allocation2 + $0x2c8] sm:$0xff]
        %v377 = vld [vmem:[#allocation2 + $0x2d0] sm:$0xff]
        %v378 = vld [vmem:[#allocation2 + $0x2d8] sm:$0xff]
        %v379 = vld [vmem:[#allocation2 + $0x2e0] sm:$0xff]
        %v380 = vld [vmem:[#allocation2 + $0x2e8] sm:$0xff]
        %v381 = vld [vmem:[#allocation2 + $0x2f0] sm:$0xff]
        %v382 = vld [vmem:[#allocation2 + $0x2f8] sm:$0xff]
        %v383 = vld [vmem:[#allocation2 + $0x300] sm:$0xff]
        %v384 = vld [vmem:[#allocation2 + $0x308] sm:$0xff]
        %v385 = vld [vmem:[#allocation2 + $0x310] sm:$0xff]
        %v386 = vld [vmem:[#allocation2 + $0x318] sm:$0xff]
        %v387 = vld [vmem:[#allocation2 + $0x320] sm:$0xff]
        %v388 = vld [vmem:[#allocation2 + $0x328] sm:$0xff]
        %v389 = vld [vmem:[#allocation2 + $0x330] sm:$0xff]
        %v390 = vld [vmem:[#allocation2 + $0x338] sm:$0xff]
        %v391 = vld [vmem:[#allocation2 + $0x340] sm:$0xff]
        %v392 = vld [vmem:[#allocation2 + $0x348] sm:$0xff]
        %v393 = vld [vmem:[#allocation2 + $0x350] sm:$0xff]
        %v394 = vld [vmem:[#allocation2 + $0x358] sm:$0xff]
        %v395 = vld [vmem:[#allocation2 + $0x360] sm:$0xff]
        %v396 = vld [vmem:[#allocation2 + $0x368] sm:$0xff]
        %v397 = vld [vmem:[#allocation2 + $0x370] sm:$0xff]
        %v398 = vld [vmem:[#allocation2 + $0x378] sm:$0xff]
        %v399 = vld [vmem:[#allocation2 + $0x380] sm:$0xff]
        %v400 = vld [vmem:[#allocation2 + $0x388] sm:$0xff]
        %v401 = vld [vmem:[#allocation2 + $0x390] sm:$0xff]
        %v402 = vld [vmem:[#allocation2 + $0x398] sm:$0xff]
        %v403 = vld [vmem:[#allocation2 + $0x3a0] sm:$0xff]
        %v404 = vld [vmem:[#allocation2 + $0x3a8] sm:$0xff]
        %v405 = vld [vmem:[#allocation2 + $0x3b0] sm:$0xff]
        %v406 = vld [vmem:[#allocation2 + $0x3b8] sm:$0xff]
        %v407 = vld [vmem:[#allocation2 + $0x3c0] sm:$0xff]
        %v408 = vld [vmem:[#allocation2 + $0x3c8] sm:$0xff]
        %v409 = vld [vmem:[#allocation2 + $0x3d0] sm:$0xff]
        %v410 = vld [vmem:[#allocation2 + $0x3d8] sm:$0xff]
        %v411 = vld [vmem:[#allocation2 + $0x3e0] sm:$0xff]
        %v412 = vld [vmem:[#allocation2 + $0x3e8] sm:$0xff]
        %v413 = vld [vmem:[#allocation2 + $0x3f0] sm:$0xff]
        %v414 = vld [vmem:[#allocation2 + $0x3f8] sm:$0xff]
        %v415 = vld [vmem:[#allocation2 + $0x400] sm:$0xff]
        %v416 = vld [vmem:[#allocation2 + $0x408] sm:$0xff]
        %v417 = vld [vmem:[#allocation2 + $0x410] sm:$0xff]
        %v418 = vld [vmem:[#allocation2 + $0x418] sm:$0xff]
        %v419 = vld [vmem:[#allocation2 + $0x420] sm:$0xff]
        %v420 = vld [vmem:[#allocation2 + $0x428] sm:$0xff]
        %v421 = vld [vmem:[#allocation2 + $0x430] sm:$0xff]
        %v422 = vld [vmem:[#allocation2 + $0x438] sm:$0xff]
        %v423 = vld [vmem:[#allocation2 + $0x440] sm:$0xff]
        %v424 = vld [vmem:[#allocation2 + $0x448] sm:$0xff]
        %v425 = vld [vmem:[#allocation2 + $0x450] sm:$0xff]
        %v426 = vld [vmem:[#allocation2 + $0x458] sm:$0xff]
        %v427 = vld [vmem:[#allocation2 + $0x460] sm:$0xff]
        %v428 = vld [vmem:[#allocation2 + $0x468] sm:$0xff]
        %v429 = vld [vmem:[#allocation2 + $0x470] sm:$0xff]
        %v430 = vld [vmem:[#allocation2 + $0x478] sm:$0xff]
        %v431 = vld [vmem:[#allocation2 + $0x480] sm:$0xff]
        %v432 = vld [vmem:[#allocation2 + $0x488] sm:$0xff]
        %v433 = vld [vmem:[#allocation2 + $0x490] sm:$0xff]
        %v434 = vld [vmem:[#allocation2 + $0x498] sm:$0xff]
        %v435 = vld [vmem:[#allocation2 + $0x4a0] sm:$0xff]
        %v436 = vld [vmem:[#allocation2 + $0x4a8] sm:$0xff]
        %v437 = vld [vmem:[#allocation2 + $0x4b0] sm:$0xff]
        %v438 = vld [vmem:[#allocation2 + $0x4b8] sm:$0xff]
        %v439 = vld [vmem:[#allocation2 + $0x4c0] sm:$0xff]
        %v440 = vld [vmem:[#allocation2 + $0x4c8] sm:$0xff]
        %v441 = vld [vmem:[#allocation2 + $0x4d0] sm:$0xff]
        %v442 = vld [vmem:[#allocation2 + $0x4d8] sm:$0xff]
        %v443 = vld [vmem:[#allocation2 + $0x4e0] sm:$0xff]
        %v444 = vld [vmem:[#allocation2 + $0x4e8] sm:$0xff]
        %v445 = vld [vmem:[#allocation2 + $0x4f0] sm:$0xff]
        %v446 = vld [vmem:[#allocation2 + $0x4f8] sm:$0xff]
        %v447 = vld [vmem:[#allocation2 + $0x500] sm:$0xff]
        %v448 = vld [vmem:[#allocation2 + $0x508] sm:$0xff]
        %v449 = vld [vmem:[#allocation2 + $0x510] sm:$0xff]
        %v450 = vld [vmem:[#allocation2 + $0x518] sm:$0xff]
        %v451 = vld [vmem:[#allocation2 + $0x520] sm:$0xff]
        %v452 = vld [vmem:[#allocation2 + $0x528] sm:$0xff]
        %v453 = vld [vmem:[#allocation2 + $0x530] sm:$0xff]
        %v454 = vld [vmem:[#allocation2 + $0x538] sm:$0xff]
        %v455 = vld [vmem:[#allocation2 + $0x540] sm:$0xff]
        %v456 = vld [vmem:[#allocation2 + $0x548] sm:$0xff]
        %v457 = vld [vmem:[#allocation2 + $0x550] sm:$0xff]
        %v458 = vld [vmem:[#allocation2 + $0x558] sm:$0xff]
        %v459 = vld [vmem:[#allocation2 + $0x560] sm:$0xff]
        %v460 = vld [vmem:[#allocation2 + $0x568] sm:$0xff]
        %v461 = vld [vmem:[#allocation2 + $0x570] sm:$0xff]
        %v462 = vld [vmem:[#allocation2 + $0x578] sm:$0xff]
        %v463 = vld [vmem:[#allocation2 + $0x580] sm:$0xff]
        %v464 = vld [vmem:[#allocation2 + $0x588] sm:$0xff]
        %v465 = vld [vmem:[#allocation2 + $0x590] sm:$0xff]
        %v466 = vld [vmem:[#allocation2 + $0x598] sm:$0xff]
        %v467 = vld [vmem:[#allocation2 + $0x5a0] sm:$0xff]
        %v468 = vld [vmem:[#allocation2 + $0x5a8] sm:$0xff]
        %v469 = vld [vmem:[#allocation2 + $0x5b0] sm:$0xff]
        %v470 = vld [vmem:[#allocation2 + $0x5b8] sm:$0xff]
        %v471 = vld [vmem:[#allocation2 + $0x5c0] sm:$0xff]
        %v472 = vld [vmem:[#allocation2 + $0x5c8] sm:$0xff]
        %v473 = vld [vmem:[#allocation2 + $0x5d0] sm:$0xff]
        %v474 = vld [vmem:[#allocation2 + $0x5d8] sm:$0xff]
        %v475 = vld [vmem:[#allocation2 + $0x5e0] sm:$0xff]
        %v476 = vld [vmem:[#allocation2 + $0x5e8] sm:$0xff]
        %v477 = vld [vmem:[#allocation2 + $0x5f0] sm:$0xff]
        %v478 = vld [vmem:[#allocation2 + $0x5f8] sm:$0xff]
        %v479 = vld [vmem:[%s4] sm:$0x3f]
        %v481 = vlaneseq
        %v482 = vshrl.u32 %v481, 7
        %v483 = vsub.s32 0, %v482
        %v484 = vrot.slane %v479, %v483
        %v485 = vlaneseq
        %v486 = vshrl.u32 %v485, 7
        %v487 = vsub.s32 1, %v486
        %v488 = vrot.slane %v479, %v487
        %v489 = vlaneseq
        %v490 = vshrl.u32 %v489, 7
        %v491 = vsub.s32 2, %v490
        %v492 = vrot.slane %v479, %v491
        %v493 = vlaneseq
        %v494 = vshrl.u32 %v493, 7
        %v495 = vsub.s32 3, %v494
        %v496 = vrot.slane %v479, %v495
        %v497 = vlaneseq
        %v498 = vshrl.u32 %v497, 7
        %v499 = vsub.s32 4, %v498
        %v500 = vrot.slane %v479, %v499
        %v501 = vlaneseq
        %v502 = vshrl.u32 %v501, 7
        %v503 = vsub.s32 5, %v502
        %v504 = vrot.slane %v479, %v503
        %511 = vmatprep.subr.mxu0 %v288
        %512 = vmatpush1.xpose.msra.mxu0 %v287
        %513 = vmatprep.subr.mxu0 %v290
        %514 = vmatpush1.xpose.msra.mxu0 %v289
        %515 = vmatprep.subr.mxu0 %v292
        %516 = vmatpush1.xpose.msra.mxu0 %v291
        %517 = vmatprep.subr.mxu0 %v294
        %518 = vmatpush1.xpose.msra.mxu0 %v293
        %519 = vmatprep.subr.mxu0 %v296
        %520 = vmatpush1.xpose.msra.mxu0 %v295
        %521 = vmatprep.subr.mxu0 %v298
        %522 = vmatpush1.xpose.msra.mxu0 %v297
        %523 = vmatprep.subr.mxu0 %v300
        %524 = vmatpush1.xpose.msra.mxu0 %v299
        %525 = vmatprep.subr.mxu0 %v302
        %526 = vmatpush1.xpose.msra.mxu0 %v301
        %527 = vmatprep.subr.mxu0 %v304
        %528 = vmatpush1.xpose.msra.mxu0 %v303
        %529 = vmatprep.subr.mxu0 %v306
        %530 = vmatpush1.xpose.msra.mxu0 %v305
        %531 = vmatprep.subr.mxu0 %v308
        %532 = vmatpush1.xpose.msra.mxu0 %v307
        %533 = vmatprep.subr.mxu0 %v310
        %534 = vmatpush1.xpose.msra.mxu0 %v309
        %535 = vmatprep.subr.mxu0 %v312
        %536 = vmatpush1.xpose.msra.mxu0 %v311
        %537 = vmatprep.subr.mxu0 %v314
        %538 = vmatpush1.xpose.msra.mxu0 %v313
        %539 = vmatprep.subr.mxu0 %v316
        %540 = vmatpush1.xpose.msra.mxu0 %v315
        %541 = vmatprep.subr.mxu0 %v318
        %542 = vmatpush1.xpose.msra.mxu0 %v317
        %543 = vmatprep.subr.mxu0 %v320
        %544 = vmatpush1.xpose.msra.mxu0 %v319
        %545 = vmatprep.subr.mxu0 %v322
        %546 = vmatpush1.xpose.msra.mxu0 %v321
        %547 = vmatprep.subr.mxu0 %v324
        %548 = vmatpush1.xpose.msra.mxu0 %v323
        %549 = vmatprep.subr.mxu0 %v326
        %550 = vmatpush1.xpose.msra.mxu0 %v325
        %551 = vmatprep.subr.mxu0 %v328
        %552 = vmatpush1.xpose.msra.mxu0 %v327
        %553 = vmatprep.subr.mxu0 %v330
        %554 = vmatpush1.xpose.msra.mxu0 %v329
        %555 = vmatprep.subr.mxu0 %v332
        %556 = vmatpush1.xpose.msra.mxu0 %v331
        %557 = vmatprep.subr.mxu0 %v334
        %558 = vmatpush1.xpose.msra.mxu0 %v333
        %559 = vmatprep.subr.mxu0 %v336
        %560 = vmatpush1.xpose.msra.mxu0 %v335
        %561 = vmatprep.subr.mxu0 %v338
        %562 = vmatpush1.xpose.msra.mxu0 %v337
        %563 = vmatprep.subr.mxu0 %v340
        %564 = vmatpush1.xpose.msra.mxu0 %v339
        %565 = vmatprep.subr.mxu0 %v342
        %566 = vmatpush1.xpose.msra.mxu0 %v341
        %567 = vmatprep.subr.mxu0 %v344
        %568 = vmatpush1.xpose.msra.mxu0 %v343
        %569 = vmatprep.subr.mxu0 %v346
        %570 = vmatpush1.xpose.msra.mxu0 %v345
        %571 = vmatprep.subr.mxu0 %v348
        %572 = vmatpush1.xpose.msra.mxu0 %v347
        %573 = vmatprep.subr.mxu0 %v350
        %574 = vmatpush1.xpose.msra.mxu0 %v349
        %575 = vmatprep.mubr.f32.mxu0 %v286
        %576 = vmatmul.mubr.f32.gmra.mrb[0].mxu0 %v285
        %v577 = vpop.f32.mrb[0].mxu0
        %v578 = vadd.f32 %v484, %v577
        %v579 = vpop.f32.mrb[0].mxu0
        %v580 = vadd.f32 %v488, %v579
        %581 = vdwg.mxu0
        %582 = vmatprep.subr.mxu0 %v352
        %583 = vmatpush1.xpose.msra.mxu0 %v351
        %584 = vmatprep.subr.mxu0 %v354
        %585 = vmatpush1.xpose.msra.mxu0 %v353
        %586 = vmatprep.subr.mxu0 %v356
        %587 = vmatpush1.xpose.msra.mxu0 %v355
        %588 = vmatprep.subr.mxu0 %v358
        %589 = vmatpush1.xpose.msra.mxu0 %v357
        %590 = vmatprep.subr.mxu0 %v360
        %591 = vmatpush1.xpose.msra.mxu0 %v359
        %592 = vmatprep.subr.mxu0 %v362
        %593 = vmatpush1.xpose.msra.mxu0 %v361
        %594 = vmatprep.subr.mxu0 %v364
        %595 = vmatpush1.xpose.msra.mxu0 %v363
        %596 = vmatprep.subr.mxu0 %v366
        %597 = vmatpush1.xpose.msra.mxu0 %v365
        %598 = vmatprep.subr.mxu0 %v368
        %599 = vmatpush1.xpose.msra.mxu0 %v367
        %600 = vmatprep.subr.mxu0 %v370
        %601 = vmatpush1.xpose.msra.mxu0 %v369
        %602 = vmatprep.subr.mxu0 %v372
        %603 = vmatpush1.xpose.msra.mxu0 %v371
        %604 = vmatprep.subr.mxu0 %v374
        %605 = vmatpush1.xpose.msra.mxu0 %v373
        %606 = vmatprep.subr.mxu0 %v376
        %607 = vmatpush1.xpose.msra.mxu0 %v375
        %608 = vmatprep.subr.mxu0 %v378
        %609 = vmatpush1.xpose.msra.mxu0 %v377
        %610 = vmatprep.subr.mxu0 %v380
        %611 = vmatpush1.xpose.msra.mxu0 %v379
        %612 = vmatprep.subr.mxu0 %v382
        %613 = vmatpush1.xpose.msra.mxu0 %v381
        %614 = vmatprep.subr.mxu0 %v384
        %615 = vmatpush1.xpose.msra.mxu0 %v383
        %616 = vmatprep.subr.mxu0 %v386
        %617 = vmatpush1.xpose.msra.mxu0 %v385
        %618 = vmatprep.subr.mxu0 %v388
        %619 = vmatpush1.xpose.msra.mxu0 %v387
        %620 = vmatprep.subr.mxu0 %v390
        %621 = vmatpush1.xpose.msra.mxu0 %v389
        %622 = vmatprep.subr.mxu0 %v392
        %623 = vmatpush1.xpose.msra.mxu0 %v391
        %624 = vmatprep.subr.mxu0 %v394
        %625 = vmatpush1.xpose.msra.mxu0 %v393
        %626 = vmatprep.subr.mxu0 %v396
        %627 = vmatpush1.xpose.msra.mxu0 %v395
        %628 = vmatprep.subr.mxu0 %v398
        %629 = vmatpush1.xpose.msra.mxu0 %v397
        %630 = vmatprep.subr.mxu0 %v400
        %631 = vmatpush1.xpose.msra.mxu0 %v399
        %632 = vmatprep.subr.mxu0 %v402
        %633 = vmatpush1.xpose.msra.mxu0 %v401
        %634 = vmatprep.subr.mxu0 %v404
        %635 = vmatpush1.xpose.msra.mxu0 %v403
        %636 = vmatprep.subr.mxu0 %v406
        %637 = vmatpush1.xpose.msra.mxu0 %v405
        %638 = vmatprep.subr.mxu0 %v408
        %639 = vmatpush1.xpose.msra.mxu0 %v407
        %640 = vmatprep.subr.mxu0 %v410
        %641 = vmatpush1.xpose.msra.mxu0 %v409
        %642 = vmatprep.subr.mxu0 %v412
        %643 = vmatpush1.xpose.msra.mxu0 %v411
        %644 = vmatprep.subr.mxu0 %v414
        %645 = vmatpush1.xpose.msra.mxu0 %v413
        %646 = vmatprep.mubr.f32.mxu0 %v286
        %647 = vmatmul.mubr.f32.gmra.mrb[0].mxu0 %v285
        %v648 = vpop.f32.mrb[0].mxu0
        %v649 = vadd.f32 %v492, %v648
        %v650 = vpop.f32.mrb[0].mxu0
        %v651 = vadd.f32 %v496, %v650
        %652 = vdwg.mxu0
        %653 = vmatprep.subr.mxu0 %v416
        %654 = vmatpush1.xpose.msra.mxu0 %v415
        %655 = vmatprep.subr.mxu0 %v418
        %656 = vmatpush1.xpose.msra.mxu0 %v417
        %657 = vmatprep.subr.mxu0 %v420
        %658 = vmatpush1.xpose.msra.mxu0 %v419
        %659 = vmatprep.subr.mxu0 %v422
        %660 = vmatpush1.xpose.msra.mxu0 %v421
        %661 = vmatprep.subr.mxu0 %v424
        %662 = vmatpush1.xpose.msra.mxu0 %v423
        %663 = vmatprep.subr.mxu0 %v426
        %664 = vmatpush1.xpose.msra.mxu0 %v425
        %665 = vmatprep.subr.mxu0 %v428
        %666 = vmatpush1.xpose.msra.mxu0 %v427
        %667 = vmatprep.subr.mxu0 %v430
        %668 = vmatpush1.xpose.msra.mxu0 %v429
        %669 = vmatprep.subr.mxu0 %v432
        %670 = vmatpush1.xpose.msra.mxu0 %v431
        %671 = vmatprep.subr.mxu0 %v434
        %672 = vmatpush1.xpose.msra.mxu0 %v433
        %673 = vmatprep.subr.mxu0 %v436
        %674 = vmatpush1.xpose.msra.mxu0 %v435
        %675 = vmatprep.subr.mxu0 %v438
        %676 = vmatpush1.xpose.msra.mxu0 %v437
        %677 = vmatprep.subr.mxu0 %v440
        %678 = vmatpush1.xpose.msra.mxu0 %v439
        %679 = vmatprep.subr.mxu0 %v442
        %680 = vmatpush1.xpose.msra.mxu0 %v441
        %681 = vmatprep.subr.mxu0 %v444
        %682 = vmatpush1.xpose.msra.mxu0 %v443
        %683 = vmatprep.subr.mxu0 %v446
        %684 = vmatpush1.xpose.msra.mxu0 %v445
        %685 = vmatprep.subr.mxu0 %v448
        %686 = vmatpush1.xpose.msra.mxu0 %v447
        %687 = vmatprep.subr.mxu0 %v450
        %688 = vmatpush1.xpose.msra.mxu0 %v449
        %689 = vmatprep.subr.mxu0 %v452
        %690 = vmatpush1.xpose.msra.mxu0 %v451
        %691 = vmatprep.subr.mxu0 %v454
        %692 = vmatpush1.xpose.msra.mxu0 %v453
        %693 = vmatprep.subr.mxu0 %v456
        %694 = vmatpush1.xpose.msra.mxu0 %v455
        %695 = vmatprep.subr.mxu0 %v458
        %696 = vmatpush1.xpose.msra.mxu0 %v457
        %697 = vmatprep.subr.mxu0 %v460
        %698 = vmatpush1.xpose.msra.mxu0 %v459
        %699 = vmatprep.subr.mxu0 %v462
        %700 = vmatpush1.xpose.msra.mxu0 %v461
        %701 = vmatprep.subr.mxu0 %v464
        %702 = vmatpush1.xpose.msra.mxu0 %v463
        %703 = vmatprep.subr.mxu0 %v466
        %704 = vmatpush1.xpose.msra.mxu0 %v465
        %705 = vmatprep.subr.mxu0 %v468
        %706 = vmatpush1.xpose.msra.mxu0 %v467
        %707 = vmatprep.subr.mxu0 %v470
        %708 = vmatpush1.xpose.msra.mxu0 %v469
        %709 = vmatprep.subr.mxu0 %v472
        %710 = vmatpush1.xpose.msra.mxu0 %v471
        %711 = vmatprep.subr.mxu0 %v474
        %712 = vmatpush1.xpose.msra.mxu0 %v473
        %713 = vmatprep.subr.mxu0 %v476
        %714 = vmatpush1.xpose.msra.mxu0 %v475
        %715 = vmatprep.subr.mxu0 %v478
        %716 = vmatpush1.xpose.msra.mxu0 %v477
        %717 = vmatprep.mubr.f32.mxu0 %v286
        %718 = vmatmul.mubr.f32.gmra.mrb[0].mxu0 %v285
        %v719 = vpop.f32.mrb[0].mxu0
        %v720 = vadd.f32 %v500, %v719
        %v721 = vpop.f32.mrb[0].mxu0
        %v722 = vadd.f32 %v504, %v721
        %723 = vdwg.mxu0
        %724 = vst [vmem:[%s239] sm:$0xff] %v578
        %725 = vst [vmem:[%s239 + $0x8] sm:$0xff] %v580
        %726 = vst [vmem:[%s239 + $0x10] sm:$0xff] %v649
        %727 = vst [vmem:[%s239 + $0x18] sm:$0xff] %v651
        %728 = vst [vmem:[%s239 + $0x20] sm:$0xff] %v720
        %729 = vst [vmem:[%s239 + $0x28] sm:$0xff] %v722
        %p730 = scmp.lt.s32.totalorder %s17, 1
        %s731 = scalar_select %p730, %s17, 1
        %s732 = smul.addr %s731, 6
        %s733 = smul.addr %s732, 8
        %s734 = scalar_lea.vmem %s5, %s733
        // Predicated region
        $region45: #{transformer_encoder_block.5} parent=39 // pred_check
          %p735 = pneg %p145
        $region46: #{transformer_encoder_block.5} parent=39 // pred_check_branch
          %737 = sbr.rel (%p735) target = $region48
        $region47: #{transformer_encoder_block.5} parent=39 // pred_region
          _
        $region48: #{transformer_encoder_block.5} parent=39 // pred_fallthru
          _
      $region40: #{transformer_encoder_block.5} parent=5 // pred_fallthru
        _
      %p738 = scmp.le.s32.totalorder 2, %s12
      // Predicated region
      $region49: #{transformer_encoder_block.5} parent=5 // pred_check
        %p739 = pneg %p738
      $region50: #{transformer_encoder_block.5} parent=5 // pred_check_branch
        %741 = sbr.rel (%p739) target = $region52
      $region51: #{transformer_encoder_block.5} parent=5 // pred_region
        %s742 = ssub.s32 %s12, 2
        // Predicated region
        $region53: #{transformer_encoder_block.5} parent=51 // pred_check
          %p743 = pneg %p151
        $region54: #{transformer_encoder_block.5} parent=51 // pred_check_branch
          %745 = sbr.rel (%p743) target = $region56
        $region55: #{transformer_encoder_block.5} parent=51 // pred_region
          %p746 = scmp.lt.s32.totalorder %s18, 1
          %s747 = scalar_select %p746, %s18, 1
          %s748 = smul.addr %s747, 6
          %s749 = smul.addr %s748, 8
          %s750 = scalar_lea.vmem %s5, %s749
        $region56: #{transformer_encoder_block.5} parent=51 // pred_fallthru
          _
      $region52: #{transformer_encoder_block.5} parent=5 // pred_fallthru
        _
    $region6: #{transformer_encoder_block.5} parent=1 // loop_footer
      %s16 = sadd.s32 1, %s12
    $region7: #{transformer_encoder_block.5} parent=1 // loop_footer_branch
      %11 = sbr.rel target = $region3
    $region8: #{transformer_encoder_block.5} parent=1 // loop_exit
      _
    %751 = vsyncpa [#allocation3], 1
    %s752 = scalar_lea.sflag [#allocation3], 1
    %753 = vsyncpa %s752, 1

// kernel: transformer_encoder_block.8
$region0: #{transformer_encoder_block.8}
  #allocation0 [shape = 'u32[]', space=smem, size = 0x4, offset = 0x4, fixed_abs, tag = 'smem constant byte address 0x4 - core index']
  #allocation1 [shape = 'u32[144,128]{1,0:T(1,128)}', space=vmem, size = 0x12000, scoped, tag = 'internal scratch']
  %s0 = inlined_call_operand.vmem [shape: f32[16,256], index: 0, kind: input, shape index: {}]
  %s1 = inlined_call_operand.vmem [shape: f32[1,256], index: 1, kind: input, shape index: {}]
  %s2 = inlined_call_operand.vmem [shape: f32[1,256], index: 2, kind: input, shape index: {}]
  %s3 = inlined_call_operand.vmem [shape: f32[512,256], index: 3, kind: input, shape index: {}]
  %s4 = inlined_call_operand.vmem [shape: f32[1,512], index: 4, kind: input, shape index: {}]
  %s5 = inlined_call_operand.vmem [shape: f32[16,512], index: 5, kind: output, shape index: {}]
  %s6 = sld [smem:[#allocation0]]
  $region53: #{transformer_encoder_block.8} parent=0
    _
  %s8 = ssub.s32 1, %s6
  %s9 = scalar_select 0, %s8, %s6
  loop: start=0, step=1, limit=4
  $region2: #{transformer_encoder_block.8} parent=0 // loop_pre_header
    _
  $region3: #{transformer_encoder_block.8} parent=0 // loop_header
    %s11 = sphi 0, %s15
    %p12 = scmp.ge.s32.totalorder %s11, 4
    %s21 = sphi 0, %s23
    %s24 = sphi 0, %s21
    %s25 = sphi 0, %s24
    %s41 = sphi 0, %s25
    %s45 = sphi 0, %s45
    %s47 = sphi 0, %s45
    %s48 = sphi 0, %s47
    %s62 = sphi 0, %s48
    %s66 = sphi 0, %s66
    %s68 = sphi 0, %s66
    %s69 = sphi 0, %s68
    %s83 = sphi 0, %s69
    %s87 = sphi 0, %s87
    %s89 = sphi 0, %s87
    %s90 = sphi 0, %s89
    %s104 = sphi 0, %s90
    %s108 = sphi 0, %s108
    %s110 = sphi 0, %s108
    %s111 = sphi 0, %s110
    %s125 = sphi 0, %s111
    %s131 = sphi 0, %s133
    %s134 = sphi 0, %s131
    %s135 = sphi 0, %s134
    %s151 = sphi 0, %s135
  $region4: #{transformer_encoder_block.8} parent=0 // loop_header_branch
    %14 = sbr.rel (%p12) target = $region8
  $region5: #{transformer_encoder_block.8} parent=0 // loop_body
    %s16 = ssub.s32 %s11, 1
    %s17 = ssub.s32 %s11, 2
    %s18 = sadd.s32 %s11, 1
    %s19 = ssub.s32 %s11, %s18
    %p20 = scmp.eq.s32.totalorder %s19, 0
    %s22 = sadd.s32 %s21, 1
    %s23 = scalar_select %p20, %s21, %s22
    %p26 = pneg %p20
    %p27 = scmp.eq.s32.totalorder %s11, 1
    %p28 = por %p26, %p27
    %p29 = scmp.ne.s32.totalorder %s21, %s24
    %p30 = scmp.eq.s32.totalorder %s11, 0
    %p31 = por %p29, %p30
    %p32 = scmp.ne.s32.totalorder %s21, %s24
    %p33 = scmp.eq.s32.totalorder %s16, 1
    %p34 = por %p32, %p33
    %p35 = scmp.ne.s32.totalorder %s24, %s25
    %p36 = scmp.eq.s32.totalorder %s16, 0
    %p37 = por %p35, %p36
    %p38 = scmp.ne.s32.totalorder %s24, %s25
    %p39 = scmp.eq.s32.totalorder %s17, 1
    %p40 = por %p38, %p39
    %p42 = scmp.ne.s32.totalorder %s25, %s41
    %p43 = scmp.eq.s32.totalorder %s17, 0
    %p44 = por %p42, %p43
    %s46 = sadd.s32 %s45, 1
    %p49 = scmp.eq.s32.totalorder %s11, 1
    %p50 = scmp.ne.s32.totalorder %s45, %s47
    %p51 = scmp.eq.s32.totalorder %s11, 0
    %p52 = por %p50, %p51
    %p53 = scmp.ne.s32.totalorder %s45, %s47
    %p54 = scmp.eq.s32.totalorder %s16, 1
    %p55 = por %p53, %p54
    %p56 = scmp.ne.s32.totalorder %s47, %s48
    %p57 = scmp.eq.s32.totalorder %s16, 0
    %p58 = por %p56, %p57
    %p59 = scmp.ne.s32.totalorder %s47, %s48
    %p60 = scmp.eq.s32.totalorder %s17, 1
    %p61 = por %p59, %p60
    %p63 = scmp.ne.s32.totalorder %s48, %s62
    %p64 = scmp.eq.s32.totalorder %s17, 0
    %p65 = por %p63, %p64
    %s67 = sadd.s32 %s66, 1
    %p70 = scmp.eq.s32.totalorder %s11, 1
    %p71 = scmp.ne.s32.totalorder %s66, %s68
    %p72 = scmp.eq.s32.totalorder %s11, 0
    %p73 = por %p71, %p72
    %p74 = scmp.ne.s32.totalorder %s66, %s68
    %p75 = scmp.eq.s32.totalorder %s16, 1
    %p76 = por %p74, %p75
    %p77 = scmp.ne.s32.totalorder %s68, %s69
    %p78 = scmp.eq.s32.totalorder %s16, 0
    %p79 = por %p77, %p78
    %p80 = scmp.ne.s32.totalorder %s68, %s69
    %p81 = scmp.eq.s32.totalorder %s17, 1
    %p82 = por %p80, %p81
    %p84 = scmp.ne.s32.totalorder %s69, %s83
    %p85 = scmp.eq.s32.totalorder %s17, 0
    %p86 = por %p84, %p85
    %s88 = sadd.s32 %s87, 1
    %p91 = scmp.eq.s32.totalorder %s11, 1
    %p92 = scmp.ne.s32.totalorder %s87, %s89
    %p93 = scmp.eq.s32.totalorder %s11, 0
    %p94 = por %p92, %p93
    %p95 = scmp.ne.s32.totalorder %s87, %s89
    %p96 = scmp.eq.s32.totalorder %s16, 1
    %p97 = por %p95, %p96
    %p98 = scmp.ne.s32.totalorder %s89, %s90
    %p99 = scmp.eq.s32.totalorder %s16, 0
    %p100 = por %p98, %p99
    %p101 = scmp.ne.s32.totalorder %s89, %s90
    %p102 = scmp.eq.s32.totalorder %s17, 1
    %p103 = por %p101, %p102
    %p105 = scmp.ne.s32.totalorder %s90, %s104
    %p106 = scmp.eq.s32.totalorder %s17, 0
    %p107 = por %p105, %p106
    %s109 = sadd.s32 %s108, 1
    %p112 = scmp.eq.s32.totalorder %s11, 1
    %p113 = scmp.ne.s32.totalorder %s108, %s110
    %p114 = scmp.eq.s32.totalorder %s11, 0
    %p115 = por %p113, %p114
    %p116 = scmp.ne.s32.totalorder %s108, %s110
    %p117 = scmp.eq.s32.totalorder %s16, 1
    %p118 = por %p116, %p117
    %p119 = scmp.ne.s32.totalorder %s110, %s111
    %p120 = scmp.eq.s32.totalorder %s16, 0
    %p121 = por %p119, %p120
    %p122 = scmp.ne.s32.totalorder %s110, %s111
    %p123 = scmp.eq.s32.totalorder %s17, 1
    %p124 = por %p122, %p123
    %p126 = scmp.ne.s32.totalorder %s111, %s125
    %p127 = scmp.eq.s32.totalorder %s17, 0
    %p128 = por %p126, %p127
    %s129 = ssub.s32 %s11, %s18
    %p130 = scmp.eq.s32.totalorder %s129, 0
    %s132 = sadd.s32 %s131, 1
    %s133 = scalar_select %p130, %s131, %s132
    %p136 = pneg %p130
    %p137 = scmp.eq.s32.totalorder %s11, 1
    %p138 = por %p136, %p137
    %p139 = scmp.ne.s32.totalorder %s131, %s134
    %p140 = scmp.eq.s32.totalorder %s11, 0
    %p141 = por %p139, %p140
    %p142 = scmp.ne.s32.totalorder %s131, %s134
    %p143 = scmp.eq.s32.totalorder %s16, 1
    %p144 = por %p142, %p143
    %p145 = scmp.ne.s32.totalorder %s134, %s135
    %p146 = scmp.eq.s32.totalorder %s16, 0
    %p147 = por %p145, %p146
    %p148 = scmp.ne.s32.totalorder %s134, %s135
    %p149 = scmp.eq.s32.totalorder %s17, 1
    %p150 = por %p148, %p149
    %p152 = scmp.ne.s32.totalorder %s135, %s151
    %p153 = scmp.eq.s32.totalorder %s17, 0
    %p154 = por %p152, %p153
    %p155 = scmp.le.s32.totalorder 1, %s11
    %p156 = scmp.lt.s32.totalorder %s11, 3
    %p157 = pnand %p155, %p156
    %p158 = pneg %p157
    // Predicated region
    $region9: #{transformer_encoder_block.8} parent=5 // pred_check
      _
    $region10: #{transformer_encoder_block.8} parent=5 // pred_check_branch
      %160 = sbr.rel (%p157) target = $region12
    $region11: #{transformer_encoder_block.8} parent=5 // pred_region
      %s161 = ssub.s32 %s11, 1
      // Predicated region
      $region13: #{transformer_encoder_block.8} parent=11 // pred_check
        %p162 = pneg %p58
      $region14: #{transformer_encoder_block.8} parent=11 // pred_check_branch
        %164 = sbr.rel (%p162) target = $region16
      $region15: #{transformer_encoder_block.8} parent=11 // pred_region
        _
      $region16: #{transformer_encoder_block.8} parent=11 // pred_fallthru
        _
      // Predicated region
      $region17: #{transformer_encoder_block.8} parent=11 // pred_check
        %p165 = pneg %p79
      $region18: #{transformer_encoder_block.8} parent=11 // pred_check_branch
        %167 = sbr.rel (%p165) target = $region20
      $region19: #{transformer_encoder_block.8} parent=11 // pred_region
        _
      $region20: #{transformer_encoder_block.8} parent=11 // pred_fallthru
        _
      // Predicated region
      $region21: #{transformer_encoder_block.8} parent=11 // pred_check
        %p168 = pneg %p100
      $region22: #{transformer_encoder_block.8} parent=11 // pred_check_branch
        %170 = sbr.rel (%p168) target = $region24
      $region23: #{transformer_encoder_block.8} parent=11 // pred_region
        _
      $region24: #{transformer_encoder_block.8} parent=11 // pred_fallthru
        _
      // Predicated region
      $region25: #{transformer_encoder_block.8} parent=11 // pred_check
        %p171 = pneg %p121
      $region26: #{transformer_encoder_block.8} parent=11 // pred_check_branch
        %173 = sbr.rel (%p171) target = $region28
      $region27: #{transformer_encoder_block.8} parent=11 // pred_region
        _
      $region28: #{transformer_encoder_block.8} parent=11 // pred_fallthru
        _
    $region12: #{transformer_encoder_block.8} parent=5 // pred_fallthru
      _
    %p174 = scmp.lt.s32.totalorder %s11, 2
    // Predicated region
    $region29: #{transformer_encoder_block.8} parent=5 // pred_check
      %p175 = pneg %p174
    $region30: #{transformer_encoder_block.8} parent=5 // pred_check_branch
      %177 = sbr.rel (%p175) target = $region32
    $region31: #{transformer_encoder_block.8} parent=5 // pred_region
      // Predicated region
      $region33: #{transformer_encoder_block.8} parent=31 // pred_check
        %p178 = pneg %p31
      $region34: #{transformer_encoder_block.8} parent=31 // pred_check_branch
        %180 = sbr.rel (%p178) target = $region36
      $region35: #{transformer_encoder_block.8} parent=31 // pred_region
        %p181 = scmp.lt.s32.totalorder %s11, 1
        %s182 = scalar_select %p181, %s11, 1
        %s183 = smul.addr %s182, 2
        %s184 = smul.addr %s183, 8
        %s185 = scalar_lea.vmem %s0, %s184
      $region36: #{transformer_encoder_block.8} parent=31 // pred_fallthru
        _
    $region32: #{transformer_encoder_block.8} parent=5 // pred_fallthru
      _
    %p186 = scmp.le.s32.totalorder 1, %s11
    %p187 = scmp.lt.s32.totalorder %s11, 3
    %p188 = pnand %p186, %p187
    %p189 = pneg %p188
    // Predicated region
    $region37: #{transformer_encoder_block.8} parent=5 // pred_check
      _
    $region38: #{transformer_encoder_block.8} parent=5 // pred_check_branch
      %191 = sbr.rel (%p188) target = $region40
    $region39: #{transformer_encoder_block.8} parent=5 // pred_region
      %s192 = ssub.s32 %s11, 1
      %p193 = scmp.lt.s32.totalorder %s16, 1
      %s194 = scalar_select %p193, %s16, 1
      %s195 = smul.addr %s194, 2
      %s196 = smul.addr %s195, 8
      %s197 = scalar_lea.vmem %s0, %s196
      %p198 = pneg %p37
      %p199 = pneg %p34
      %p200 = pneg %p58
      %p201 = pneg %p55
      %p202 = pneg %p79
      %p203 = pneg %p76
      %p204 = pneg %p100
      %p205 = pneg %p97
      %p206 = pneg %p121
      %p207 = pneg %p118
      %p208 = pneg %p147
      %p209 = pneg %p144
      %p210 = scmp.lt.s32.totalorder %s16, 1
      %s211 = scalar_select %p210, %s16, 1
      %s212 = smul.addr %s211, 4
      %s213 = smul.addr %s212, 8
      %s214 = scalar_lea.vmem %s5, %s213
      %p215 = scmp.lt.s32.totalorder %s16, 1
      %s216 = scalar_select %p215, %s16, 1
      %s217 = smul.addr %s216, 2
      %s218 = smul.addr %s217, 8
      %s219 = scalar_lea.vmem %s0, %s218
      %p220 = scmp.lt.s32.totalorder %s16, 1
      %s221 = scalar_select %p220, %s16, 1
      %s222 = smul.addr %s221, 4
      %s223 = smul.addr %s222, 8
      %s224 = scalar_lea.vmem %s5, %s223
      %v225 = vld [vmem:[%s219] sm:$0xff]
      %v226 = vld [vmem:[%s219 + $0x8] sm:$0xff]
      %v227 = vadd.f32 %v225, %v226
      %228 = vadd.xlane.f32.xlu0 %v227
      %v229 = vpop.xlane.xlu0 %228
      %v230 = vrcp.pop 256.0
      %v231 = vmul.f32 %v229, %v230
      %v232 = vsub.f32 %v225, %v231
      %v233 = vsub.f32 %v226, %v231
      %v234 = vmul.f32 %v232, %v232
      %v235 = vmul.f32 %v233, %v233
      %v236 = vadd.f32 %v234, %v235
      %237 = vadd.xlane.f32.xlu0 %v236
      %v238 = vpop.xlane.xlu0 %237
      %v239 = vmul.f32 %v238, %v230
      %v240 = vadd.f32 %v239, 1e-05
      %v241 = vrsqrt.pop %v240
      %v242 = vmul.f32 %v232, %v241
      %v243 = vmul.f32 %v233, %v241
      %v244 = vld [vmem:[%s1] sm:$0x3]
      %v246 = vlaneseq
      %v247 = vshrl.u32 %v246, 7
      %v248 = vsub.s32 0, %v247
      %v249 = vrot.slane %v244, %v248
      %v250 = vlaneseq
      %v251 = vshrl.u32 %v250, 7
      %v252 = vsub.s32 1, %v251
      %v253 = vrot.slane %v244, %v252
      %v256 = vmul.f32 %v242, %v249
      %v257 = vmul.f32 %v243, %v253
      %v258 = vld [vmem:[%s2] sm:$0x3]
      %v260 = vlaneseq
      %v261 = vshrl.u32 %v260, 7
      %v262 = vsub.s32 0, %v261
      %v263 = vrot.slane %v258, %v262
      %v264 = vlaneseq
      %v265 = vshrl.u32 %v264, 7
      %v266 = vsub.s32 1, %v265
      %v267 = vrot.slane %v258, %v266
      %v270 = vadd.f32 %v256, %v263
      %v271 = vadd.f32 %v257, %v267
      %v272 = vld [vmem:[%s3] sm:$0xff]
      %v273 = vld [vmem:[%s3 + $0x8] sm:$0xff]
      %v274 = vld [vmem:[%s3 + $0x10] sm:$0xff]
      %v275 = vld [vmem:[%s3 + $0x18] sm:$0xff]
      %v276 = vld [vmem:[%s3 + $0x20] sm:$0xff]
      %v277 = vld [vmem:[%s3 + $0x28] sm:$0xff]
      %v278 = vld [vmem:[%s3 + $0x30] sm:$0xff]
      %v279 = vld [vmem:[%s3 + $0x38] sm:$0xff]
      %v280 = vld [vmem:[%s3 + $0x40] sm:$0xff]
      %v281 = vld [vmem:[%s3 + $0x48] sm:$0xff]
      %v282 = vld [vmem:[%s3 + $0x50] sm:$0xff]
      %v283 = vld [vmem:[%s3 + $0x58] sm:$0xff]
      %v284 = vld [vmem:[%s3 + $0x60] sm:$0xff]
      %v285 = vld [vmem:[%s3 + $0x68] sm:$0xff]
      %v286 = vld [vmem:[%s3 + $0x70] sm:$0xff]
      %v287 = vld [vmem:[%s3 + $0x78] sm:$0xff]
      %v288 = vld [vmem:[%s3 + $0x80] sm:$0xff]
      %v289 = vld [vmem:[%s3 + $0x88] sm:$0xff]
      %v290 = vld [vmem:[%s3 + $0x90] sm:$0xff]
      %v291 = vld [vmem:[%s3 + $0x98] sm:$0xff]
      %v292 = vld [vmem:[%s3 + $0xa0] sm:$0xff]
      %v293 = vld [vmem:[%s3 + $0xa8] sm:$0xff]
      %v294 = vld [vmem:[%s3 + $0xb0] sm:$0xff]
      %v295 = vld [vmem:[%s3 + $0xb8] sm:$0xff]
      %v296 = vld [vmem:[%s3 + $0xc0] sm:$0xff]
      %v297 = vld [vmem:[%s3 + $0xc8] sm:$0xff]
      %v298 = vld [vmem:[%s3 + $0xd0] sm:$0xff]
      %v299 = vld [vmem:[%s3 + $0xd8] sm:$0xff]
      %v300 = vld [vmem:[%s3 + $0xe0] sm:$0xff]
      %v301 = vld [vmem:[%s3 + $0xe8] sm:$0xff]
      %v302 = vld [vmem:[%s3 + $0xf0] sm:$0xff]
      %v303 = vld [vmem:[%s3 + $0xf8] sm:$0xff]
      %v304 = vld [vmem:[%s3 + $0x100] sm:$0xff]
      %v305 = vld [vmem:[%s3 + $0x108] sm:$0xff]
      %v306 = vld [vmem:[%s3 + $0x110] sm:$0xff]
      %v307 = vld [vmem:[%s3 + $0x118] sm:$0xff]
      %v308 = vld [vmem:[%s3 + $0x120] sm:$0xff]
      %v309 = vld [vmem:[%s3 + $0x128] sm:$0xff]
      %v310 = vld [vmem:[%s3 + $0x130] sm:$0xff]
      %v311 = vld [vmem:[%s3 + $0x138] sm:$0xff]
      %v312 = vld [vmem:[%s3 + $0x140] sm:$0xff]
      %v313 = vld [vmem:[%s3 + $0x148] sm:$0xff]
      %v314 = vld [vmem:[%s3 + $0x150] sm:$0xff]
      %v315 = vld [vmem:[%s3 + $0x158] sm:$0xff]
      %v316 = vld [vmem:[%s3 + $0x160] sm:$0xff]
      %v317 = vld [vmem:[%s3 + $0x168] sm:$0xff]
      %v318 = vld [vmem:[%s3 + $0x170] sm:$0xff]
      %v319 = vld [vmem:[%s3 + $0x178] sm:$0xff]
      %v320 = vld [vmem:[%s3 + $0x180] sm:$0xff]
      %v321 = vld [vmem:[%s3 + $0x188] sm:$0xff]
      %v322 = vld [vmem:[%s3 + $0x190] sm:$0xff]
      %v323 = vld [vmem:[%s3 + $0x198] sm:$0xff]
      %v324 = vld [vmem:[%s3 + $0x1a0] sm:$0xff]
      %v325 = vld [vmem:[%s3 + $0x1a8] sm:$0xff]
      %v326 = vld [vmem:[%s3 + $0x1b0] sm:$0xff]
      %v327 = vld [vmem:[%s3 + $0x1b8] sm:$0xff]
      %v328 = vld [vmem:[%s3 + $0x1c0] sm:$0xff]
      %v329 = vld [vmem:[%s3 + $0x1c8] sm:$0xff]
      %v330 = vld [vmem:[%s3 + $0x1d0] sm:$0xff]
      %v331 = vld [vmem:[%s3 + $0x1d8] sm:$0xff]
      %v332 = vld [vmem:[%s3 + $0x1e0] sm:$0xff]
      %v333 = vld [vmem:[%s3 + $0x1e8] sm:$0xff]
      %v334 = vld [vmem:[%s3 + $0x1f0] sm:$0xff]
      %v335 = vld [vmem:[%s3 + $0x1f8] sm:$0xff]
      %v336 = vld [vmem:[%s3 + $0x200] sm:$0xff]
      %v337 = vld [vmem:[%s3 + $0x208] sm:$0xff]
      %v338 = vld [vmem:[%s3 + $0x210] sm:$0xff]
      %v339 = vld [vmem:[%s3 + $0x218] sm:$0xff]
      %v340 = vld [vmem:[%s3 + $0x220] sm:$0xff]
      %v341 = vld [vmem:[%s3 + $0x228] sm:$0xff]
      %v342 = vld [vmem:[%s3 + $0x230] sm:$0xff]
      %v343 = vld [vmem:[%s3 + $0x238] sm:$0xff]
      %v344 = vld [vmem:[%s3 + $0x240] sm:$0xff]
      %v345 = vld [vmem:[%s3 + $0x248] sm:$0xff]
      %v346 = vld [vmem:[%s3 + $0x250] sm:$0xff]
      %v347 = vld [vmem:[%s3 + $0x258] sm:$0xff]
      %v348 = vld [vmem:[%s3 + $0x260] sm:$0xff]
      %v349 = vld [vmem:[%s3 + $0x268] sm:$0xff]
      %v350 = vld [vmem:[%s3 + $0x270] sm:$0xff]
      %v351 = vld [vmem:[%s3 + $0x278] sm:$0xff]
      %v352 = vld [vmem:[%s3 + $0x280] sm:$0xff]
      %v353 = vld [vmem:[%s3 + $0x288] sm:$0xff]
      %v354 = vld [vmem:[%s3 + $0x290] sm:$0xff]
      %v355 = vld [vmem:[%s3 + $0x298] sm:$0xff]
      %v356 = vld [vmem:[%s3 + $0x2a0] sm:$0xff]
      %v357 = vld [vmem:[%s3 + $0x2a8] sm:$0xff]
      %v358 = vld [vmem:[%s3 + $0x2b0] sm:$0xff]
      %v359 = vld [vmem:[%s3 + $0x2b8] sm:$0xff]
      %v360 = vld [vmem:[%s3 + $0x2c0] sm:$0xff]
      %v361 = vld [vmem:[%s3 + $0x2c8] sm:$0xff]
      %v362 = vld [vmem:[%s3 + $0x2d0] sm:$0xff]
      %v363 = vld [vmem:[%s3 + $0x2d8] sm:$0xff]
      %v364 = vld [vmem:[%s3 + $0x2e0] sm:$0xff]
      %v365 = vld [vmem:[%s3 + $0x2e8] sm:$0xff]
      %v366 = vld [vmem:[%s3 + $0x2f0] sm:$0xff]
      %v367 = vld [vmem:[%s3 + $0x2f8] sm:$0xff]
      %v368 = vld [vmem:[%s3 + $0x300] sm:$0xff]
      %v369 = vld [vmem:[%s3 + $0x308] sm:$0xff]
      %v370 = vld [vmem:[%s3 + $0x310] sm:$0xff]
      %v371 = vld [vmem:[%s3 + $0x318] sm:$0xff]
      %v372 = vld [vmem:[%s3 + $0x320] sm:$0xff]
      %v373 = vld [vmem:[%s3 + $0x328] sm:$0xff]
      %v374 = vld [vmem:[%s3 + $0x330] sm:$0xff]
      %v375 = vld [vmem:[%s3 + $0x338] sm:$0xff]
      %v376 = vld [vmem:[%s3 + $0x340] sm:$0xff]
      %v377 = vld [vmem:[%s3 + $0x348] sm:$0xff]
      %v378 = vld [vmem:[%s3 + $0x350] sm:$0xff]
      %v379 = vld [vmem:[%s3 + $0x358] sm:$0xff]
      %v380 = vld [vmem:[%s3 + $0x360] sm:$0xff]
      %v381 = vld [vmem:[%s3 + $0x368] sm:$0xff]
      %v382 = vld [vmem:[%s3 + $0x370] sm:$0xff]
      %v383 = vld [vmem:[%s3 + $0x378] sm:$0xff]
      %v384 = vld [vmem:[%s3 + $0x380] sm:$0xff]
      %v385 = vld [vmem:[%s3 + $0x388] sm:$0xff]
      %v386 = vld [vmem:[%s3 + $0x390] sm:$0xff]
      %v387 = vld [vmem:[%s3 + $0x398] sm:$0xff]
      %v388 = vld [vmem:[%s3 + $0x3a0] sm:$0xff]
      %v389 = vld [vmem:[%s3 + $0x3a8] sm:$0xff]
      %v390 = vld [vmem:[%s3 + $0x3b0] sm:$0xff]
      %v391 = vld [vmem:[%s3 + $0x3b8] sm:$0xff]
      %v392 = vld [vmem:[%s3 + $0x3c0] sm:$0xff]
      %v393 = vld [vmem:[%s3 + $0x3c8] sm:$0xff]
      %v394 = vld [vmem:[%s3 + $0x3d0] sm:$0xff]
      %v395 = vld [vmem:[%s3 + $0x3d8] sm:$0xff]
      %v396 = vld [vmem:[%s3 + $0x3e0] sm:$0xff]
      %v397 = vld [vmem:[%s3 + $0x3e8] sm:$0xff]
      %v398 = vld [vmem:[%s3 + $0x3f0] sm:$0xff]
      %v399 = vld [vmem:[%s3 + $0x3f8] sm:$0xff]
      %v400 = vld [vmem:[%s4] sm:$0xf]
      %v402 = vlaneseq
      %v403 = vshrl.u32 %v402, 7
      %v404 = vsub.s32 0, %v403
      %v405 = vrot.slane %v400, %v404
      %v406 = vlaneseq
      %v407 = vshrl.u32 %v406, 7
      %v408 = vsub.s32 1, %v407
      %v409 = vrot.slane %v400, %v408
      %v410 = vlaneseq
      %v411 = vshrl.u32 %v410, 7
      %v412 = vsub.s32 2, %v411
      %v413 = vrot.slane %v400, %v412
      %v414 = vlaneseq
      %v415 = vshrl.u32 %v414, 7
      %v416 = vsub.s32 3, %v415
      %v417 = vrot.slane %v400, %v416
      %422 = vmatprep.subr.mxu0 %v273
      %423 = vmatpush1.xpose.msra.mxu0 %v272
      %424 = vmatprep.subr.mxu0 %v275
      %425 = vmatpush1.xpose.msra.mxu0 %v274
      %426 = vmatprep.subr.mxu0 %v277
      %427 = vmatpush1.xpose.msra.mxu0 %v276
      %428 = vmatprep.subr.mxu0 %v279
      %429 = vmatpush1.xpose.msra.mxu0 %v278
      %430 = vmatprep.subr.mxu0 %v281
      %431 = vmatpush1.xpose.msra.mxu0 %v280
      %432 = vmatprep.subr.mxu0 %v283
      %433 = vmatpush1.xpose.msra.mxu0 %v282
      %434 = vmatprep.subr.mxu0 %v285
      %435 = vmatpush1.xpose.msra.mxu0 %v284
      %436 = vmatprep.subr.mxu0 %v287
      %437 = vmatpush1.xpose.msra.mxu0 %v286
      %438 = vmatprep.subr.mxu0 %v289
      %439 = vmatpush1.xpose.msra.mxu0 %v288
      %440 = vmatprep.subr.mxu0 %v291
      %441 = vmatpush1.xpose.msra.mxu0 %v290
      %442 = vmatprep.subr.mxu0 %v293
      %443 = vmatpush1.xpose.msra.mxu0 %v292
      %444 = vmatprep.subr.mxu0 %v295
      %445 = vmatpush1.xpose.msra.mxu0 %v294
      %446 = vmatprep.subr.mxu0 %v297
      %447 = vmatpush1.xpose.msra.mxu0 %v296
      %448 = vmatprep.subr.mxu0 %v299
      %449 = vmatpush1.xpose.msra.mxu0 %v298
      %450 = vmatprep.subr.mxu0 %v301
      %451 = vmatpush1.xpose.msra.mxu0 %v300
      %452 = vmatprep.subr.mxu0 %v303
      %453 = vmatpush1.xpose.msra.mxu0 %v302
      %454 = vmatprep.subr.mxu0 %v305
      %455 = vmatpush1.xpose.msra.mxu0 %v304
      %456 = vmatprep.subr.mxu0 %v307
      %457 = vmatpush1.xpose.msra.mxu0 %v306
      %458 = vmatprep.subr.mxu0 %v309
      %459 = vmatpush1.xpose.msra.mxu0 %v308
      %460 = vmatprep.subr.mxu0 %v311
      %461 = vmatpush1.xpose.msra.mxu0 %v310
      %462 = vmatprep.subr.mxu0 %v313
      %463 = vmatpush1.xpose.msra.mxu0 %v312
      %464 = vmatprep.subr.mxu0 %v315
      %465 = vmatpush1.xpose.msra.mxu0 %v314
      %466 = vmatprep.subr.mxu0 %v317
      %467 = vmatpush1.xpose.msra.mxu0 %v316
      %468 = vmatprep.subr.mxu0 %v319
      %469 = vmatpush1.xpose.msra.mxu0 %v318
      %470 = vmatprep.subr.mxu0 %v321
      %471 = vmatpush1.xpose.msra.mxu0 %v320
      %472 = vmatprep.subr.mxu0 %v323
      %473 = vmatpush1.xpose.msra.mxu0 %v322
      %474 = vmatprep.subr.mxu0 %v325
      %475 = vmatpush1.xpose.msra.mxu0 %v324
      %476 = vmatprep.subr.mxu0 %v327
      %477 = vmatpush1.xpose.msra.mxu0 %v326
      %478 = vmatprep.subr.mxu0 %v329
      %479 = vmatpush1.xpose.msra.mxu0 %v328
      %480 = vmatprep.subr.mxu0 %v331
      %481 = vmatpush1.xpose.msra.mxu0 %v330
      %482 = vmatprep.subr.mxu0 %v333
      %483 = vmatpush1.xpose.msra.mxu0 %v332
      %484 = vmatprep.subr.mxu0 %v335
      %485 = vmatpush1.xpose.msra.mxu0 %v334
      %486 = vmatprep.mubr.f32.mxu0 %v271
      %487 = vmatmul.mubr.f32.gmra.mrb[0].mxu0 %v270
      %v488 = vpop.f32.mrb[0].mxu0
      %v489 = vadd.f32 %v405, %v488
      %v490 = vpop.f32.mrb[0].mxu0
      %v491 = vadd.f32 %v409, %v490
      %492 = vdwg.mxu0
      %493 = vmatprep.subr.mxu0 %v337
      %494 = vmatpush1.xpose.msra.mxu0 %v336
      %495 = vmatprep.subr.mxu0 %v339
      %496 = vmatpush1.xpose.msra.mxu0 %v338
      %497 = vmatprep.subr.mxu0 %v341
      %498 = vmatpush1.xpose.msra.mxu0 %v340
      %499 = vmatprep.subr.mxu0 %v343
      %500 = vmatpush1.xpose.msra.mxu0 %v342
      %501 = vmatprep.subr.mxu0 %v345
      %502 = vmatpush1.xpose.msra.mxu0 %v344
      %503 = vmatprep.subr.mxu0 %v347
      %504 = vmatpush1.xpose.msra.mxu0 %v346
      %505 = vmatprep.subr.mxu0 %v349
      %506 = vmatpush1.xpose.msra.mxu0 %v348
      %507 = vmatprep.subr.mxu0 %v351
      %508 = vmatpush1.xpose.msra.mxu0 %v350
      %509 = vmatprep.subr.mxu0 %v353
      %510 = vmatpush1.xpose.msra.mxu0 %v352
      %511 = vmatprep.subr.mxu0 %v355
      %512 = vmatpush1.xpose.msra.mxu0 %v354
      %513 = vmatprep.subr.mxu0 %v357
      %514 = vmatpush1.xpose.msra.mxu0 %v356
      %515 = vmatprep.subr.mxu0 %v359
      %516 = vmatpush1.xpose.msra.mxu0 %v358
      %517 = vmatprep.subr.mxu0 %v361
      %518 = vmatpush1.xpose.msra.mxu0 %v360
      %519 = vmatprep.subr.mxu0 %v363
      %520 = vmatpush1.xpose.msra.mxu0 %v362
      %521 = vmatprep.subr.mxu0 %v365
      %522 = vmatpush1.xpose.msra.mxu0 %v364
      %523 = vmatprep.subr.mxu0 %v367
      %524 = vmatpush1.xpose.msra.mxu0 %v366
      %525 = vmatprep.subr.mxu0 %v369
      %526 = vmatpush1.xpose.msra.mxu0 %v368
      %527 = vmatprep.subr.mxu0 %v371
      %528 = vmatpush1.xpose.msra.mxu0 %v370
      %529 = vmatprep.subr.mxu0 %v373
      %530 = vmatpush1.xpose.msra.mxu0 %v372
      %531 = vmatprep.subr.mxu0 %v375
      %532 = vmatpush1.xpose.msra.mxu0 %v374
      %533 = vmatprep.subr.mxu0 %v377
      %534 = vmatpush1.xpose.msra.mxu0 %v376
      %535 = vmatprep.subr.mxu0 %v379
      %536 = vmatpush1.xpose.msra.mxu0 %v378
      %537 = vmatprep.subr.mxu0 %v381
      %538 = vmatpush1.xpose.msra.mxu0 %v380
      %539 = vmatprep.subr.mxu0 %v383
      %540 = vmatpush1.xpose.msra.mxu0 %v382
      %541 = vmatprep.subr.mxu0 %v385
      %542 = vmatpush1.xpose.msra.mxu0 %v384
      %543 = vmatprep.subr.mxu0 %v387
      %544 = vmatpush1.xpose.msra.mxu0 %v386
      %545 = vmatprep.subr.mxu0 %v389
      %546 = vmatpush1.xpose.msra.mxu0 %v388
      %547 = vmatprep.subr.mxu0 %v391
      %548 = vmatpush1.xpose.msra.mxu0 %v390
      %549 = vmatprep.subr.mxu0 %v393
      %550 = vmatpush1.xpose.msra.mxu0 %v392
      %551 = vmatprep.subr.mxu0 %v395
      %552 = vmatpush1.xpose.msra.mxu0 %v394
      %553 = vmatprep.subr.mxu0 %v397
      %554 = vmatpush1.xpose.msra.mxu0 %v396
      %555 = vmatprep.subr.mxu0 %v399
      %556 = vmatpush1.xpose.msra.mxu0 %v398
      %557 = vmatprep.mubr.f32.mxu0 %v271
      %558 = vmatmul.mubr.f32.gmra.mrb[0].mxu0 %v270
      %v559 = vpop.f32.mrb[0].mxu0
      %v560 = vadd.f32 %v413, %v559
      %v561 = vpop.f32.mrb[0].mxu0
      %v562 = vadd.f32 %v417, %v561
      %563 = vdwg.mxu0
      %v564 = vmul.f32 %v489, 0.5
      %v565 = vmul.f32 %v491, 0.5
      %v566 = vmul.f32 %v560, 0.5
      %v567 = vmul.f32 %v562, 0.5
      %v568 = vmul.f32 %v489, 0.044715
      %v569 = vmul.f32 %v491, 0.044715
      %v570 = vmul.f32 %v560, 0.044715
      %v571 = vmul.f32 %v562, 0.044715
      %v572 = vmul.f32 %v568, %v489
      %v573 = vmul.f32 %v569, %v491
      %v574 = vmul.f32 %v570, %v560
      %v575 = vmul.f32 %v571, %v562
      %v576 = vmul.f32 %v572, %v489
      %v577 = vmul.f32 %v573, %v491
      %v578 = vmul.f32 %v574, %v560
      %v579 = vmul.f32 %v575, %v562
      %v580 = vadd.f32 %v489, %v576
      %v581 = vadd.f32 %v491, %v577
      %v582 = vadd.f32 %v560, %v578
      %v583 = vadd.f32 %v562, %v579
      %v584 = vmul.f32 %v580, 0.7978846
      %v585 = vmul.f32 %v581, 0.7978846
      %v586 = vmul.f32 %v582, 0.7978846
      %v587 = vmul.f32 %v583, 0.7978846
      %v588 = vtanh.pop %v584
      %v589 = vtanh.pop %v585
      %v590 = vtanh.pop %v586
      %v591 = vtanh.pop %v587
      %v592 = vadd.f32 %v588, 1.0
      %v593 = vadd.f32 %v589, 1.0
      %v594 = vadd.f32 %v590, 1.0
      %v595 = vadd.f32 %v591, 1.0
      %v596 = vmul.f32 %v564, %v592
      %v597 = vmul.f32 %v565, %v593
      %v598 = vmul.f32 %v566, %v594
      %v599 = vmul.f32 %v567, %v595
      %600 = vst [vmem:[%s224] sm:$0xff] %v596
      %601 = vst [vmem:[%s224 + $0x8] sm:$0xff] %v597
      %602 = vst [vmem:[%s224 + $0x10] sm:$0xff] %v598
      %603 = vst [vmem:[%s224 + $0x18] sm:$0xff] %v599
      %p604 = scmp.lt.s32.totalorder %s16, 1
      %s605 = scalar_select %p604, %s16, 1
      %s606 = smul.addr %s605, 4
      %s607 = smul.addr %s606, 8
      %s608 = scalar_lea.vmem %s5, %s607
      // Predicated region
      $region41: #{transformer_encoder_block.8} parent=39 // pred_check
        %p609 = pneg %p144
      $region42: #{transformer_encoder_block.8} parent=39 // pred_check_branch
        %611 = sbr.rel (%p609) target = $region44
      $region43: #{transformer_encoder_block.8} parent=39 // pred_region
        _
      $region44: #{transformer_encoder_block.8} parent=39 // pred_fallthru
        _
    $region40: #{transformer_encoder_block.8} parent=5 // pred_fallthru
      _
    %p612 = scmp.le.s32.totalorder 2, %s11
    // Predicated region
    $region45: #{transformer_encoder_block.8} parent=5 // pred_check
      %p613 = pneg %p612
    $region46: #{transformer_encoder_block.8} parent=5 // pred_check_branch
      %615 = sbr.rel (%p613) target = $region48
    $region47: #{transformer_encoder_block.8} parent=5 // pred_region
      %s616 = ssub.s32 %s11, 2
      // Predicated region
      $region49: #{transformer_encoder_block.8} parent=47 // pred_check
        %p617 = pneg %p150
      $region50: #{transformer_encoder_block.8} parent=47 // pred_check_branch
        %619 = sbr.rel (%p617) target = $region52
      $region51: #{transformer_encoder_block.8} parent=47 // pred_region
        %p620 = scmp.lt.s32.totalorder %s17, 1
        %s621 = scalar_select %p620, %s17, 1
        %s622 = smul.addr %s621, 4
        %s623 = smul.addr %s622, 8
        %s624 = scalar_lea.vmem %s5, %s623
      $region52: #{transformer_encoder_block.8} parent=47 // pred_fallthru
        _
    $region48: #{transformer_encoder_block.8} parent=5 // pred_fallthru
      _
  $region6: #{transformer_encoder_block.8} parent=0 // loop_footer
    %s15 = sadd.s32 1, %s11
  $region7: #{transformer_encoder_block.8} parent=0 // loop_footer_branch
    %10 = sbr.rel target = $region3
  $region8: #{transformer_encoder_block.8} parent=0 // loop_exit
    _

// kernel: transformer_encoder_block.9
$region0: #{transformer_encoder_block.9}
  #allocation0 [shape = 'u32[]', space=smem, size = 0x4, offset = 0x4, fixed_abs, tag = 'smem constant byte address 0x4 - core index']
  #allocation1 [shape = 'u32[144,128]{1,0:T(1,128)}', space=vmem, size = 0x12000, scoped, tag = 'internal scratch']
  %s0 = inlined_call_operand.vmem [shape: f32[16,512], index: 0, kind: input, shape index: {}]
  %s1 = inlined_call_operand.vmem [shape: f32[256,512], index: 1, kind: input, shape index: {}]
  %s2 = inlined_call_operand.vmem [shape: f32[1,256], index: 2, kind: input, shape index: {}]
  %s3 = inlined_call_operand.vmem [shape: f32[16,256], index: 3, kind: input, shape index: {}]
  %s4 = inlined_call_operand.vmem [shape: f32[16,256], index: 4, kind: output, shape index: {}]
  %s5 = sld [smem:[#allocation0]]
  $region49: #{transformer_encoder_block.9} parent=0
    _
  %s7 = ssub.s32 1, %s5
  %s8 = scalar_select 0, %s7, %s5
  loop: start=0, step=1, limit=4
  $region2: #{transformer_encoder_block.9} parent=0 // loop_pre_header
    _
  $region3: #{transformer_encoder_block.9} parent=0 // loop_header
    %s10 = sphi 0, %s14
    %p11 = scmp.ge.s32.totalorder %s10, 4
    %s20 = sphi 0, %s22
    %s23 = sphi 0, %s20
    %s24 = sphi 0, %s23
    %s40 = sphi 0, %s24
    %s44 = sphi 0, %s44
    %s46 = sphi 0, %s44
    %s47 = sphi 0, %s46
    %s61 = sphi 0, %s47
    %s65 = sphi 0, %s65
    %s67 = sphi 0, %s65
    %s68 = sphi 0, %s67
    %s82 = sphi 0, %s68
    %s88 = sphi 0, %s90
    %s91 = sphi 0, %s88
    %s92 = sphi 0, %s91
    %s108 = sphi 0, %s92
    %s114 = sphi 0, %s116
    %s117 = sphi 0, %s114
    %s118 = sphi 0, %s117
    %s134 = sphi 0, %s118
  $region4: #{transformer_encoder_block.9} parent=0 // loop_header_branch
    %13 = sbr.rel (%p11) target = $region8
  $region5: #{transformer_encoder_block.9} parent=0 // loop_body
    %s15 = ssub.s32 %s10, 1
    %s16 = ssub.s32 %s10, 2
    %s17 = sadd.s32 %s10, 1
    %s18 = ssub.s32 %s10, %s17
    %p19 = scmp.eq.s32.totalorder %s18, 0
    %s21 = sadd.s32 %s20, 1
    %s22 = scalar_select %p19, %s20, %s21
    %p25 = pneg %p19
    %p26 = scmp.eq.s32.totalorder %s10, 1
    %p27 = por %p25, %p26
    %p28 = scmp.ne.s32.totalorder %s20, %s23
    %p29 = scmp.eq.s32.totalorder %s10, 0
    %p30 = por %p28, %p29
    %p31 = scmp.ne.s32.totalorder %s20, %s23
    %p32 = scmp.eq.s32.totalorder %s15, 1
    %p33 = por %p31, %p32
    %p34 = scmp.ne.s32.totalorder %s23, %s24
    %p35 = scmp.eq.s32.totalorder %s15, 0
    %p36 = por %p34, %p35
    %p37 = scmp.ne.s32.totalorder %s23, %s24
    %p38 = scmp.eq.s32.totalorder %s16, 1
    %p39 = por %p37, %p38
    %p41 = scmp.ne.s32.totalorder %s24, %s40
    %p42 = scmp.eq.s32.totalorder %s16, 0
    %p43 = por %p41, %p42
    %s45 = sadd.s32 %s44, 1
    %p48 = scmp.eq.s32.totalorder %s10, 1
    %p49 = scmp.ne.s32.totalorder %s44, %s46
    %p50 = scmp.eq.s32.totalorder %s10, 0
    %p51 = por %p49, %p50
    %p52 = scmp.ne.s32.totalorder %s44, %s46
    %p53 = scmp.eq.s32.totalorder %s15, 1
    %p54 = por %p52, %p53
    %p55 = scmp.ne.s32.totalorder %s46, %s47
    %p56 = scmp.eq.s32.totalorder %s15, 0
    %p57 = por %p55, %p56
    %p58 = scmp.ne.s32.totalorder %s46, %s47
    %p59 = scmp.eq.s32.totalorder %s16, 1
    %p60 = por %p58, %p59
    %p62 = scmp.ne.s32.totalorder %s47, %s61
    %p63 = scmp.eq.s32.totalorder %s16, 0
    %p64 = por %p62, %p63
    %s66 = sadd.s32 %s65, 1
    %p69 = scmp.eq.s32.totalorder %s10, 1
    %p70 = scmp.ne.s32.totalorder %s65, %s67
    %p71 = scmp.eq.s32.totalorder %s10, 0
    %p72 = por %p70, %p71
    %p73 = scmp.ne.s32.totalorder %s65, %s67
    %p74 = scmp.eq.s32.totalorder %s15, 1
    %p75 = por %p73, %p74
    %p76 = scmp.ne.s32.totalorder %s67, %s68
    %p77 = scmp.eq.s32.totalorder %s15, 0
    %p78 = por %p76, %p77
    %p79 = scmp.ne.s32.totalorder %s67, %s68
    %p80 = scmp.eq.s32.totalorder %s16, 1
    %p81 = por %p79, %p80
    %p83 = scmp.ne.s32.totalorder %s68, %s82
    %p84 = scmp.eq.s32.totalorder %s16, 0
    %p85 = por %p83, %p84
    %s86 = ssub.s32 %s10, %s17
    %p87 = scmp.eq.s32.totalorder %s86, 0
    %s89 = sadd.s32 %s88, 1
    %s90 = scalar_select %p87, %s88, %s89
    %p93 = pneg %p87
    %p94 = scmp.eq.s32.totalorder %s10, 1
    %p95 = por %p93, %p94
    %p96 = scmp.ne.s32.totalorder %s88, %s91
    %p97 = scmp.eq.s32.totalorder %s10, 0
    %p98 = por %p96, %p97
    %p99 = scmp.ne.s32.totalorder %s88, %s91
    %p100 = scmp.eq.s32.totalorder %s15, 1
    %p101 = por %p99, %p100
    %p102 = scmp.ne.s32.totalorder %s91, %s92
    %p103 = scmp.eq.s32.totalorder %s15, 0
    %p104 = por %p102, %p103
    %p105 = scmp.ne.s32.totalorder %s91, %s92
    %p106 = scmp.eq.s32.totalorder %s16, 1
    %p107 = por %p105, %p106
    %p109 = scmp.ne.s32.totalorder %s92, %s108
    %p110 = scmp.eq.s32.totalorder %s16, 0
    %p111 = por %p109, %p110
    %s112 = ssub.s32 %s10, %s17
    %p113 = scmp.eq.s32.totalorder %s112, 0
    %s115 = sadd.s32 %s114, 1
    %s116 = scalar_select %p113, %s114, %s115
    %p119 = pneg %p113
    %p120 = scmp.eq.s32.totalorder %s10, 1
    %p121 = por %p119, %p120
    %p122 = scmp.ne.s32.totalorder %s114, %s117
    %p123 = scmp.eq.s32.totalorder %s10, 0
    %p124 = por %p122, %p123
    %p125 = scmp.ne.s32.totalorder %s114, %s117
    %p126 = scmp.eq.s32.totalorder %s15, 1
    %p127 = por %p125, %p126
    %p128 = scmp.ne.s32.totalorder %s117, %s118
    %p129 = scmp.eq.s32.totalorder %s15, 0
    %p130 = por %p128, %p129
    %p131 = scmp.ne.s32.totalorder %s117, %s118
    %p132 = scmp.eq.s32.totalorder %s16, 1
    %p133 = por %p131, %p132
    %p135 = scmp.ne.s32.totalorder %s118, %s134
    %p136 = scmp.eq.s32.totalorder %s16, 0
    %p137 = por %p135, %p136
    %p138 = scmp.le.s32.totalorder 1, %s10
    %p139 = scmp.lt.s32.totalorder %s10, 3
    %p140 = pnand %p138, %p139
    %p141 = pneg %p140
    // Predicated region
    $region9: #{transformer_encoder_block.9} parent=5 // pred_check
      _
    $region10: #{transformer_encoder_block.9} parent=5 // pred_check_branch
      %143 = sbr.rel (%p140) target = $region12
    $region11: #{transformer_encoder_block.9} parent=5 // pred_region
      %s144 = ssub.s32 %s10, 1
      // Predicated region
      $region13: #{transformer_encoder_block.9} parent=11 // pred_check
        %p145 = pneg %p57
      $region14: #{transformer_encoder_block.9} parent=11 // pred_check_branch
        %147 = sbr.rel (%p145) target = $region16
      $region15: #{transformer_encoder_block.9} parent=11 // pred_region
        _
      $region16: #{transformer_encoder_block.9} parent=11 // pred_fallthru
        _
      // Predicated region
      $region17: #{transformer_encoder_block.9} parent=11 // pred_check
        %p148 = pneg %p78
      $region18: #{transformer_encoder_block.9} parent=11 // pred_check_branch
        %150 = sbr.rel (%p148) target = $region20
      $region19: #{transformer_encoder_block.9} parent=11 // pred_region
        _
      $region20: #{transformer_encoder_block.9} parent=11 // pred_fallthru
        _
    $region12: #{transformer_encoder_block.9} parent=5 // pred_fallthru
      _
    %p151 = scmp.lt.s32.totalorder %s10, 2
    // Predicated region
    $region21: #{transformer_encoder_block.9} parent=5 // pred_check
      %p152 = pneg %p151
    $region22: #{transformer_encoder_block.9} parent=5 // pred_check_branch
      %154 = sbr.rel (%p152) target = $region24
    $region23: #{transformer_encoder_block.9} parent=5 // pred_region
      // Predicated region
      $region25: #{transformer_encoder_block.9} parent=23 // pred_check
        %p155 = pneg %p30
      $region26: #{transformer_encoder_block.9} parent=23 // pred_check_branch
        %157 = sbr.rel (%p155) target = $region28
      $region27: #{transformer_encoder_block.9} parent=23 // pred_region
        %p158 = scmp.lt.s32.totalorder %s10, 1
        %s159 = scalar_select %p158, %s10, 1
        %s160 = smul.addr %s159, 4
        %s161 = smul.addr %s160, 8
        %s162 = scalar_lea.vmem %s0, %s161
      $region28: #{transformer_encoder_block.9} parent=23 // pred_fallthru
        _
      // Predicated region
      $region29: #{transformer_encoder_block.9} parent=23 // pred_check
        %p163 = pneg %p98
      $region30: #{transformer_encoder_block.9} parent=23 // pred_check_branch
        %165 = sbr.rel (%p163) target = $region32
      $region31: #{transformer_encoder_block.9} parent=23 // pred_region
        %p166 = scmp.lt.s32.totalorder %s10, 1
        %s167 = scalar_select %p166, %s10, 1
        %s168 = smul.addr %s167, 2
        %s169 = smul.addr %s168, 8
        %s170 = scalar_lea.vmem %s3, %s169
      $region32: #{transformer_encoder_block.9} parent=23 // pred_fallthru
        _
    $region24: #{transformer_encoder_block.9} parent=5 // pred_fallthru
      _
    %p171 = scmp.le.s32.totalorder 1, %s10
    %p172 = scmp.lt.s32.totalorder %s10, 3
    %p173 = pnand %p171, %p172
    %p174 = pneg %p173
    // Predicated region
    $region33: #{transformer_encoder_block.9} parent=5 // pred_check
      _
    $region34: #{transformer_encoder_block.9} parent=5 // pred_check_branch
      %176 = sbr.rel (%p173) target = $region36
    $region35: #{transformer_encoder_block.9} parent=5 // pred_region
      %s177 = ssub.s32 %s10, 1
      %p178 = scmp.lt.s32.totalorder %s15, 1
      %s179 = scalar_select %p178, %s15, 1
      %s180 = smul.addr %s179, 4
      %s181 = smul.addr %s180, 8
      %s182 = scalar_lea.vmem %s0, %s181
      %p183 = pneg %p36
      %p184 = pneg %p33
      %p185 = pneg %p57
      %p186 = pneg %p54
      %p187 = pneg %p78
      %p188 = pneg %p75
      %p189 = scmp.lt.s32.totalorder %s15, 1
      %s190 = scalar_select %p189, %s15, 1
      %s191 = smul.addr %s190, 2
      %s192 = smul.addr %s191, 8
      %s193 = scalar_lea.vmem %s3, %s192
      %p194 = pneg %p104
      %p195 = pneg %p101
      %p196 = pneg %p130
      %p197 = pneg %p127
      %p198 = scmp.lt.s32.totalorder %s15, 1
      %s199 = scalar_select %p198, %s15, 1
      %s200 = smul.addr %s199, 2
      %s201 = smul.addr %s200, 8
      %s202 = scalar_lea.vmem %s4, %s201
      %p203 = scmp.lt.s32.totalorder %s15, 1
      %s204 = scalar_select %p203, %s15, 1
      %s205 = smul.addr %s204, 4
      %s206 = smul.addr %s205, 8
      %s207 = scalar_lea.vmem %s0, %s206
      %p208 = scmp.lt.s32.totalorder %s15, 1
      %s209 = scalar_select %p208, %s15, 1
      %s210 = smul.addr %s209, 2
      %s211 = smul.addr %s210, 8
      %s212 = scalar_lea.vmem %s3, %s211
      %p213 = scmp.lt.s32.totalorder %s15, 1
      %s214 = scalar_select %p213, %s15, 1
      %s215 = smul.addr %s214, 2
      %s216 = smul.addr %s215, 8
      %s217 = scalar_lea.vmem %s4, %s216
      %v218 = vld [vmem:[%s207] sm:$0xff]
      %v219 = vld [vmem:[%s207 + $0x8] sm:$0xff]
      %v220 = vld [vmem:[%s207 + $0x10] sm:$0xff]
      %v221 = vld [vmem:[%s207 + $0x18] sm:$0xff]
      %v222 = vld [vmem:[%s1] sm:$0xff]
      %v223 = vld [vmem:[%s1 + $0x8] sm:$0xff]
      %v224 = vld [vmem:[%s1 + $0x10] sm:$0xff]
      %v225 = vld [vmem:[%s1 + $0x18] sm:$0xff]
      %v226 = vld [vmem:[%s1 + $0x20] sm:$0xff]
      %v227 = vld [vmem:[%s1 + $0x28] sm:$0xff]
      %v228 = vld [vmem:[%s1 + $0x30] sm:$0xff]
      %v229 = vld [vmem:[%s1 + $0x38] sm:$0xff]
      %v230 = vld [vmem:[%s1 + $0x40] sm:$0xff]
      %v231 = vld [vmem:[%s1 + $0x48] sm:$0xff]
      %v232 = vld [vmem:[%s1 + $0x50] sm:$0xff]
      %v233 = vld [vmem:[%s1 + $0x58] sm:$0xff]
      %v234 = vld [vmem:[%s1 + $0x60] sm:$0xff]
      %v235 = vld [vmem:[%s1 + $0x68] sm:$0xff]
      %v236 = vld [vmem:[%s1 + $0x70] sm:$0xff]
      %v237 = vld [vmem:[%s1 + $0x78] sm:$0xff]
      %v238 = vld [vmem:[%s1 + $0x80] sm:$0xff]
      %v239 = vld [vmem:[%s1 + $0x88] sm:$0xff]
      %v240 = vld [vmem:[%s1 + $0x90] sm:$0xff]
      %v241 = vld [vmem:[%s1 + $0x98] sm:$0xff]
      %v242 = vld [vmem:[%s1 + $0xa0] sm:$0xff]
      %v243 = vld [vmem:[%s1 + $0xa8] sm:$0xff]
      %v244 = vld [vmem:[%s1 + $0xb0] sm:$0xff]
      %v245 = vld [vmem:[%s1 + $0xb8] sm:$0xff]
      %v246 = vld [vmem:[%s1 + $0xc0] sm:$0xff]
      %v247 = vld [vmem:[%s1 + $0xc8] sm:$0xff]
      %v248 = vld [vmem:[%s1 + $0xd0] sm:$0xff]
      %v249 = vld [vmem:[%s1 + $0xd8] sm:$0xff]
      %v250 = vld [vmem:[%s1 + $0xe0] sm:$0xff]
      %v251 = vld [vmem:[%s1 + $0xe8] sm:$0xff]
      %v252 = vld [vmem:[%s1 + $0xf0] sm:$0xff]
      %v253 = vld [vmem:[%s1 + $0xf8] sm:$0xff]
      %v254 = vld [vmem:[%s1 + $0x100] sm:$0xff]
      %v255 = vld [vmem:[%s1 + $0x108] sm:$0xff]
      %v256 = vld [vmem:[%s1 + $0x110] sm:$0xff]
      %v257 = vld [vmem:[%s1 + $0x118] sm:$0xff]
      %v258 = vld [vmem:[%s1 + $0x120] sm:$0xff]
      %v259 = vld [vmem:[%s1 + $0x128] sm:$0xff]
      %v260 = vld [vmem:[%s1 + $0x130] sm:$0xff]
      %v261 = vld [vmem:[%s1 + $0x138] sm:$0xff]
      %v262 = vld [vmem:[%s1 + $0x140] sm:$0xff]
      %v263 = vld [vmem:[%s1 + $0x148] sm:$0xff]
      %v264 = vld [vmem:[%s1 + $0x150] sm:$0xff]
      %v265 = vld [vmem:[%s1 + $0x158] sm:$0xff]
      %v266 = vld [vmem:[%s1 + $0x160] sm:$0xff]
      %v267 = vld [vmem:[%s1 + $0x168] sm:$0xff]
      %v268 = vld [vmem:[%s1 + $0x170] sm:$0xff]
      %v269 = vld [vmem:[%s1 + $0x178] sm:$0xff]
      %v270 = vld [vmem:[%s1 + $0x180] sm:$0xff]
      %v271 = vld [vmem:[%s1 + $0x188] sm:$0xff]
      %v272 = vld [vmem:[%s1 + $0x190] sm:$0xff]
      %v273 = vld [vmem:[%s1 + $0x198] sm:$0xff]
      %v274 = vld [vmem:[%s1 + $0x1a0] sm:$0xff]
      %v275 = vld [vmem:[%s1 + $0x1a8] sm:$0xff]
      %v276 = vld [vmem:[%s1 + $0x1b0] sm:$0xff]
      %v277 = vld [vmem:[%s1 + $0x1b8] sm:$0xff]
      %v278 = vld [vmem:[%s1 + $0x1c0] sm:$0xff]
      %v279 = vld [vmem:[%s1 + $0x1c8] sm:$0xff]
      %v280 = vld [vmem:[%s1 + $0x1d0] sm:$0xff]
      %v281 = vld [vmem:[%s1 + $0x1d8] sm:$0xff]
      %v282 = vld [vmem:[%s1 + $0x1e0] sm:$0xff]
      %v283 = vld [vmem:[%s1 + $0x1e8] sm:$0xff]
      %v284 = vld [vmem:[%s1 + $0x1f0] sm:$0xff]
      %v285 = vld [vmem:[%s1 + $0x1f8] sm:$0xff]
      %v286 = vld [vmem:[%s1 + $0x200] sm:$0xff]
      %v287 = vld [vmem:[%s1 + $0x208] sm:$0xff]
      %v288 = vld [vmem:[%s1 + $0x210] sm:$0xff]
      %v289 = vld [vmem:[%s1 + $0x218] sm:$0xff]
      %v290 = vld [vmem:[%s1 + $0x220] sm:$0xff]
      %v291 = vld [vmem:[%s1 + $0x228] sm:$0xff]
      %v292 = vld [vmem:[%s1 + $0x230] sm:$0xff]
      %v293 = vld [vmem:[%s1 + $0x238] sm:$0xff]
      %v294 = vld [vmem:[%s1 + $0x240] sm:$0xff]
      %v295 = vld [vmem:[%s1 + $0x248] sm:$0xff]
      %v296 = vld [vmem:[%s1 + $0x250] sm:$0xff]
      %v297 = vld [vmem:[%s1 + $0x258] sm:$0xff]
      %v298 = vld [vmem:[%s1 + $0x260] sm:$0xff]
      %v299 = vld [vmem:[%s1 + $0x268] sm:$0xff]
      %v300 = vld [vmem:[%s1 + $0x270] sm:$0xff]
      %v301 = vld [vmem:[%s1 + $0x278] sm:$0xff]
      %v302 = vld [vmem:[%s1 + $0x280] sm:$0xff]
      %v303 = vld [vmem:[%s1 + $0x288] sm:$0xff]
      %v304 = vld [vmem:[%s1 + $0x290] sm:$0xff]
      %v305 = vld [vmem:[%s1 + $0x298] sm:$0xff]
      %v306 = vld [vmem:[%s1 + $0x2a0] sm:$0xff]
      %v307 = vld [vmem:[%s1 + $0x2a8] sm:$0xff]
      %v308 = vld [vmem:[%s1 + $0x2b0] sm:$0xff]
      %v309 = vld [vmem:[%s1 + $0x2b8] sm:$0xff]
      %v310 = vld [vmem:[%s1 + $0x2c0] sm:$0xff]
      %v311 = vld [vmem:[%s1 + $0x2c8] sm:$0xff]
      %v312 = vld [vmem:[%s1 + $0x2d0] sm:$0xff]
      %v313 = vld [vmem:[%s1 + $0x2d8] sm:$0xff]
      %v314 = vld [vmem:[%s1 + $0x2e0] sm:$0xff]
      %v315 = vld [vmem:[%s1 + $0x2e8] sm:$0xff]
      %v316 = vld [vmem:[%s1 + $0x2f0] sm:$0xff]
      %v317 = vld [vmem:[%s1 + $0x2f8] sm:$0xff]
      %v318 = vld [vmem:[%s1 + $0x300] sm:$0xff]
      %v319 = vld [vmem:[%s1 + $0x308] sm:$0xff]
      %v320 = vld [vmem:[%s1 + $0x310] sm:$0xff]
      %v321 = vld [vmem:[%s1 + $0x318] sm:$0xff]
      %v322 = vld [vmem:[%s1 + $0x320] sm:$0xff]
      %v323 = vld [vmem:[%s1 + $0x328] sm:$0xff]
      %v324 = vld [vmem:[%s1 + $0x330] sm:$0xff]
      %v325 = vld [vmem:[%s1 + $0x338] sm:$0xff]
      %v326 = vld [vmem:[%s1 + $0x340] sm:$0xff]
      %v327 = vld [vmem:[%s1 + $0x348] sm:$0xff]
      %v328 = vld [vmem:[%s1 + $0x350] sm:$0xff]
      %v329 = vld [vmem:[%s1 + $0x358] sm:$0xff]
      %v330 = vld [vmem:[%s1 + $0x360] sm:$0xff]
      %v331 = vld [vmem:[%s1 + $0x368] sm:$0xff]
      %v332 = vld [vmem:[%s1 + $0x370] sm:$0xff]
      %v333 = vld [vmem:[%s1 + $0x378] sm:$0xff]
      %v334 = vld [vmem:[%s1 + $0x380] sm:$0xff]
      %v335 = vld [vmem:[%s1 + $0x388] sm:$0xff]
      %v336 = vld [vmem:[%s1 + $0x390] sm:$0xff]
      %v337 = vld [vmem:[%s1 + $0x398] sm:$0xff]
      %v338 = vld [vmem:[%s1 + $0x3a0] sm:$0xff]
      %v339 = vld [vmem:[%s1 + $0x3a8] sm:$0xff]
      %v340 = vld [vmem:[%s1 + $0x3b0] sm:$0xff]
      %v341 = vld [vmem:[%s1 + $0x3b8] sm:$0xff]
      %v342 = vld [vmem:[%s1 + $0x3c0] sm:$0xff]
      %v343 = vld [vmem:[%s1 + $0x3c8] sm:$0xff]
      %v344 = vld [vmem:[%s1 + $0x3d0] sm:$0xff]
      %v345 = vld [vmem:[%s1 + $0x3d8] sm:$0xff]
      %v346 = vld [vmem:[%s1 + $0x3e0] sm:$0xff]
      %v347 = vld [vmem:[%s1 + $0x3e8] sm:$0xff]
      %v348 = vld [vmem:[%s1 + $0x3f0] sm:$0xff]
      %v349 = vld [vmem:[%s1 + $0x3f8] sm:$0xff]
      %350 = vmatprep.subr.mxu0 %v223
      %351 = vmatpush1.xpose.msra.mxu0 %v222
      %352 = vmatprep.subr.mxu0 %v227
      %353 = vmatpush1.xpose.msra.mxu0 %v226
      %354 = vmatprep.subr.mxu0 %v231
      %355 = vmatpush1.xpose.msra.mxu0 %v230
      %356 = vmatprep.subr.mxu0 %v235
      %357 = vmatpush1.xpose.msra.mxu0 %v234
      %358 = vmatprep.subr.mxu0 %v239
      %359 = vmatpush1.xpose.msra.mxu0 %v238
      %360 = vmatprep.subr.mxu0 %v243
      %361 = vmatpush1.xpose.msra.mxu0 %v242
      %362 = vmatprep.subr.mxu0 %v247
      %363 = vmatpush1.xpose.msra.mxu0 %v246
      %364 = vmatprep.subr.mxu0 %v251
      %365 = vmatpush1.xpose.msra.mxu0 %v250
      %366 = vmatprep.subr.mxu0 %v255
      %367 = vmatpush1.xpose.msra.mxu0 %v254
      %368 = vmatprep.subr.mxu0 %v259
      %369 = vmatpush1.xpose.msra.mxu0 %v258
      %370 = vmatprep.subr.mxu0 %v263
      %371 = vmatpush1.xpose.msra.mxu0 %v262
      %372 = vmatprep.subr.mxu0 %v267
      %373 = vmatpush1.xpose.msra.mxu0 %v266
      %374 = vmatprep.subr.mxu0 %v271
      %375 = vmatpush1.xpose.msra.mxu0 %v270
      %376 = vmatprep.subr.mxu0 %v275
      %377 = vmatpush1.xpose.msra.mxu0 %v274
      %378 = vmatprep.subr.mxu0 %v279
      %379 = vmatpush1.xpose.msra.mxu0 %v278
      %380 = vmatprep.subr.mxu0 %v283
      %381 = vmatpush1.xpose.msra.mxu0 %v282
      %382 = vmatprep.subr.mxu0 %v287
      %383 = vmatpush1.xpose.msra.mxu0 %v286
      %384 = vmatprep.subr.mxu0 %v291
      %385 = vmatpush1.xpose.msra.mxu0 %v290
      %386 = vmatprep.subr.mxu0 %v295
      %387 = vmatpush1.xpose.msra.mxu0 %v294
      %388 = vmatprep.subr.mxu0 %v299
      %389 = vmatpush1.xpose.msra.mxu0 %v298
      %390 = vmatprep.subr.mxu0 %v303
      %391 = vmatpush1.xpose.msra.mxu0 %v302
      %392 = vmatprep.subr.mxu0 %v307
      %393 = vmatpush1.xpose.msra.mxu0 %v306
      %394 = vmatprep.subr.mxu0 %v311
      %395 = vmatpush1.xpose.msra.mxu0 %v310
      %396 = vmatprep.subr.mxu0 %v315
      %397 = vmatpush1.xpose.msra.mxu0 %v314
      %398 = vmatprep.subr.mxu0 %v319
      %399 = vmatpush1.xpose.msra.mxu0 %v318
      %400 = vmatprep.subr.mxu0 %v323
      %401 = vmatpush1.xpose.msra.mxu0 %v322
      %402 = vmatprep.subr.mxu0 %v327
      %403 = vmatpush1.xpose.msra.mxu0 %v326
      %404 = vmatprep.subr.mxu0 %v331
      %405 = vmatpush1.xpose.msra.mxu0 %v330
      %406 = vmatprep.subr.mxu0 %v335
      %407 = vmatpush1.xpose.msra.mxu0 %v334
      %408 = vmatprep.subr.mxu0 %v339
      %409 = vmatpush1.xpose.msra.mxu0 %v338
      %410 = vmatprep.subr.mxu0 %v343
      %411 = vmatpush1.xpose.msra.mxu0 %v342
      %412 = vmatprep.subr.mxu0 %v347
      %413 = vmatpush1.xpose.msra.mxu0 %v346
      %414 = vmatprep.mubr.f32.mxu0 %v219
      %415 = vmatmul.mubr.f32.gmra.mrb[0].mxu0 %v218
      %v416 = vpop.f32.mrb[0].mxu0
      %v417 = vadd.f32 0.0, %v416
      %v418 = vpop.f32.mrb[0].mxu0
      %v419 = vadd.f32 0.0, %v418
      %420 = vdwg.mxu0
      %421 = vmatprep.subr.mxu0 %v225
      %422 = vmatpush1.xpose.msra.mxu0 %v224
      %423 = vmatprep.subr.mxu0 %v229
      %424 = vmatpush1.xpose.msra.mxu0 %v228
      %425 = vmatprep.subr.mxu0 %v233
      %426 = vmatpush1.xpose.msra.mxu0 %v232
      %427 = vmatprep.subr.mxu0 %v237
      %428 = vmatpush1.xpose.msra.mxu0 %v236
      %429 = vmatprep.subr.mxu0 %v241
      %430 = vmatpush1.xpose.msra.mxu0 %v240
      %431 = vmatprep.subr.mxu0 %v245
      %432 = vmatpush1.xpose.msra.mxu0 %v244
      %433 = vmatprep.subr.mxu0 %v249
      %434 = vmatpush1.xpose.msra.mxu0 %v248
      %435 = vmatprep.subr.mxu0 %v253
      %436 = vmatpush1.xpose.msra.mxu0 %v252
      %437 = vmatprep.subr.mxu0 %v257
      %438 = vmatpush1.xpose.msra.mxu0 %v256
      %439 = vmatprep.subr.mxu0 %v261
      %440 = vmatpush1.xpose.msra.mxu0 %v260
      %441 = vmatprep.subr.mxu0 %v265
      %442 = vmatpush1.xpose.msra.mxu0 %v264
      %443 = vmatprep.subr.mxu0 %v269
      %444 = vmatpush1.xpose.msra.mxu0 %v268
      %445 = vmatprep.subr.mxu0 %v273
      %446 = vmatpush1.xpose.msra.mxu0 %v272
      %447 = vmatprep.subr.mxu0 %v277
      %448 = vmatpush1.xpose.msra.mxu0 %v276
      %449 = vmatprep.subr.mxu0 %v281
      %450 = vmatpush1.xpose.msra.mxu0 %v280
      %451 = vmatprep.subr.mxu0 %v285
      %452 = vmatpush1.xpose.msra.mxu0 %v284
      %453 = vmatprep.subr.mxu0 %v289
      %454 = vmatpush1.xpose.msra.mxu0 %v288
      %455 = vmatprep.subr.mxu0 %v293
      %456 = vmatpush1.xpose.msra.mxu0 %v292
      %457 = vmatprep.subr.mxu0 %v297
      %458 = vmatpush1.xpose.msra.mxu0 %v296
      %459 = vmatprep.subr.mxu0 %v301
      %460 = vmatpush1.xpose.msra.mxu0 %v300
      %461 = vmatprep.subr.mxu0 %v305
      %462 = vmatpush1.xpose.msra.mxu0 %v304
      %463 = vmatprep.subr.mxu0 %v309
      %464 = vmatpush1.xpose.msra.mxu0 %v308
      %465 = vmatprep.subr.mxu0 %v313
      %466 = vmatpush1.xpose.msra.mxu0 %v312
      %467 = vmatprep.subr.mxu0 %v317
      %468 = vmatpush1.xpose.msra.mxu0 %v316
      %469 = vmatprep.subr.mxu0 %v321
      %470 = vmatpush1.xpose.msra.mxu0 %v320
      %471 = vmatprep.subr.mxu0 %v325
      %472 = vmatpush1.xpose.msra.mxu0 %v324
      %473 = vmatprep.subr.mxu0 %v329
      %474 = vmatpush1.xpose.msra.mxu0 %v328
      %475 = vmatprep.subr.mxu0 %v333
      %476 = vmatpush1.xpose.msra.mxu0 %v332
      %477 = vmatprep.subr.mxu0 %v337
      %478 = vmatpush1.xpose.msra.mxu0 %v336
      %479 = vmatprep.subr.mxu0 %v341
      %480 = vmatpush1.xpose.msra.mxu0 %v340
      %481 = vmatprep.subr.mxu0 %v345
      %482 = vmatpush1.xpose.msra.mxu0 %v344
      %483 = vmatprep.subr.mxu0 %v349
      %484 = vmatpush1.xpose.msra.mxu0 %v348
      %485 = vmatprep.mubr.f32.mxu0 %v221
      %486 = vmatmul.mubr.f32.gmra.mrb[0].mxu0 %v220
      %v487 = vpop.f32.mrb[0].mxu0
      %v488 = vadd.f32 %v417, %v487
      %v489 = vpop.f32.mrb[0].mxu0
      %v490 = vadd.f32 %v419, %v489
      %491 = vdwg.mxu0
      %v492 = vld [vmem:[%s212] sm:$0xff]
      %v493 = vld [vmem:[%s212 + $0x8] sm:$0xff]
      %v494 = vadd.f32 %v492, %v488
      %v495 = vadd.f32 %v493, %v490
      %v496 = vld [vmem:[%s2] sm:$0x3]
      %v498 = vlaneseq
      %v499 = vshrl.u32 %v498, 7
      %v500 = vsub.s32 0, %v499
      %v501 = vrot.slane %v496, %v500
      %v502 = vlaneseq
      %v503 = vshrl.u32 %v502, 7
      %v504 = vsub.s32 1, %v503
      %v505 = vrot.slane %v496, %v504
      %v508 = vadd.f32 %v494, %v501
      %v509 = vadd.f32 %v495, %v505
      %510 = vst [vmem:[%s217] sm:$0xff] %v508
      %511 = vst [vmem:[%s217 + $0x8] sm:$0xff] %v509
      %p512 = scmp.lt.s32.totalorder %s15, 1
      %s513 = scalar_select %p512, %s15, 1
      %s514 = smul.addr %s513, 2
      %s515 = smul.addr %s514, 8
      %s516 = scalar_lea.vmem %s4, %s515
      // Predicated region
      $region37: #{transformer_encoder_block.9} parent=35 // pred_check
        %p517 = pneg %p127
      $region38: #{transformer_encoder_block.9} parent=35 // pred_check_branch
        %519 = sbr.rel (%p517) target = $region40
      $region39: #{transformer_encoder_block.9} parent=35 // pred_region
        _
      $region40: #{transformer_encoder_block.9} parent=35 // pred_fallthru
        _
    $region36: #{transformer_encoder_block.9} parent=5 // pred_fallthru
      _
    %p520 = scmp.le.s32.totalorder 2, %s10
    // Predicated region
    $region41: #{transformer_encoder_block.9} parent=5 // pred_check
      %p521 = pneg %p520
    $region42: #{transformer_encoder_block.9} parent=5 // pred_check_branch
      %523 = sbr.rel (%p521) target = $region44
    $region43: #{transformer_encoder_block.9} parent=5 // pred_region
      %s524 = ssub.s32 %s10, 2
      // Predicated region
      $region45: #{transformer_encoder_block.9} parent=43 // pred_check
        %p525 = pneg %p133
      $region46: #{transformer_encoder_block.9} parent=43 // pred_check_branch
        %527 = sbr.rel (%p525) target = $region48
      $region47: #{transformer_encoder_block.9} parent=43 // pred_region
        %p528 = scmp.lt.s32.totalorder %s16, 1
        %s529 = scalar_select %p528, %s16, 1
        %s530 = smul.addr %s529, 2
        %s531 = smul.addr %s530, 8
        %s532 = scalar_lea.vmem %s4, %s531
      $region48: #{transformer_encoder_block.9} parent=43 // pred_fallthru
        _
    $region44: #{transformer_encoder_block.9} parent=5 // pred_fallthru
      _
  $region6: #{transformer_encoder_block.9} parent=0 // loop_footer
    %s14 = sadd.s32 1, %s10
  $region7: #{transformer_encoder_block.9} parent=0 // loop_footer_branch
    %9 = sbr.rel target = $region3
  $region8: #{transformer_encoder_block.9} parent=0 // loop_exit
    _

</llo_original>
